<compile_context>
chip_gen: v7x
topology: tpu7x:2x2x1
jax: 0.10.0
libtpu: 0.0.40
codegen_flags: <defaults>
</compile_context>

<pallas_src>
import numpy as np
import jax
import jax.numpy as jnp
from jax.experimental import pallas as pl
from jax.experimental.pallas import tpu as pltpu


# ------------------------------- fused Pallas kernel -------------------------------

def _make_kernel(h, w):
    hw = h * w
    offs = [(ky - 1) * w + (kx - 1) for ky in range(3) for kx in range(3)]
    s0 = offs                       # 3x3 taps at full res (conv1, t_conv3)
    s1 = [2 * o for o in offs]      # 3x3 taps at the /2 embedded level (conv2)
    s2 = [4 * o for o in offs]      # 3x3 taps at the /4 embedded level (conv3)
    t1 = [2 * (dy * w + dx) for dy in range(2) for dx in range(2)]   # t_conv1 scatter
    t2 = [dy * w + dx for dy in range(2) for dx in range(2)]         # t_conv2 scatter

    def gath(v, s):
        """result[..., p] = v[..., p + s] (circular; boundaries handled by 0/1 masks)."""
        sh = (-s) % hw
        return pltpu.roll(v, sh, v.ndim - 1) if sh else v

    def scat(v, s):
        """result[..., p + s] = v[..., p] (circular; wrap lands on zeroed lattice gaps)."""
        sh = s % hw
        return pltpu.roll(v, sh, v.ndim - 1) if sh else v

    def kernel(x_ref, w1_ref, b1_ref, m0_ref,
               w2_ref, b2_ref, m1_ref,
               w3_ref, b3_ref, m2_ref,
               tw1_ref, tb1_ref, ind4_ref,
               tw2_ref, tb2_ref, ind2_ref,
               tw3_ref, tb3_ref, out_ref):
        f32 = jnp.float32
        x = x_ref[0]                                            # (1, hw)

        # ---- conv1: 1 -> 32, 3x3 'same', ReLU.  In-kernel im2col: mask * roll per tap;
        #      channel "contraction" is a rank-1 broadcast MAC (Cin == 1, VPU only).
        acc = None
        for k in range(9):
            tap = w1_ref[k] * (m0_ref[k] * gath(x, s0[k]))      # (32,1)*(1,hw)
            acc = tap if acc is None else acc + tap
        a = jnp.maximum(acc + b1_ref[...], 0.0)                 # (32, hw)

        # ---- maxpool 2x2/2, kept embedded on the stride-2 lattice of the full grid.
        a = jnp.maximum(jnp.maximum(a, gath(a, 1)),
                        jnp.maximum(gath(a, w), gath(a, w + 1)))

        # ---- conv2: 32 -> 16 at the /2 level.  Contract channels first (MXU), then
        #      shift the f32 result (XLU) and mask; 9-tap accumulation stays f32.
        acc = None
        for k in range(9):
            z = jnp.dot(w2_ref[k], a, preferred_element_type=f32)       # (16, hw)
            tap = m1_ref[k] * gath(z, s1[k])
            acc = tap if acc is None else acc + tap
        a = jnp.maximum(acc + b2_ref[...], 0.0)                 # (16, hw)

        # ---- maxpool 2x2/2 at the /2 level -> /4 lattice (neighbours 2 lanes / 2 rows away).
        a = jnp.maximum(jnp.maximum(a, gath(a, 2)),
                        jnp.maximum(gath(a, 2 * w), gath(a, 2 * w + 2)))

        # ---- conv3: 16 -> 4 at the /4 level.
        acc = None
        for k in range(9):
            z = jnp.dot(w3_ref[k], a, preferred_element_type=f32)       # (4, hw)
            tap = m2_ref[k] * gath(z, s2[k])
            acc = tap if acc is None else acc + tap
        a = jnp.maximum(acc + b3_ref[...], 0.0)                 # (4, hw) valid on /4 lattice

        # ---- t_conv1: 4 -> 16, k=2, stride=2 (/4 -> /2 lattice).  Zero off-lattice junk,
        #      then each tap is a roll (scatter) + channel mix; taps land on disjoint lanes.
        a = a * ind4_ref[...]
        acc = None
        for t in range(4):
            z = jnp.dot(tw1_ref[t], scat(a, t1[t]), preferred_element_type=f32)
            acc = z if acc is None else acc + z
        a = jnp.maximum(acc + tb1_ref[...], 0.0)                # (16, hw) valid on /2 lattice

        # ---- t_conv2: 16 -> 32, k=2, stride=2 (/2 lattice -> dense full grid).
        a = a * ind2_ref[...]
        acc = None
        for t in range(4):
            z = jnp.dot(tw2_ref[t], scat(a, t2[t]), preferred_element_type=f32)
            acc = z if acc is None else acc + z
        a = jnp.maximum(acc + tb2_ref[...], 0.0)                # (32, hw) dense

        # ---- t_conv3: 32 -> 1, k=3, s=1, pad=1 == 3x3 'same' conv with the flipped kernel
        #      (flip folded into tw3 at prep).  One (9,32)@(32,hw) dot contracts channels
        #      for all taps at once; each tap is then a masked roll of a (1, hw) row.
        r = jnp.dot(tw3_ref[...], a, preferred_element_type=f32)        # (9, hw)
        acc = None
        for k in range(9):
            tap = m0_ref[k] * gath(r[k:k + 1, :], s0[k])
            acc = tap if acc is None else acc + tap
        y = jax.nn.sigmoid(acc + tb3_ref[...])                  # (1, hw)
        out_ref[...] = y.reshape(1, 1, hw)

    return kernel


# --------------------------- one-time parameter preparation ---------------------------

def _conv_tap_masks(h, w, f):
    """(9,1,H*W) 0/1 masks for the 3x3 'same' conv taps on the (H//f, W//f) grid,
    evaluated at full-grid positions through the embedded coords (y//f, x//f)."""
    hh, ww = h // f, w // f
    m = np.zeros((9, 1, h * w), np.float32)
    for ky in range(3):
        for kx in range(3):
            k = ky * 3 + kx
            for y in range(h):
                for x in range(w):
                    if 0 <= y // f + (ky - 1) < hh and 0 <= x // f + (kx - 1) < ww:
                        m[k, 0, y * w + x] = 1.0
    return m


def _lattice_mask(h, w, f):
    m = np.zeros((1, h * w), np.float32)
    for y in range(0, h, f):
        for x in range(0, w, f):
            m[0, y * w + x] = 1.0
    return m


def prepare_params(params, h, w):
    """Hoisted weight re-layouts (incl. the t_conv3 kernel flip) + tiny 0/1 masks."""
    f32 = jnp.float32

    def conv_taps(wt):        # (Co, Ci, 3, 3) -> (9, Co, Ci)
        co, ci = wt.shape[0], wt.shape[1]
        return jnp.transpose(wt, (2, 3, 0, 1)).reshape(9, co, ci).astype(f32)

    def tconv_taps(wt):       # (Ci, Co, 2, 2) -> (4, Co, Ci)
        ci, co = wt.shape[0], wt.shape[1]
        return jnp.transpose(wt, (2, 3, 1, 0)).reshape(4, co, ci).astype(f32)

    wf3 = params['t_conv3_w'][:, :, ::-1, ::-1]          # spatial flip -> ordinary conv
    tw3 = jnp.transpose(wf3, (2, 3, 1, 0)).reshape(9, wf3.shape[0]).astype(f32)

    return dict(
        w1=conv_taps(params['conv1_w']),                              # (9, 32, 1)
        b1=params['conv1_b'].reshape(-1, 1).astype(f32),
        m0=jnp.asarray(_conv_tap_masks(h, w, 1)),
        w2=conv_taps(params['conv2_w']),                              # (9, 16, 32)
        b2=params['conv2_b'].reshape(-1, 1).astype(f32),
        m1=jnp.asarray(_conv_tap_masks(h, w, 2)),
        w3=conv_taps(params['conv3_w']),                              # (9, 4, 16)
        b3=params['conv3_b'].reshape(-1, 1).astype(f32),
        m2=jnp.asarray(_conv_tap_masks(h, w, 4)),
        tw1=tconv_taps(params['t_conv1_w']),                          # (4, 16, 4)
        tb1=params['t_conv1_b'].reshape(-1, 1).astype(f32),
        ind4=jnp.asarray(_lattice_mask(h, w, 4)),
        tw2=tconv_taps(params['t_conv2_w']),                          # (4, 32, 16)
        tb2=params['t_conv2_b'].reshape(-1, 1).astype(f32),
        ind2=jnp.asarray(_lattice_mask(h, w, 2)),
        tw3=tw3,                                                      # (9, 32)
        tb3=params['t_conv3_b'].reshape(1, 1).astype(f32),
    )


# ------------------------------------ forward --------------------------------------

def conv_denoiser_forward(x_nchw, prep):
    n, _, h, w = x_nchw.shape
    hw = h * w
    x_rows = x_nchw.reshape(n, 1, hw).astype(jnp.float32)     # lane-dense (b, y, x) rows

    order = ('w1', 'b1', 'm0', 'w2', 'b2', 'm1', 'w3', 'b3', 'm2',
             'tw1', 'tb1', 'ind4', 'tw2', 'tb2', 'ind2', 'tw3', 'tb3')
    consts = [prep[k] for k in order]

    def const_spec(a):
        nd = a.ndim
        return pl.BlockSpec(a.shape, lambda b, _nd=nd: (0,) * _nd)

    macs = hw * (9 * 32 * 1 + 9 * 16 * 32 + 9 * 4 * 16
                 + 4 * 16 * 4 + 4 * 32 * 16 + 9 * 1 * 32)
    cost = pl.CostEstimate(
        flops=2 * n * macs,
        transcendentals=n * hw,
        bytes_accessed=int(x_rows.size * 4 + n * hw * 4 + sum(a.size * 4 for a in consts)))

    y = pl.pallas_call(
        _make_kernel(h, w),
        out_shape=jax.ShapeDtypeStruct((n, 1, hw), jnp.float32),
        grid=(n,),
        in_specs=[pl.BlockSpec((1, 1, hw), lambda b: (b, 0, 0))]
                 + [const_spec(a) for a in consts],
        out_specs=pl.BlockSpec((1, 1, hw), lambda b: (b, 0, 0)),
        compiler_params=pltpu.CompilerParams(
            dimension_semantics=("parallel",),
            vmem_limit_bytes=4 * 1024 * 1024),
        cost_estimate=cost,
    )(x_rows, *consts)

    return y.reshape(n, 1, h, w)


# ---------------------------- pure-JAX f32 reference -------------------------------

def _ref_conv(x, w, b, padding):
    y = jax.lax.conv_general_dilated(
        x, w, window_strides=(1, 1), padding=[(padding, padding)] * 2,
        dimension_numbers=('NCHW', 'OIHW', 'NCHW'))
    return y + b.reshape(1, -1, 1, 1)


def _ref_tconv(x, w, b, stride, padding):
    k = w.shape[2]
    wk = jnp.transpose(w[:, :, ::-1, ::-1], (1, 0, 2, 3))
    q = k - 1 - padding
    y = jax.lax.conv_general_dilated(
        x, wk, window_strides=(1, 1), padding=[(q, q)] * 2,
        lhs_dilation=(stride, stride),
        dimension_numbers=('NCHW', 'OIHW', 'NCHW'))
    return y + b.reshape(1, -1, 1, 1)


def _ref_maxpool(x):
    n, c, h, w = x.shape
    return x.reshape(n, c, h // 2, 2, w // 2, 2).max(axis=(3, 5))


def reference_forward(x, p):
    x = jax.nn.relu(_ref_conv(x, p['conv1_w'], p['conv1_b'], 1))
    x = _ref_maxpool(x)
    x = jax.nn.relu(_ref_conv(x, p['conv2_w'], p['conv2_b'], 1))
    x = _ref_maxpool(x)
    x = jax.nn.relu(_ref_conv(x, p['conv3_w'], p['conv3_b'], 1))
    x = jax.nn.relu(_ref_tconv(x, p['t_conv1_w'], p['t_conv1_b'], 2, 0))
    x = jax.nn.relu(_ref_tconv(x, p['t_conv2_w'], p['t_conv2_b'], 2, 0))
    x = jax.nn.sigmoid(_ref_tconv(x, p['t_conv3_w'], p['t_conv3_b'], 1, 1))
    return x


# ------------------------------------ main -------------------------------------

if __name__ == "__main__":
    key = jax.random.PRNGKey(0)
    ks = jax.random.split(key, 13)

    def init(k, shape, scale=0.1):
        return scale * jax.random.normal(k, shape, jnp.float32)

    # Parameter shapes exactly as in ConvDenoiser.__init__ (PyTorch layouts).
    params = {
        'conv1_w': init(ks[0], (32, 1, 3, 3)),   'conv1_b': init(ks[1], (32,)),
        'conv2_w': init(ks[2], (16, 32, 3, 3)),  'conv2_b': init(ks[3], (16,)),
        'conv3_w': init(ks[4], (4, 16, 3, 3)),   'conv3_b': init(ks[5], (4,)),
        't_conv1_w': init(ks[6], (4, 16, 2, 2)),  't_conv1_b': init(ks[7], (16,)),
        't_conv2_w': init(ks[8], (16, 32, 2, 2)), 't_conv2_b': init(ks[9], (32,)),
        't_conv3_w': init(ks[10], (32, 1, 3, 3)), 't_conv3_b': init(ks[11], (1,)),
    }

    x = jax.random.normal(ks[12], (2, 1, 16, 16), jnp.float32)   # NCHW, like PyTorch

    prep = prepare_params(params, 16, 16)         # one-time weight/mask preparation
    fwd = jax.jit(conv_denoiser_forward)

    out = jax.block_until_ready(fwd(x, prep))

    ref = reference_forward(x, params)
    assert out.shape == (2, 1, 16, 16), out.shape
    max_err = float(jnp.max(jnp.abs(out - ref)))
    assert jnp.allclose(out, ref, atol=2e-2, rtol=2e-2), max_err

    print("KERNEL_OK")
</pallas_src>

<mosaic_0001>
module attributes {stable_mosaic.version = 11 : i64} {
  func.func @kernel(%arg0: i32, %arg1: memref<1x1x256xf32, #tpu.memory_space<vmem>>, %arg2: memref<9x32x1xf32, #tpu.memory_space<vmem>>, %arg3: memref<32x1xf32, #tpu.memory_space<vmem>>, %arg4: memref<9x1x256xf32, #tpu.memory_space<vmem>>, %arg5: memref<9x16x32xf32, #tpu.memory_space<vmem>>, %arg6: memref<16x1xf32, #tpu.memory_space<vmem>>, %arg7: memref<9x1x256xf32, #tpu.memory_space<vmem>>, %arg8: memref<9x4x16xf32, #tpu.memory_space<vmem>>, %arg9: memref<4x1xf32, #tpu.memory_space<vmem>>, %arg10: memref<9x1x256xf32, #tpu.memory_space<vmem>>, %arg11: memref<4x16x4xf32, #tpu.memory_space<vmem>>, %arg12: memref<16x1xf32, #tpu.memory_space<vmem>>, %arg13: memref<1x256xf32, #tpu.memory_space<vmem>>, %arg14: memref<4x32x16xf32, #tpu.memory_space<vmem>>, %arg15: memref<32x1xf32, #tpu.memory_space<vmem>>, %arg16: memref<1x256xf32, #tpu.memory_space<vmem>>, %arg17: memref<9x32xf32, #tpu.memory_space<vmem>>, %arg18: memref<1x1xf32, #tpu.memory_space<vmem>>, %arg19: memref<1x1x256xf32, #tpu.memory_space<vmem>>) attributes {dimension_semantics = [#tpu.dimension_semantics<parallel>], iteration_bounds = array<i64: 2>, scalar_prefetch = 0 : i64, scratch_operands = 0 : i64, tpu.core_type = #tpu.core_type<tc>, window_params = [{transform_indices = @transform_0, window_bounds = array<i64: 1, 1, 256>}, {pipeline_mode = #tpu.pipeline_mode<synchronous>, transform_indices = @transform_1, window_bounds = array<i64: 9, 32, 1>}, {pipeline_mode = #tpu.pipeline_mode<synchronous>, transform_indices = @transform_2, window_bounds = array<i64: 32, 1>}, {pipeline_mode = #tpu.pipeline_mode<synchronous>, transform_indices = @transform_3, window_bounds = array<i64: 9, 1, 256>}, {pipeline_mode = #tpu.pipeline_mode<synchronous>, transform_indices = @transform_4, window_bounds = array<i64: 9, 16, 32>}, {pipeline_mode = #tpu.pipeline_mode<synchronous>, transform_indices = @transform_5, window_bounds = array<i64: 16, 1>}, {pipeline_mode = #tpu.pipeline_mode<synchronous>, transform_indices = @transform_6, window_bounds = array<i64: 9, 1, 256>}, {pipeline_mode = #tpu.pipeline_mode<synchronous>, transform_indices = @transform_7, window_bounds = array<i64: 9, 4, 16>}, {pipeline_mode = #tpu.pipeline_mode<synchronous>, transform_indices = @transform_8, window_bounds = array<i64: 4, 1>}, {pipeline_mode = #tpu.pipeline_mode<synchronous>, transform_indices = @transform_9, window_bounds = array<i64: 9, 1, 256>}, {pipeline_mode = #tpu.pipeline_mode<synchronous>, transform_indices = @transform_10, window_bounds = array<i64: 4, 16, 4>}, {pipeline_mode = #tpu.pipeline_mode<synchronous>, transform_indices = @transform_11, window_bounds = array<i64: 16, 1>}, {pipeline_mode = #tpu.pipeline_mode<synchronous>, transform_indices = @transform_12, window_bounds = array<i64: 1, 256>}, {pipeline_mode = #tpu.pipeline_mode<synchronous>, transform_indices = @transform_13, window_bounds = array<i64: 4, 32, 16>}, {pipeline_mode = #tpu.pipeline_mode<synchronous>, transform_indices = @transform_14, window_bounds = array<i64: 32, 1>}, {pipeline_mode = #tpu.pipeline_mode<synchronous>, transform_indices = @transform_15, window_bounds = array<i64: 1, 256>}, {pipeline_mode = #tpu.pipeline_mode<synchronous>, transform_indices = @transform_16, window_bounds = array<i64: 9, 32>}, {pipeline_mode = #tpu.pipeline_mode<synchronous>, transform_indices = @transform_17, window_bounds = array<i64: 1, 1>}, {transform_indices = @transform_18, window_bounds = array<i64: 1, 1, 256>}]} {
    %c0 = arith.constant 0 : index
    %c0_0 = arith.constant 0 : index
    %c0_1 = arith.constant 0 : index
    %0 = vector.load %arg1[%c0, %c0_0, %c0_1] : memref<1x1x256xf32, #tpu.memory_space<vmem>>, vector<1x1x256xf32>
    %1 = vector.shape_cast %0 : vector<1x1x256xf32> to vector<1x256xf32>
    %c0_2 = arith.constant 0 : index
    %c0_3 = arith.constant 0 : index
    %c0_4 = arith.constant 0 : index
    %2 = vector.load %arg2[%c0_2, %c0_3, %c0_4] : memref<9x32x1xf32, #tpu.memory_space<vmem>>, vector<1x32x1xf32>
    %3 = vector.shape_cast %2 : vector<1x32x1xf32> to vector<32x1xf32>
    %c0_5 = arith.constant 0 : index
    %c0_6 = arith.constant 0 : index
    %c0_7 = arith.constant 0 : index
    %4 = vector.load %arg4[%c0_5, %c0_6, %c0_7] : memref<9x1x256xf32, #tpu.memory_space<vmem>>, vector<1x1x256xf32>
    %5 = vector.shape_cast %4 : vector<1x1x256xf32> to vector<1x256xf32>
    %c17_i32 = arith.constant 17 : i32
    %6 = tpu.dynamic_rotate %1 by %c17_i32 dim 1 : vector<1x256xf32>, i32 -> vector<1x256xf32>
    %7 = arith.mulf %5, %6 : vector<1x256xf32>
    %8 = vector.broadcast %3 : vector<32x1xf32> to vector<32x256xf32>
    %9 = vector.broadcast %7 : vector<1x256xf32> to vector<32x256xf32>
    %10 = arith.mulf %8, %9 : vector<32x256xf32>
    %c1 = arith.constant 1 : index
    %c0_8 = arith.constant 0 : index
    %c0_9 = arith.constant 0 : index
    %11 = vector.load %arg2[%c1, %c0_8, %c0_9] : memref<9x32x1xf32, #tpu.memory_space<vmem>>, vector<1x32x1xf32>
    %12 = vector.shape_cast %11 : vector<1x32x1xf32> to vector<32x1xf32>
    %c1_10 = arith.constant 1 : index
    %c0_11 = arith.constant 0 : index
    %c0_12 = arith.constant 0 : index
    %13 = vector.load %arg4[%c1_10, %c0_11, %c0_12] : memref<9x1x256xf32, #tpu.memory_space<vmem>>, vector<1x1x256xf32>
    %14 = vector.shape_cast %13 : vector<1x1x256xf32> to vector<1x256xf32>
    %c16_i32 = arith.constant 16 : i32
    %15 = tpu.dynamic_rotate %1 by %c16_i32 dim 1 : vector<1x256xf32>, i32 -> vector<1x256xf32>
    %16 = arith.mulf %14, %15 : vector<1x256xf32>
    %17 = vector.broadcast %12 : vector<32x1xf32> to vector<32x256xf32>
    %18 = vector.broadcast %16 : vector<1x256xf32> to vector<32x256xf32>
    %19 = arith.mulf %17, %18 : vector<32x256xf32>
    %20 = arith.addf %10, %19 : vector<32x256xf32>
    %c2 = arith.constant 2 : index
    %c0_13 = arith.constant 0 : index
    %c0_14 = arith.constant 0 : index
    %21 = vector.load %arg2[%c2, %c0_13, %c0_14] : memref<9x32x1xf32, #tpu.memory_space<vmem>>, vector<1x32x1xf32>
    %22 = vector.shape_cast %21 : vector<1x32x1xf32> to vector<32x1xf32>
    %c2_15 = arith.constant 2 : index
    %c0_16 = arith.constant 0 : index
    %c0_17 = arith.constant 0 : index
    %23 = vector.load %arg4[%c2_15, %c0_16, %c0_17] : memref<9x1x256xf32, #tpu.memory_space<vmem>>, vector<1x1x256xf32>
    %24 = vector.shape_cast %23 : vector<1x1x256xf32> to vector<1x256xf32>
    %c15_i32 = arith.constant 15 : i32
    %25 = tpu.dynamic_rotate %1 by %c15_i32 dim 1 : vector<1x256xf32>, i32 -> vector<1x256xf32>
    %26 = arith.mulf %24, %25 : vector<1x256xf32>
    %27 = vector.broadcast %22 : vector<32x1xf32> to vector<32x256xf32>
    %28 = vector.broadcast %26 : vector<1x256xf32> to vector<32x256xf32>
    %29 = arith.mulf %27, %28 : vector<32x256xf32>
    %30 = arith.addf %20, %29 : vector<32x256xf32>
    %c3 = arith.constant 3 : index
    %c0_18 = arith.constant 0 : index
    %c0_19 = arith.constant 0 : index
    %31 = vector.load %arg2[%c3, %c0_18, %c0_19] : memref<9x32x1xf32, #tpu.memory_space<vmem>>, vector<1x32x1xf32>
    %32 = vector.shape_cast %31 : vector<1x32x1xf32> to vector<32x1xf32>
    %c3_20 = arith.constant 3 : index
    %c0_21 = arith.constant 0 : index
    %c0_22 = arith.constant 0 : index
    %33 = vector.load %arg4[%c3_20, %c0_21, %c0_22] : memref<9x1x256xf32, #tpu.memory_space<vmem>>, vector<1x1x256xf32>
    %34 = vector.shape_cast %33 : vector<1x1x256xf32> to vector<1x256xf32>
    %c1_i32 = arith.constant 1 : i32
    %35 = tpu.dynamic_rotate %1 by %c1_i32 dim 1 : vector<1x256xf32>, i32 -> vector<1x256xf32>
    %36 = arith.mulf %34, %35 : vector<1x256xf32>
    %37 = vector.broadcast %32 : vector<32x1xf32> to vector<32x256xf32>
    %38 = vector.broadcast %36 : vector<1x256xf32> to vector<32x256xf32>
    %39 = arith.mulf %37, %38 : vector<32x256xf32>
    %40 = arith.addf %30, %39 : vector<32x256xf32>
    %c4 = arith.constant 4 : index
    %c0_23 = arith.constant 0 : index
    %c0_24 = arith.constant 0 : index
    %41 = vector.load %arg2[%c4, %c0_23, %c0_24] : memref<9x32x1xf32, #tpu.memory_space<vmem>>, vector<1x32x1xf32>
    %42 = vector.shape_cast %41 : vector<1x32x1xf32> to vector<32x1xf32>
    %c4_25 = arith.constant 4 : index
    %c0_26 = arith.constant 0 : index
    %c0_27 = arith.constant 0 : index
    %43 = vector.load %arg4[%c4_25, %c0_26, %c0_27] : memref<9x1x256xf32, #tpu.memory_space<vmem>>, vector<1x1x256xf32>
    %44 = vector.shape_cast %43 : vector<1x1x256xf32> to vector<1x256xf32>
    %45 = arith.mulf %44, %1 : vector<1x256xf32>
    %46 = vector.broadcast %42 : vector<32x1xf32> to vector<32x256xf32>
    %47 = vector.broadcast %45 : vector<1x256xf32> to vector<32x256xf32>
    %48 = arith.mulf %46, %47 : vector<32x256xf32>
    %49 = arith.addf %40, %48 : vector<32x256xf32>
    %c5 = arith.constant 5 : index
    %c0_28 = arith.constant 0 : index
    %c0_29 = arith.constant 0 : index
    %50 = vector.load %arg2[%c5, %c0_28, %c0_29] : memref<9x32x1xf32, #tpu.memory_space<vmem>>, vector<1x32x1xf32>
    %51 = vector.shape_cast %50 : vector<1x32x1xf32> to vector<32x1xf32>
    %c5_30 = arith.constant 5 : index
    %c0_31 = arith.constant 0 : index
    %c0_32 = arith.constant 0 : index
    %52 = vector.load %arg4[%c5_30, %c0_31, %c0_32] : memref<9x1x256xf32, #tpu.memory_space<vmem>>, vector<1x1x256xf32>
    %53 = vector.shape_cast %52 : vector<1x1x256xf32> to vector<1x256xf32>
    %c255_i32 = arith.constant 255 : i32
    %54 = tpu.dynamic_rotate %1 by %c255_i32 dim 1 : vector<1x256xf32>, i32 -> vector<1x256xf32>
    %55 = arith.mulf %53, %54 : vector<1x256xf32>
    %56 = vector.broadcast %51 : vector<32x1xf32> to vector<32x256xf32>
    %57 = vector.broadcast %55 : vector<1x256xf32> to vector<32x256xf32>
    %58 = arith.mulf %56, %57 : vector<32x256xf32>
    %59 = arith.addf %49, %58 : vector<32x256xf32>
    %c6 = arith.constant 6 : index
    %c0_33 = arith.constant 0 : index
    %c0_34 = arith.constant 0 : index
    %60 = vector.load %arg2[%c6, %c0_33, %c0_34] : memref<9x32x1xf32, #tpu.memory_space<vmem>>, vector<1x32x1xf32>
    %61 = vector.shape_cast %60 : vector<1x32x1xf32> to vector<32x1xf32>
    %c6_35 = arith.constant 6 : index
    %c0_36 = arith.constant 0 : index
    %c0_37 = arith.constant 0 : index
    %62 = vector.load %arg4[%c6_35, %c0_36, %c0_37] : memref<9x1x256xf32, #tpu.memory_space<vmem>>, vector<1x1x256xf32>
    %63 = vector.shape_cast %62 : vector<1x1x256xf32> to vector<1x256xf32>
    %c241_i32 = arith.constant 241 : i32
    %64 = tpu.dynamic_rotate %1 by %c241_i32 dim 1 : vector<1x256xf32>, i32 -> vector<1x256xf32>
    %65 = arith.mulf %63, %64 : vector<1x256xf32>
    %66 = vector.broadcast %61 : vector<32x1xf32> to vector<32x256xf32>
    %67 = vector.broadcast %65 : vector<1x256xf32> to vector<32x256xf32>
    %68 = arith.mulf %66, %67 : vector<32x256xf32>
    %69 = arith.addf %59, %68 : vector<32x256xf32>
    %c7 = arith.constant 7 : index
    %c0_38 = arith.constant 0 : index
    %c0_39 = arith.constant 0 : index
    %70 = vector.load %arg2[%c7, %c0_38, %c0_39] : memref<9x32x1xf32, #tpu.memory_space<vmem>>, vector<1x32x1xf32>
    %71 = vector.shape_cast %70 : vector<1x32x1xf32> to vector<32x1xf32>
    %c7_40 = arith.constant 7 : index
    %c0_41 = arith.constant 0 : index
    %c0_42 = arith.constant 0 : index
    %72 = vector.load %arg4[%c7_40, %c0_41, %c0_42] : memref<9x1x256xf32, #tpu.memory_space<vmem>>, vector<1x1x256xf32>
    %73 = vector.shape_cast %72 : vector<1x1x256xf32> to vector<1x256xf32>
    %c240_i32 = arith.constant 240 : i32
    %74 = tpu.dynamic_rotate %1 by %c240_i32 dim 1 : vector<1x256xf32>, i32 -> vector<1x256xf32>
    %75 = arith.mulf %73, %74 : vector<1x256xf32>
    %76 = vector.broadcast %71 : vector<32x1xf32> to vector<32x256xf32>
    %77 = vector.broadcast %75 : vector<1x256xf32> to vector<32x256xf32>
    %78 = arith.mulf %76, %77 : vector<32x256xf32>
    %79 = arith.addf %69, %78 : vector<32x256xf32>
    %c8 = arith.constant 8 : index
    %c0_43 = arith.constant 0 : index
    %c0_44 = arith.constant 0 : index
    %80 = vector.load %arg2[%c8, %c0_43, %c0_44] : memref<9x32x1xf32, #tpu.memory_space<vmem>>, vector<1x32x1xf32>
    %81 = vector.shape_cast %80 : vector<1x32x1xf32> to vector<32x1xf32>
    %c8_45 = arith.constant 8 : index
    %c0_46 = arith.constant 0 : index
    %c0_47 = arith.constant 0 : index
    %82 = vector.load %arg4[%c8_45, %c0_46, %c0_47] : memref<9x1x256xf32, #tpu.memory_space<vmem>>, vector<1x1x256xf32>
    %83 = vector.shape_cast %82 : vector<1x1x256xf32> to vector<1x256xf32>
    %c239_i32 = arith.constant 239 : i32
    %84 = tpu.dynamic_rotate %1 by %c239_i32 dim 1 : vector<1x256xf32>, i32 -> vector<1x256xf32>
    %85 = arith.mulf %83, %84 : vector<1x256xf32>
    %86 = vector.broadcast %81 : vector<32x1xf32> to vector<32x256xf32>
    %87 = vector.broadcast %85 : vector<1x256xf32> to vector<32x256xf32>
    %88 = arith.mulf %86, %87 : vector<32x256xf32>
    %89 = arith.addf %79, %88 : vector<32x256xf32>
    %c0_48 = arith.constant 0 : index
    %c0_49 = arith.constant 0 : index
    %90 = vector.load %arg3[%c0_48, %c0_49] : memref<32x1xf32, #tpu.memory_space<vmem>>, vector<32x1xf32>
    %91 = vector.broadcast %90 : vector<32x1xf32> to vector<32x256xf32>
    %92 = arith.addf %89, %91 : vector<32x256xf32>
    %cst = arith.constant 0.000000e+00 : f32
    %93 = vector.broadcast %cst : f32 to vector<32x256xf32>
    %94 = arith.maximumf %92, %93 : vector<32x256xf32>
    %c255_i32_50 = arith.constant 255 : i32
    %95 = tpu.dynamic_rotate %94 by %c255_i32_50 dim 1 : vector<32x256xf32>, i32 -> vector<32x256xf32>
    %96 = arith.maximumf %94, %95 : vector<32x256xf32>
    %c240_i32_51 = arith.constant 240 : i32
    %97 = tpu.dynamic_rotate %94 by %c240_i32_51 dim 1 : vector<32x256xf32>, i32 -> vector<32x256xf32>
    %c239_i32_52 = arith.constant 239 : i32
    %98 = tpu.dynamic_rotate %94 by %c239_i32_52 dim 1 : vector<32x256xf32>, i32 -> vector<32x256xf32>
    %99 = arith.maximumf %97, %98 : vector<32x256xf32>
    %100 = arith.maximumf %96, %99 : vector<32x256xf32>
    %c0_53 = arith.constant 0 : index
    %c0_54 = arith.constant 0 : index
    %c0_55 = arith.constant 0 : index
    %101 = vector.load %arg5[%c0_53, %c0_54, %c0_55] : memref<9x16x32xf32, #tpu.memory_space<vmem>>, vector<1x16x32xf32>
    %102 = vector.shape_cast %101 : vector<1x16x32xf32> to vector<16x32xf32>
    %cst_56 = arith.constant dense<0.000000e+00> : vector<16x256xf32>
    %103 = tpu.matmul %102, %100, %cst_56 {dimension_numbers = #tpu.dot_dimension_numbers<[1], [0], [0], [1], [0, 0, 1, 1], [], []>} : vector<16x32xf32>, vector<32x256xf32>, vector<16x256xf32> -> vector<16x256xf32>
    %c0_57 = arith.constant 0 : index
    %c0_58 = arith.constant 0 : index
    %c0_59 = arith.constant 0 : index
    %104 = vector.load %arg7[%c0_57, %c0_58, %c0_59] : memref<9x1x256xf32, #tpu.memory_space<vmem>>, vector<1x1x256xf32>
    %105 = vector.shape_cast %104 : vector<1x1x256xf32> to vector<1x256xf32>
    %c34_i32 = arith.constant 34 : i32
    %106 = tpu.dynamic_rotate %103 by %c34_i32 dim 1 : vector<16x256xf32>, i32 -> vector<16x256xf32>
    %107 = vector.broadcast %105 : vector<1x256xf32> to vector<16x256xf32>
    %108 = arith.mulf %107, %106 : vector<16x256xf32>
    %c1_60 = arith.constant 1 : index
    %c0_61 = arith.constant 0 : index
    %c0_62 = arith.constant 0 : index
    %109 = vector.load %arg5[%c1_60, %c0_61, %c0_62] : memref<9x16x32xf32, #tpu.memory_space<vmem>>, vector<1x16x32xf32>
    %110 = vector.shape_cast %109 : vector<1x16x32xf32> to vector<16x32xf32>
    %cst_63 = arith.constant dense<0.000000e+00> : vector<16x256xf32>
    %111 = tpu.matmul %110, %100, %cst_63 {dimension_numbers = #tpu.dot_dimension_numbers<[1], [0], [0], [1], [0, 0, 1, 1], [], []>} : vector<16x32xf32>, vector<32x256xf32>, vector<16x256xf32> -> vector<16x256xf32>
    %c1_64 = arith.constant 1 : index
    %c0_65 = arith.constant 0 : index
    %c0_66 = arith.constant 0 : index
    %112 = vector.load %arg7[%c1_64, %c0_65, %c0_66] : memref<9x1x256xf32, #tpu.memory_space<vmem>>, vector<1x1x256xf32>
    %113 = vector.shape_cast %112 : vector<1x1x256xf32> to vector<1x256xf32>
    %c32_i32 = arith.constant 32 : i32
    %114 = tpu.dynamic_rotate %111 by %c32_i32 dim 1 : vector<16x256xf32>, i32 -> vector<16x256xf32>
    %115 = vector.broadcast %113 : vector<1x256xf32> to vector<16x256xf32>
    %116 = arith.mulf %115, %114 : vector<16x256xf32>
    %117 = arith.addf %108, %116 : vector<16x256xf32>
    %c2_67 = arith.constant 2 : index
    %c0_68 = arith.constant 0 : index
    %c0_69 = arith.constant 0 : index
    %118 = vector.load %arg5[%c2_67, %c0_68, %c0_69] : memref<9x16x32xf32, #tpu.memory_space<vmem>>, vector<1x16x32xf32>
    %119 = vector.shape_cast %118 : vector<1x16x32xf32> to vector<16x32xf32>
    %cst_70 = arith.constant dense<0.000000e+00> : vector<16x256xf32>
    %120 = tpu.matmul %119, %100, %cst_70 {dimension_numbers = #tpu.dot_dimension_numbers<[1], [0], [0], [1], [0, 0, 1, 1], [], []>} : vector<16x32xf32>, vector<32x256xf32>, vector<16x256xf32> -> vector<16x256xf32>
    %c2_71 = arith.constant 2 : index
    %c0_72 = arith.constant 0 : index
    %c0_73 = arith.constant 0 : index
    %121 = vector.load %arg7[%c2_71, %c0_72, %c0_73] : memref<9x1x256xf32, #tpu.memory_space<vmem>>, vector<1x1x256xf32>
    %122 = vector.shape_cast %121 : vector<1x1x256xf32> to vector<1x256xf32>
    %c30_i32 = arith.constant 30 : i32
    %123 = tpu.dynamic_rotate %120 by %c30_i32 dim 1 : vector<16x256xf32>, i32 -> vector<16x256xf32>
    %124 = vector.broadcast %122 : vector<1x256xf32> to vector<16x256xf32>
    %125 = arith.mulf %124, %123 : vector<16x256xf32>
    %126 = arith.addf %117, %125 : vector<16x256xf32>
    %c3_74 = arith.constant 3 : index
    %c0_75 = arith.constant 0 : index
    %c0_76 = arith.constant 0 : index
    %127 = vector.load %arg5[%c3_74, %c0_75, %c0_76] : memref<9x16x32xf32, #tpu.memory_space<vmem>>, vector<1x16x32xf32>
    %128 = vector.shape_cast %127 : vector<1x16x32xf32> to vector<16x32xf32>
    %cst_77 = arith.constant dense<0.000000e+00> : vector<16x256xf32>
    %129 = tpu.matmul %128, %100, %cst_77 {dimension_numbers = #tpu.dot_dimension_numbers<[1], [0], [0], [1], [0, 0, 1, 1], [], []>} : vector<16x32xf32>, vector<32x256xf32>, vector<16x256xf32> -> vector<16x256xf32>
    %c3_78 = arith.constant 3 : index
    %c0_79 = arith.constant 0 : index
    %c0_80 = arith.constant 0 : index
    %130 = vector.load %arg7[%c3_78, %c0_79, %c0_80] : memref<9x1x256xf32, #tpu.memory_space<vmem>>, vector<1x1x256xf32>
    %131 = vector.shape_cast %130 : vector<1x1x256xf32> to vector<1x256xf32>
    %c2_i32 = arith.constant 2 : i32
    %132 = tpu.dynamic_rotate %129 by %c2_i32 dim 1 : vector<16x256xf32>, i32 -> vector<16x256xf32>
    %133 = vector.broadcast %131 : vector<1x256xf32> to vector<16x256xf32>
    %134 = arith.mulf %133, %132 : vector<16x256xf32>
    %135 = arith.addf %126, %134 : vector<16x256xf32>
    %c4_81 = arith.constant 4 : index
    %c0_82 = arith.constant 0 : index
    %c0_83 = arith.constant 0 : index
    %136 = vector.load %arg5[%c4_81, %c0_82, %c0_83] : memref<9x16x32xf32, #tpu.memory_space<vmem>>, vector<1x16x32xf32>
    %137 = vector.shape_cast %136 : vector<1x16x32xf32> to vector<16x32xf32>
    %cst_84 = arith.constant dense<0.000000e+00> : vector<16x256xf32>
    %138 = tpu.matmul %137, %100, %cst_84 {dimension_numbers = #tpu.dot_dimension_numbers<[1], [0], [0], [1], [0, 0, 1, 1], [], []>} : vector<16x32xf32>, vector<32x256xf32>, vector<16x256xf32> -> vector<16x256xf32>
    %c4_85 = arith.constant 4 : index
    %c0_86 = arith.constant 0 : index
    %c0_87 = arith.constant 0 : index
    %139 = vector.load %arg7[%c4_85, %c0_86, %c0_87] : memref<9x1x256xf32, #tpu.memory_space<vmem>>, vector<1x1x256xf32>
    %140 = vector.shape_cast %139 : vector<1x1x256xf32> to vector<1x256xf32>
    %141 = vector.broadcast %140 : vector<1x256xf32> to vector<16x256xf32>
    %142 = arith.mulf %141, %138 : vector<16x256xf32>
    %143 = arith.addf %135, %142 : vector<16x256xf32>
    %c5_88 = arith.constant 5 : index
    %c0_89 = arith.constant 0 : index
    %c0_90 = arith.constant 0 : index
    %144 = vector.load %arg5[%c5_88, %c0_89, %c0_90] : memref<9x16x32xf32, #tpu.memory_space<vmem>>, vector<1x16x32xf32>
    %145 = vector.shape_cast %144 : vector<1x16x32xf32> to vector<16x32xf32>
    %cst_91 = arith.constant dense<0.000000e+00> : vector<16x256xf32>
    %146 = tpu.matmul %145, %100, %cst_91 {dimension_numbers = #tpu.dot_dimension_numbers<[1], [0], [0], [1], [0, 0, 1, 1], [], []>} : vector<16x32xf32>, vector<32x256xf32>, vector<16x256xf32> -> vector<16x256xf32>
    %c5_92 = arith.constant 5 : index
    %c0_93 = arith.constant 0 : index
    %c0_94 = arith.constant 0 : index
    %147 = vector.load %arg7[%c5_92, %c0_93, %c0_94] : memref<9x1x256xf32, #tpu.memory_space<vmem>>, vector<1x1x256xf32>
    %148 = vector.shape_cast %147 : vector<1x1x256xf32> to vector<1x256xf32>
    %c254_i32 = arith.constant 254 : i32
    %149 = tpu.dynamic_rotate %146 by %c254_i32 dim 1 : vector<16x256xf32>, i32 -> vector<16x256xf32>
    %150 = vector.broadcast %148 : vector<1x256xf32> to vector<16x256xf32>
    %151 = arith.mulf %150, %149 : vector<16x256xf32>
    %152 = arith.addf %143, %151 : vector<16x256xf32>
    %c6_95 = arith.constant 6 : index
    %c0_96 = arith.constant 0 : index
    %c0_97 = arith.constant 0 : index
    %153 = vector.load %arg5[%c6_95, %c0_96, %c0_97] : memref<9x16x32xf32, #tpu.memory_space<vmem>>, vector<1x16x32xf32>
    %154 = vector.shape_cast %153 : vector<1x16x32xf32> to vector<16x32xf32>
    %cst_98 = arith.constant dense<0.000000e+00> : vector<16x256xf32>
    %155 = tpu.matmul %154, %100, %cst_98 {dimension_numbers = #tpu.dot_dimension_numbers<[1], [0], [0], [1], [0, 0, 1, 1], [], []>} : vector<16x32xf32>, vector<32x256xf32>, vector<16x256xf32> -> vector<16x256xf32>
    %c6_99 = arith.constant 6 : index
    %c0_100 = arith.constant 0 : index
    %c0_101 = arith.constant 0 : index
    %156 = vector.load %arg7[%c6_99, %c0_100, %c0_101] : memref<9x1x256xf32, #tpu.memory_space<vmem>>, vector<1x1x256xf32>
    %157 = vector.shape_cast %156 : vector<1x1x256xf32> to vector<1x256xf32>
    %c226_i32 = arith.constant 226 : i32
    %158 = tpu.dynamic_rotate %155 by %c226_i32 dim 1 : vector<16x256xf32>, i32 -> vector<16x256xf32>
    %159 = vector.broadcast %157 : vector<1x256xf32> to vector<16x256xf32>
    %160 = arith.mulf %159, %158 : vector<16x256xf32>
    %161 = arith.addf %152, %160 : vector<16x256xf32>
    %c7_102 = arith.constant 7 : index
    %c0_103 = arith.constant 0 : index
    %c0_104 = arith.constant 0 : index
    %162 = vector.load %arg5[%c7_102, %c0_103, %c0_104] : memref<9x16x32xf32, #tpu.memory_space<vmem>>, vector<1x16x32xf32>
    %163 = vector.shape_cast %162 : vector<1x16x32xf32> to vector<16x32xf32>
    %cst_105 = arith.constant dense<0.000000e+00> : vector<16x256xf32>
    %164 = tpu.matmul %163, %100, %cst_105 {dimension_numbers = #tpu.dot_dimension_numbers<[1], [0], [0], [1], [0, 0, 1, 1], [], []>} : vector<16x32xf32>, vector<32x256xf32>, vector<16x256xf32> -> vector<16x256xf32>
    %c7_106 = arith.constant 7 : index
    %c0_107 = arith.constant 0 : index
    %c0_108 = arith.constant 0 : index
    %165 = vector.load %arg7[%c7_106, %c0_107, %c0_108] : memref<9x1x256xf32, #tpu.memory_space<vmem>>, vector<1x1x256xf32>
    %166 = vector.shape_cast %165 : vector<1x1x256xf32> to vector<1x256xf32>
    %c224_i32 = arith.constant 224 : i32
    %167 = tpu.dynamic_rotate %164 by %c224_i32 dim 1 : vector<16x256xf32>, i32 -> vector<16x256xf32>
    %168 = vector.broadcast %166 : vector<1x256xf32> to vector<16x256xf32>
    %169 = arith.mulf %168, %167 : vector<16x256xf32>
    %170 = arith.addf %161, %169 : vector<16x256xf32>
    %c8_109 = arith.constant 8 : index
    %c0_110 = arith.constant 0 : index
    %c0_111 = arith.constant 0 : index
    %171 = vector.load %arg5[%c8_109, %c0_110, %c0_111] : memref<9x16x32xf32, #tpu.memory_space<vmem>>, vector<1x16x32xf32>
    %172 = vector.shape_cast %171 : vector<1x16x32xf32> to vector<16x32xf32>
    %cst_112 = arith.constant dense<0.000000e+00> : vector<16x256xf32>
    %173 = tpu.matmul %172, %100, %cst_112 {dimension_numbers = #tpu.dot_dimension_numbers<[1], [0], [0], [1], [0, 0, 1, 1], [], []>} : vector<16x32xf32>, vector<32x256xf32>, vector<16x256xf32> -> vector<16x256xf32>
    %c8_113 = arith.constant 8 : index
    %c0_114 = arith.constant 0 : index
    %c0_115 = arith.constant 0 : index
    %174 = vector.load %arg7[%c8_113, %c0_114, %c0_115] : memref<9x1x256xf32, #tpu.memory_space<vmem>>, vector<1x1x256xf32>
    %175 = vector.shape_cast %174 : vector<1x1x256xf32> to vector<1x256xf32>
    %c222_i32 = arith.constant 222 : i32
    %176 = tpu.dynamic_rotate %173 by %c222_i32 dim 1 : vector<16x256xf32>, i32 -> vector<16x256xf32>
    %177 = vector.broadcast %175 : vector<1x256xf32> to vector<16x256xf32>
    %178 = arith.mulf %177, %176 : vector<16x256xf32>
    %179 = arith.addf %170, %178 : vector<16x256xf32>
    %c0_116 = arith.constant 0 : index
    %c0_117 = arith.constant 0 : index
    %180 = vector.load %arg6[%c0_116, %c0_117] : memref<16x1xf32, #tpu.memory_space<vmem>>, vector<16x1xf32>
    %181 = vector.broadcast %180 : vector<16x1xf32> to vector<16x256xf32>
    %182 = arith.addf %179, %181 : vector<16x256xf32>
    %cst_118 = arith.constant 0.000000e+00 : f32
    %183 = vector.broadcast %cst_118 : f32 to vector<16x256xf32>
    %184 = arith.maximumf %182, %183 : vector<16x256xf32>
    %c254_i32_119 = arith.constant 254 : i32
    %185 = tpu.dynamic_rotate %184 by %c254_i32_119 dim 1 : vector<16x256xf32>, i32 -> vector<16x256xf32>
    %186 = arith.maximumf %184, %185 : vector<16x256xf32>
    %c224_i32_120 = arith.constant 224 : i32
    %187 = tpu.dynamic_rotate %184 by %c224_i32_120 dim 1 : vector<16x256xf32>, i32 -> vector<16x256xf32>
    %c222_i32_121 = arith.constant 222 : i32
    %188 = tpu.dynamic_rotate %184 by %c222_i32_121 dim 1 : vector<16x256xf32>, i32 -> vector<16x256xf32>
    %189 = arith.maximumf %187, %188 : vector<16x256xf32>
    %190 = arith.maximumf %186, %189 : vector<16x256xf32>
    %c0_122 = arith.constant 0 : index
    %c0_123 = arith.constant 0 : index
    %c0_124 = arith.constant 0 : index
    %191 = vector.load %arg8[%c0_122, %c0_123, %c0_124] : memref<9x4x16xf32, #tpu.memory_space<vmem>>, vector<1x4x16xf32>
    %192 = vector.shape_cast %191 : vector<1x4x16xf32> to vector<4x16xf32>
    %cst_125 = arith.constant dense<0.000000e+00> : vector<4x256xf32>
    %193 = tpu.matmul %192, %190, %cst_125 {dimension_numbers = #tpu.dot_dimension_numbers<[1], [0], [0], [1], [0, 0, 1, 1], [], []>} : vector<4x16xf32>, vector<16x256xf32>, vector<4x256xf32> -> vector<4x256xf32>
    %c0_126 = arith.constant 0 : index
    %c0_127 = arith.constant 0 : index
    %c0_128 = arith.constant 0 : index
    %194 = vector.load %arg10[%c0_126, %c0_127, %c0_128] : memref<9x1x256xf32, #tpu.memory_space<vmem>>, vector<1x1x256xf32>
    %195 = vector.shape_cast %194 : vector<1x1x256xf32> to vector<1x256xf32>
    %c68_i32 = arith.constant 68 : i32
    %196 = tpu.dynamic_rotate %193 by %c68_i32 dim 1 : vector<4x256xf32>, i32 -> vector<4x256xf32>
    %197 = vector.broadcast %195 : vector<1x256xf32> to vector<4x256xf32>
    %198 = arith.mulf %197, %196 : vector<4x256xf32>
    %c1_129 = arith.constant 1 : index
    %c0_130 = arith.constant 0 : index
    %c0_131 = arith.constant 0 : index
    %199 = vector.load %arg8[%c1_129, %c0_130, %c0_131] : memref<9x4x16xf32, #tpu.memory_space<vmem>>, vector<1x4x16xf32>
    %200 = vector.shape_cast %199 : vector<1x4x16xf32> to vector<4x16xf32>
    %cst_132 = arith.constant dense<0.000000e+00> : vector<4x256xf32>
    %201 = tpu.matmul %200, %190, %cst_132 {dimension_numbers = #tpu.dot_dimension_numbers<[1], [0], [0], [1], [0, 0, 1, 1], [], []>} : vector<4x16xf32>, vector<16x256xf32>, vector<4x256xf32> -> vector<4x256xf32>
    %c1_133 = arith.constant 1 : index
    %c0_134 = arith.constant 0 : index
    %c0_135 = arith.constant 0 : index
    %202 = vector.load %arg10[%c1_133, %c0_134, %c0_135] : memref<9x1x256xf32, #tpu.memory_space<vmem>>, vector<1x1x256xf32>
    %203 = vector.shape_cast %202 : vector<1x1x256xf32> to vector<1x256xf32>
    %c64_i32 = arith.constant 64 : i32
    %204 = tpu.dynamic_rotate %201 by %c64_i32 dim 1 : vector<4x256xf32>, i32 -> vector<4x256xf32>
    %205 = vector.broadcast %203 : vector<1x256xf32> to vector<4x256xf32>
    %206 = arith.mulf %205, %204 : vector<4x256xf32>
    %207 = arith.addf %198, %206 : vector<4x256xf32>
    %c2_136 = arith.constant 2 : index
    %c0_137 = arith.constant 0 : index
    %c0_138 = arith.constant 0 : index
    %208 = vector.load %arg8[%c2_136, %c0_137, %c0_138] : memref<9x4x16xf32, #tpu.memory_space<vmem>>, vector<1x4x16xf32>
    %209 = vector.shape_cast %208 : vector<1x4x16xf32> to vector<4x16xf32>
    %cst_139 = arith.constant dense<0.000000e+00> : vector<4x256xf32>
    %210 = tpu.matmul %209, %190, %cst_139 {dimension_numbers = #tpu.dot_dimension_numbers<[1], [0], [0], [1], [0, 0, 1, 1], [], []>} : vector<4x16xf32>, vector<16x256xf32>, vector<4x256xf32> -> vector<4x256xf32>
    %c2_140 = arith.constant 2 : index
    %c0_141 = arith.constant 0 : index
    %c0_142 = arith.constant 0 : index
    %211 = vector.load %arg10[%c2_140, %c0_141, %c0_142] : memref<9x1x256xf32, #tpu.memory_space<vmem>>, vector<1x1x256xf32>
    %212 = vector.shape_cast %211 : vector<1x1x256xf32> to vector<1x256xf32>
    %c60_i32 = arith.constant 60 : i32
    %213 = tpu.dynamic_rotate %210 by %c60_i32 dim 1 : vector<4x256xf32>, i32 -> vector<4x256xf32>
    %214 = vector.broadcast %212 : vector<1x256xf32> to vector<4x256xf32>
    %215 = arith.mulf %214, %213 : vector<4x256xf32>
    %216 = arith.addf %207, %215 : vector<4x256xf32>
    %c3_143 = arith.constant 3 : index
    %c0_144 = arith.constant 0 : index
    %c0_145 = arith.constant 0 : index
    %217 = vector.load %arg8[%c3_143, %c0_144, %c0_145] : memref<9x4x16xf32, #tpu.memory_space<vmem>>, vector<1x4x16xf32>
    %218 = vector.shape_cast %217 : vector<1x4x16xf32> to vector<4x16xf32>
    %cst_146 = arith.constant dense<0.000000e+00> : vector<4x256xf32>
    %219 = tpu.matmul %218, %190, %cst_146 {dimension_numbers = #tpu.dot_dimension_numbers<[1], [0], [0], [1], [0, 0, 1, 1], [], []>} : vector<4x16xf32>, vector<16x256xf32>, vector<4x256xf32> -> vector<4x256xf32>
    %c3_147 = arith.constant 3 : index
    %c0_148 = arith.constant 0 : index
    %c0_149 = arith.constant 0 : index
    %220 = vector.load %arg10[%c3_147, %c0_148, %c0_149] : memref<9x1x256xf32, #tpu.memory_space<vmem>>, vector<1x1x256xf32>
    %221 = vector.shape_cast %220 : vector<1x1x256xf32> to vector<1x256xf32>
    %c4_i32 = arith.constant 4 : i32
    %222 = tpu.dynamic_rotate %219 by %c4_i32 dim 1 : vector<4x256xf32>, i32 -> vector<4x256xf32>
    %223 = vector.broadcast %221 : vector<1x256xf32> to vector<4x256xf32>
    %224 = arith.mulf %223, %222 : vector<4x256xf32>
    %225 = arith.addf %216, %224 : vector<4x256xf32>
    %c4_150 = arith.constant 4 : index
    %c0_151 = arith.constant 0 : index
    %c0_152 = arith.constant 0 : index
    %226 = vector.load %arg8[%c4_150, %c0_151, %c0_152] : memref<9x4x16xf32, #tpu.memory_space<vmem>>, vector<1x4x16xf32>
    %227 = vector.shape_cast %226 : vector<1x4x16xf32> to vector<4x16xf32>
    %cst_153 = arith.constant dense<0.000000e+00> : vector<4x256xf32>
    %228 = tpu.matmul %227, %190, %cst_153 {dimension_numbers = #tpu.dot_dimension_numbers<[1], [0], [0], [1], [0, 0, 1, 1], [], []>} : vector<4x16xf32>, vector<16x256xf32>, vector<4x256xf32> -> vector<4x256xf32>
    %c4_154 = arith.constant 4 : index
    %c0_155 = arith.constant 0 : index
    %c0_156 = arith.constant 0 : index
    %229 = vector.load %arg10[%c4_154, %c0_155, %c0_156] : memref<9x1x256xf32, #tpu.memory_space<vmem>>, vector<1x1x256xf32>
    %230 = vector.shape_cast %229 : vector<1x1x256xf32> to vector<1x256xf32>
    %231 = vector.broadcast %230 : vector<1x256xf32> to vector<4x256xf32>
    %232 = arith.mulf %231, %228 : vector<4x256xf32>
    %233 = arith.addf %225, %232 : vector<4x256xf32>
    %c5_157 = arith.constant 5 : index
    %c0_158 = arith.constant 0 : index
    %c0_159 = arith.constant 0 : index
    %234 = vector.load %arg8[%c5_157, %c0_158, %c0_159] : memref<9x4x16xf32, #tpu.memory_space<vmem>>, vector<1x4x16xf32>
    %235 = vector.shape_cast %234 : vector<1x4x16xf32> to vector<4x16xf32>
    %cst_160 = arith.constant dense<0.000000e+00> : vector<4x256xf32>
    %236 = tpu.matmul %235, %190, %cst_160 {dimension_numbers = #tpu.dot_dimension_numbers<[1], [0], [0], [1], [0, 0, 1, 1], [], []>} : vector<4x16xf32>, vector<16x256xf32>, vector<4x256xf32> -> vector<4x256xf32>
    %c5_161 = arith.constant 5 : index
    %c0_162 = arith.constant 0 : index
    %c0_163 = arith.constant 0 : index
    %237 = vector.load %arg10[%c5_161, %c0_162, %c0_163] : memref<9x1x256xf32, #tpu.memory_space<vmem>>, vector<1x1x256xf32>
    %238 = vector.shape_cast %237 : vector<1x1x256xf32> to vector<1x256xf32>
    %c252_i32 = arith.constant 252 : i32
    %239 = tpu.dynamic_rotate %236 by %c252_i32 dim 1 : vector<4x256xf32>, i32 -> vector<4x256xf32>
    %240 = vector.broadcast %238 : vector<1x256xf32> to vector<4x256xf32>
    %241 = arith.mulf %240, %239 : vector<4x256xf32>
    %242 = arith.addf %233, %241 : vector<4x256xf32>
    %c6_164 = arith.constant 6 : index
    %c0_165 = arith.constant 0 : index
    %c0_166 = arith.constant 0 : index
    %243 = vector.load %arg8[%c6_164, %c0_165, %c0_166] : memref<9x4x16xf32, #tpu.memory_space<vmem>>, vector<1x4x16xf32>
    %244 = vector.shape_cast %243 : vector<1x4x16xf32> to vector<4x16xf32>
    %cst_167 = arith.constant dense<0.000000e+00> : vector<4x256xf32>
    %245 = tpu.matmul %244, %190, %cst_167 {dimension_numbers = #tpu.dot_dimension_numbers<[1], [0], [0], [1], [0, 0, 1, 1], [], []>} : vector<4x16xf32>, vector<16x256xf32>, vector<4x256xf32> -> vector<4x256xf32>
    %c6_168 = arith.constant 6 : index
    %c0_169 = arith.constant 0 : index
    %c0_170 = arith.constant 0 : index
    %246 = vector.load %arg10[%c6_168, %c0_169, %c0_170] : memref<9x1x256xf32, #tpu.memory_space<vmem>>, vector<1x1x256xf32>
    %247 = vector.shape_cast %246 : vector<1x1x256xf32> to vector<1x256xf32>
    %c196_i32 = arith.constant 196 : i32
    %248 = tpu.dynamic_rotate %245 by %c196_i32 dim 1 : vector<4x256xf32>, i32 -> vector<4x256xf32>
    %249 = vector.broadcast %247 : vector<1x256xf32> to vector<4x256xf32>
    %250 = arith.mulf %249, %248 : vector<4x256xf32>
    %251 = arith.addf %242, %250 : vector<4x256xf32>
    %c7_171 = arith.constant 7 : index
    %c0_172 = arith.constant 0 : index
    %c0_173 = arith.constant 0 : index
    %252 = vector.load %arg8[%c7_171, %c0_172, %c0_173] : memref<9x4x16xf32, #tpu.memory_space<vmem>>, vector<1x4x16xf32>
    %253 = vector.shape_cast %252 : vector<1x4x16xf32> to vector<4x16xf32>
    %cst_174 = arith.constant dense<0.000000e+00> : vector<4x256xf32>
    %254 = tpu.matmul %253, %190, %cst_174 {dimension_numbers = #tpu.dot_dimension_numbers<[1], [0], [0], [1], [0, 0, 1, 1], [], []>} : vector<4x16xf32>, vector<16x256xf32>, vector<4x256xf32> -> vector<4x256xf32>
    %c7_175 = arith.constant 7 : index
    %c0_176 = arith.constant 0 : index
    %c0_177 = arith.constant 0 : index
    %255 = vector.load %arg10[%c7_175, %c0_176, %c0_177] : memref<9x1x256xf32, #tpu.memory_space<vmem>>, vector<1x1x256xf32>
    %256 = vector.shape_cast %255 : vector<1x1x256xf32> to vector<1x256xf32>
    %c192_i32 = arith.constant 192 : i32
    %257 = tpu.dynamic_rotate %254 by %c192_i32 dim 1 : vector<4x256xf32>, i32 -> vector<4x256xf32>
    %258 = vector.broadcast %256 : vector<1x256xf32> to vector<4x256xf32>
    %259 = arith.mulf %258, %257 : vector<4x256xf32>
    %260 = arith.addf %251, %259 : vector<4x256xf32>
    %c8_178 = arith.constant 8 : index
    %c0_179 = arith.constant 0 : index
    %c0_180 = arith.constant 0 : index
    %261 = vector.load %arg8[%c8_178, %c0_179, %c0_180] : memref<9x4x16xf32, #tpu.memory_space<vmem>>, vector<1x4x16xf32>
    %262 = vector.shape_cast %261 : vector<1x4x16xf32> to vector<4x16xf32>
    %cst_181 = arith.constant dense<0.000000e+00> : vector<4x256xf32>
    %263 = tpu.matmul %262, %190, %cst_181 {dimension_numbers = #tpu.dot_dimension_numbers<[1], [0], [0], [1], [0, 0, 1, 1], [], []>} : vector<4x16xf32>, vector<16x256xf32>, vector<4x256xf32> -> vector<4x256xf32>
    %c8_182 = arith.constant 8 : index
    %c0_183 = arith.constant 0 : index
    %c0_184 = arith.constant 0 : index
    %264 = vector.load %arg10[%c8_182, %c0_183, %c0_184] : memref<9x1x256xf32, #tpu.memory_space<vmem>>, vector<1x1x256xf32>
    %265 = vector.shape_cast %264 : vector<1x1x256xf32> to vector<1x256xf32>
    %c188_i32 = arith.constant 188 : i32
    %266 = tpu.dynamic_rotate %263 by %c188_i32 dim 1 : vector<4x256xf32>, i32 -> vector<4x256xf32>
    %267 = vector.broadcast %265 : vector<1x256xf32> to vector<4x256xf32>
    %268 = arith.mulf %267, %266 : vector<4x256xf32>
    %269 = arith.addf %260, %268 : vector<4x256xf32>
    %c0_185 = arith.constant 0 : index
    %c0_186 = arith.constant 0 : index
    %270 = vector.load %arg9[%c0_185, %c0_186] : memref<4x1xf32, #tpu.memory_space<vmem>>, vector<4x1xf32>
    %271 = vector.broadcast %270 : vector<4x1xf32> to vector<4x256xf32>
    %272 = arith.addf %269, %271 : vector<4x256xf32>
    %cst_187 = arith.constant 0.000000e+00 : f32
    %273 = vector.broadcast %cst_187 : f32 to vector<4x256xf32>
    %274 = arith.maximumf %272, %273 : vector<4x256xf32>
    %c0_188 = arith.constant 0 : index
    %c0_189 = arith.constant 0 : index
    %275 = vector.load %arg13[%c0_188, %c0_189] : memref<1x256xf32, #tpu.memory_space<vmem>>, vector<1x256xf32>
    %276 = vector.broadcast %275 : vector<1x256xf32> to vector<4x256xf32>
    %277 = arith.mulf %274, %276 : vector<4x256xf32>
    %c0_190 = arith.constant 0 : index
    %c0_191 = arith.constant 0 : index
    %c0_192 = arith.constant 0 : index
    %278 = vector.load %arg11[%c0_190, %c0_191, %c0_192] : memref<4x16x4xf32, #tpu.memory_space<vmem>>, vector<1x16x4xf32>
    %279 = vector.shape_cast %278 : vector<1x16x4xf32> to vector<16x4xf32>
    %cst_193 = arith.constant dense<0.000000e+00> : vector<16x256xf32>
    %280 = tpu.matmul %279, %277, %cst_193 {dimension_numbers = #tpu.dot_dimension_numbers<[1], [0], [0], [1], [0, 0, 1, 1], [], []>} : vector<16x4xf32>, vector<4x256xf32>, vector<16x256xf32> -> vector<16x256xf32>
    %c1_194 = arith.constant 1 : index
    %c0_195 = arith.constant 0 : index
    %c0_196 = arith.constant 0 : index
    %281 = vector.load %arg11[%c1_194, %c0_195, %c0_196] : memref<4x16x4xf32, #tpu.memory_space<vmem>>, vector<1x16x4xf32>
    %282 = vector.shape_cast %281 : vector<1x16x4xf32> to vector<16x4xf32>
    %c2_i32_197 = arith.constant 2 : i32
    %283 = tpu.dynamic_rotate %277 by %c2_i32_197 dim 1 : vector<4x256xf32>, i32 -> vector<4x256xf32>
    %cst_198 = arith.constant dense<0.000000e+00> : vector<16x256xf32>
    %284 = tpu.matmul %282, %283, %cst_198 {dimension_numbers = #tpu.dot_dimension_numbers<[1], [0], [0], [1], [0, 0, 1, 1], [], []>} : vector<16x4xf32>, vector<4x256xf32>, vector<16x256xf32> -> vector<16x256xf32>
    %285 = arith.addf %280, %284 : vector<16x256xf32>
    %c2_199 = arith.constant 2 : index
    %c0_200 = arith.constant 0 : index
    %c0_201 = arith.constant 0 : index
    %286 = vector.load %arg11[%c2_199, %c0_200, %c0_201] : memref<4x16x4xf32, #tpu.memory_space<vmem>>, vector<1x16x4xf32>
    %287 = vector.shape_cast %286 : vector<1x16x4xf32> to vector<16x4xf32>
    %c32_i32_202 = arith.constant 32 : i32
    %288 = tpu.dynamic_rotate %277 by %c32_i32_202 dim 1 : vector<4x256xf32>, i32 -> vector<4x256xf32>
    %cst_203 = arith.constant dense<0.000000e+00> : vector<16x256xf32>
    %289 = tpu.matmul %287, %288, %cst_203 {dimension_numbers = #tpu.dot_dimension_numbers<[1], [0], [0], [1], [0, 0, 1, 1], [], []>} : vector<16x4xf32>, vector<4x256xf32>, vector<16x256xf32> -> vector<16x256xf32>
    %290 = arith.addf %285, %289 : vector<16x256xf32>
    %c3_204 = arith.constant 3 : index
    %c0_205 = arith.constant 0 : index
    %c0_206 = arith.constant 0 : index
    %291 = vector.load %arg11[%c3_204, %c0_205, %c0_206] : memref<4x16x4xf32, #tpu.memory_space<vmem>>, vector<1x16x4xf32>
    %292 = vector.shape_cast %291 : vector<1x16x4xf32> to vector<16x4xf32>
    %c34_i32_207 = arith.constant 34 : i32
    %293 = tpu.dynamic_rotate %277 by %c34_i32_207 dim 1 : vector<4x256xf32>, i32 -> vector<4x256xf32>
    %cst_208 = arith.constant dense<0.000000e+00> : vector<16x256xf32>
    %294 = tpu.matmul %292, %293, %cst_208 {dimension_numbers = #tpu.dot_dimension_numbers<[1], [0], [0], [1], [0, 0, 1, 1], [], []>} : vector<16x4xf32>, vector<4x256xf32>, vector<16x256xf32> -> vector<16x256xf32>
    %295 = arith.addf %290, %294 : vector<16x256xf32>
    %c0_209 = arith.constant 0 : index
    %c0_210 = arith.constant 0 : index
    %296 = vector.load %arg12[%c0_209, %c0_210] : memref<16x1xf32, #tpu.memory_space<vmem>>, vector<16x1xf32>
    %297 = vector.broadcast %296 : vector<16x1xf32> to vector<16x256xf32>
    %298 = arith.addf %295, %297 : vector<16x256xf32>
    %cst_211 = arith.constant 0.000000e+00 : f32
    %299 = vector.broadcast %cst_211 : f32 to vector<16x256xf32>
    %300 = arith.maximumf %298, %299 : vector<16x256xf32>
    %c0_212 = arith.constant 0 : index
    %c0_213 = arith.constant 0 : index
    %301 = vector.load %arg16[%c0_212, %c0_213] : memref<1x256xf32, #tpu.memory_space<vmem>>, vector<1x256xf32>
    %302 = vector.broadcast %301 : vector<1x256xf32> to vector<16x256xf32>
    %303 = arith.mulf %300, %302 : vector<16x256xf32>
    %c0_214 = arith.constant 0 : index
    %c0_215 = arith.constant 0 : index
    %c0_216 = arith.constant 0 : index
    %304 = vector.load %arg14[%c0_214, %c0_215, %c0_216] : memref<4x32x16xf32, #tpu.memory_space<vmem>>, vector<1x32x16xf32>
    %305 = vector.shape_cast %304 : vector<1x32x16xf32> to vector<32x16xf32>
    %cst_217 = arith.constant dense<0.000000e+00> : vector<32x256xf32>
    %306 = tpu.matmul %305, %303, %cst_217 {dimension_numbers = #tpu.dot_dimension_numbers<[1], [0], [0], [1], [0, 0, 1, 1], [], []>} : vector<32x16xf32>, vector<16x256xf32>, vector<32x256xf32> -> vector<32x256xf32>
    %c1_218 = arith.constant 1 : index
    %c0_219 = arith.constant 0 : index
    %c0_220 = arith.constant 0 : index
    %307 = vector.load %arg14[%c1_218, %c0_219, %c0_220] : memref<4x32x16xf32, #tpu.memory_space<vmem>>, vector<1x32x16xf32>
    %308 = vector.shape_cast %307 : vector<1x32x16xf32> to vector<32x16xf32>
    %c1_i32_221 = arith.constant 1 : i32
    %309 = tpu.dynamic_rotate %303 by %c1_i32_221 dim 1 : vector<16x256xf32>, i32 -> vector<16x256xf32>
    %cst_222 = arith.constant dense<0.000000e+00> : vector<32x256xf32>
    %310 = tpu.matmul %308, %309, %cst_222 {dimension_numbers = #tpu.dot_dimension_numbers<[1], [0], [0], [1], [0, 0, 1, 1], [], []>} : vector<32x16xf32>, vector<16x256xf32>, vector<32x256xf32> -> vector<32x256xf32>
    %311 = arith.addf %306, %310 : vector<32x256xf32>
    %c2_223 = arith.constant 2 : index
    %c0_224 = arith.constant 0 : index
    %c0_225 = arith.constant 0 : index
    %312 = vector.load %arg14[%c2_223, %c0_224, %c0_225] : memref<4x32x16xf32, #tpu.memory_space<vmem>>, vector<1x32x16xf32>
    %313 = vector.shape_cast %312 : vector<1x32x16xf32> to vector<32x16xf32>
    %c16_i32_226 = arith.constant 16 : i32
    %314 = tpu.dynamic_rotate %303 by %c16_i32_226 dim 1 : vector<16x256xf32>, i32 -> vector<16x256xf32>
    %cst_227 = arith.constant dense<0.000000e+00> : vector<32x256xf32>
    %315 = tpu.matmul %313, %314, %cst_227 {dimension_numbers = #tpu.dot_dimension_numbers<[1], [0], [0], [1], [0, 0, 1, 1], [], []>} : vector<32x16xf32>, vector<16x256xf32>, vector<32x256xf32> -> vector<32x256xf32>
    %316 = arith.addf %311, %315 : vector<32x256xf32>
    %c3_228 = arith.constant 3 : index
    %c0_229 = arith.constant 0 : index
    %c0_230 = arith.constant 0 : index
    %317 = vector.load %arg14[%c3_228, %c0_229, %c0_230] : memref<4x32x16xf32, #tpu.memory_space<vmem>>, vector<1x32x16xf32>
    %318 = vector.shape_cast %317 : vector<1x32x16xf32> to vector<32x16xf32>
    %c17_i32_231 = arith.constant 17 : i32
    %319 = tpu.dynamic_rotate %303 by %c17_i32_231 dim 1 : vector<16x256xf32>, i32 -> vector<16x256xf32>
    %cst_232 = arith.constant dense<0.000000e+00> : vector<32x256xf32>
    %320 = tpu.matmul %318, %319, %cst_232 {dimension_numbers = #tpu.dot_dimension_numbers<[1], [0], [0], [1], [0, 0, 1, 1], [], []>} : vector<32x16xf32>, vector<16x256xf32>, vector<32x256xf32> -> vector<32x256xf32>
    %321 = arith.addf %316, %320 : vector<32x256xf32>
    %c0_233 = arith.constant 0 : index
    %c0_234 = arith.constant 0 : index
    %322 = vector.load %arg15[%c0_233, %c0_234] : memref<32x1xf32, #tpu.memory_space<vmem>>, vector<32x1xf32>
    %323 = vector.broadcast %322 : vector<32x1xf32> to vector<32x256xf32>
    %324 = arith.addf %321, %323 : vector<32x256xf32>
    %cst_235 = arith.constant 0.000000e+00 : f32
    %325 = vector.broadcast %cst_235 : f32 to vector<32x256xf32>
    %326 = arith.maximumf %324, %325 : vector<32x256xf32>
    %c0_236 = arith.constant 0 : index
    %c0_237 = arith.constant 0 : index
    %327 = vector.load %arg17[%c0_236, %c0_237] : memref<9x32xf32, #tpu.memory_space<vmem>>, vector<9x32xf32>
    %cst_238 = arith.constant dense<0.000000e+00> : vector<9x256xf32>
    %328 = tpu.matmul %327, %326, %cst_238 {dimension_numbers = #tpu.dot_dimension_numbers<[1], [0], [0], [1], [0, 0, 1, 1], [], []>} : vector<9x32xf32>, vector<32x256xf32>, vector<9x256xf32> -> vector<9x256xf32>
    %c0_239 = arith.constant 0 : index
    %c0_240 = arith.constant 0 : index
    %c0_241 = arith.constant 0 : index
    %329 = vector.load %arg4[%c0_239, %c0_240, %c0_241] : memref<9x1x256xf32, #tpu.memory_space<vmem>>, vector<1x1x256xf32>
    %330 = vector.shape_cast %329 : vector<1x1x256xf32> to vector<1x256xf32>
    %331 = vector.extract_strided_slice %328 {offsets = [0, 0], sizes = [1, 256], strides = [1, 1]} : vector<9x256xf32> to vector<1x256xf32>
    %c17_i32_242 = arith.constant 17 : i32
    %332 = tpu.dynamic_rotate %331 by %c17_i32_242 dim 1 : vector<1x256xf32>, i32 -> vector<1x256xf32>
    %333 = arith.mulf %330, %332 : vector<1x256xf32>
    %c1_243 = arith.constant 1 : index
    %c0_244 = arith.constant 0 : index
    %c0_245 = arith.constant 0 : index
    %334 = vector.load %arg4[%c1_243, %c0_244, %c0_245] : memref<9x1x256xf32, #tpu.memory_space<vmem>>, vector<1x1x256xf32>
    %335 = vector.shape_cast %334 : vector<1x1x256xf32> to vector<1x256xf32>
    %336 = vector.extract_strided_slice %328 {offsets = [1, 0], sizes = [1, 256], strides = [1, 1]} : vector<9x256xf32> to vector<1x256xf32>
    %c16_i32_246 = arith.constant 16 : i32
    %337 = tpu.dynamic_rotate %336 by %c16_i32_246 dim 1 : vector<1x256xf32>, i32 -> vector<1x256xf32>
    %338 = arith.mulf %335, %337 : vector<1x256xf32>
    %339 = arith.addf %333, %338 : vector<1x256xf32>
    %c2_247 = arith.constant 2 : index
    %c0_248 = arith.constant 0 : index
    %c0_249 = arith.constant 0 : index
    %340 = vector.load %arg4[%c2_247, %c0_248, %c0_249] : memref<9x1x256xf32, #tpu.memory_space<vmem>>, vector<1x1x256xf32>
    %341 = vector.shape_cast %340 : vector<1x1x256xf32> to vector<1x256xf32>
    %342 = vector.extract_strided_slice %328 {offsets = [2, 0], sizes = [1, 256], strides = [1, 1]} : vector<9x256xf32> to vector<1x256xf32>
    %c15_i32_250 = arith.constant 15 : i32
    %343 = tpu.dynamic_rotate %342 by %c15_i32_250 dim 1 : vector<1x256xf32>, i32 -> vector<1x256xf32>
    %344 = arith.mulf %341, %343 : vector<1x256xf32>
    %345 = arith.addf %339, %344 : vector<1x256xf32>
    %c3_251 = arith.constant 3 : index
    %c0_252 = arith.constant 0 : index
    %c0_253 = arith.constant 0 : index
    %346 = vector.load %arg4[%c3_251, %c0_252, %c0_253] : memref<9x1x256xf32, #tpu.memory_space<vmem>>, vector<1x1x256xf32>
    %347 = vector.shape_cast %346 : vector<1x1x256xf32> to vector<1x256xf32>
    %348 = vector.extract_strided_slice %328 {offsets = [3, 0], sizes = [1, 256], strides = [1, 1]} : vector<9x256xf32> to vector<1x256xf32>
    %c1_i32_254 = arith.constant 1 : i32
    %349 = tpu.dynamic_rotate %348 by %c1_i32_254 dim 1 : vector<1x256xf32>, i32 -> vector<1x256xf32>
    %350 = arith.mulf %347, %349 : vector<1x256xf32>
    %351 = arith.addf %345, %350 : vector<1x256xf32>
    %c4_255 = arith.constant 4 : index
    %c0_256 = arith.constant 0 : index
    %c0_257 = arith.constant 0 : index
    %352 = vector.load %arg4[%c4_255, %c0_256, %c0_257] : memref<9x1x256xf32, #tpu.memory_space<vmem>>, vector<1x1x256xf32>
    %353 = vector.shape_cast %352 : vector<1x1x256xf32> to vector<1x256xf32>
    %354 = vector.extract_strided_slice %328 {offsets = [4, 0], sizes = [1, 256], strides = [1, 1]} : vector<9x256xf32> to vector<1x256xf32>
    %355 = arith.mulf %353, %354 : vector<1x256xf32>
    %356 = arith.addf %351, %355 : vector<1x256xf32>
    %c5_258 = arith.constant 5 : index
    %c0_259 = arith.constant 0 : index
    %c0_260 = arith.constant 0 : index
    %357 = vector.load %arg4[%c5_258, %c0_259, %c0_260] : memref<9x1x256xf32, #tpu.memory_space<vmem>>, vector<1x1x256xf32>
    %358 = vector.shape_cast %357 : vector<1x1x256xf32> to vector<1x256xf32>
    %359 = vector.extract_strided_slice %328 {offsets = [5, 0], sizes = [1, 256], strides = [1, 1]} : vector<9x256xf32> to vector<1x256xf32>
    %c255_i32_261 = arith.constant 255 : i32
    %360 = tpu.dynamic_rotate %359 by %c255_i32_261 dim 1 : vector<1x256xf32>, i32 -> vector<1x256xf32>
    %361 = arith.mulf %358, %360 : vector<1x256xf32>
    %362 = arith.addf %356, %361 : vector<1x256xf32>
    %c6_262 = arith.constant 6 : index
    %c0_263 = arith.constant 0 : index
    %c0_264 = arith.constant 0 : index
    %363 = vector.load %arg4[%c6_262, %c0_263, %c0_264] : memref<9x1x256xf32, #tpu.memory_space<vmem>>, vector<1x1x256xf32>
    %364 = vector.shape_cast %363 : vector<1x1x256xf32> to vector<1x256xf32>
    %365 = vector.extract_strided_slice %328 {offsets = [6, 0], sizes = [1, 256], strides = [1, 1]} : vector<9x256xf32> to vector<1x256xf32>
    %c241_i32_265 = arith.constant 241 : i32
    %366 = tpu.dynamic_rotate %365 by %c241_i32_265 dim 1 : vector<1x256xf32>, i32 -> vector<1x256xf32>
    %367 = arith.mulf %364, %366 : vector<1x256xf32>
    %368 = arith.addf %362, %367 : vector<1x256xf32>
    %c7_266 = arith.constant 7 : index
    %c0_267 = arith.constant 0 : index
    %c0_268 = arith.constant 0 : index
    %369 = vector.load %arg4[%c7_266, %c0_267, %c0_268] : memref<9x1x256xf32, #tpu.memory_space<vmem>>, vector<1x1x256xf32>
    %370 = vector.shape_cast %369 : vector<1x1x256xf32> to vector<1x256xf32>
    %371 = vector.extract_strided_slice %328 {offsets = [7, 0], sizes = [1, 256], strides = [1, 1]} : vector<9x256xf32> to vector<1x256xf32>
    %c240_i32_269 = arith.constant 240 : i32
    %372 = tpu.dynamic_rotate %371 by %c240_i32_269 dim 1 : vector<1x256xf32>, i32 -> vector<1x256xf32>
    %373 = arith.mulf %370, %372 : vector<1x256xf32>
    %374 = arith.addf %368, %373 : vector<1x256xf32>
    %c8_270 = arith.constant 8 : index
    %c0_271 = arith.constant 0 : index
    %c0_272 = arith.constant 0 : index
    %375 = vector.load %arg4[%c8_270, %c0_271, %c0_272] : memref<9x1x256xf32, #tpu.memory_space<vmem>>, vector<1x1x256xf32>
    %376 = vector.shape_cast %375 : vector<1x1x256xf32> to vector<1x256xf32>
    %377 = vector.extract_strided_slice %328 {offsets = [8, 0], sizes = [1, 256], strides = [1, 1]} : vector<9x256xf32> to vector<1x256xf32>
    %c239_i32_273 = arith.constant 239 : i32
    %378 = tpu.dynamic_rotate %377 by %c239_i32_273 dim 1 : vector<1x256xf32>, i32 -> vector<1x256xf32>
    %379 = arith.mulf %376, %378 : vector<1x256xf32>
    %380 = arith.addf %374, %379 : vector<1x256xf32>
    %c0_274 = arith.constant 0 : index
    %c0_275 = arith.constant 0 : index
    %381 = vector.load %arg18[%c0_274, %c0_275] : memref<1x1xf32, #tpu.memory_space<vmem>>, vector<1x1xf32>
    %382 = vector.broadcast %381 : vector<1x1xf32> to vector<1x256xf32>
    %383 = arith.addf %380, %382 : vector<1x256xf32>
    %384 = arith.negf %383 : vector<1x256xf32>
    %385 = math.exp %384 : vector<1x256xf32>
    %cst_276 = arith.constant 1.000000e+00 : f32
    %386 = vector.broadcast %cst_276 : f32 to vector<1x256xf32>
    %387 = arith.addf %386, %385 : vector<1x256xf32>
    %388 = arith.divf %386, %387 : vector<1x256xf32>
    %389 = vector.shape_cast %388 : vector<1x256xf32> to vector<1x1x256xf32>
    %c0_277 = arith.constant 0 : index
    %c0_278 = arith.constant 0 : index
    %c0_279 = arith.constant 0 : index
    %390 = vector.load %arg19[%c0_277, %c0_278, %c0_279] : memref<1x1x256xf32, #tpu.memory_space<vmem>>, vector<1x1x256xf32>
    tpu.vector_store %arg19[%c0_277, %c0_278, %c0_279], %389 {strides = array<i32>} : memref<1x1x256xf32, #tpu.memory_space<vmem>>, vector<1x1x256xf32>,
    return
  }
  func.func @transform_0(%arg0: i32) -> (i32, i32, i32) {
    %c0_i32 = arith.constant 0 : i32
    %c0_i32_0 = arith.constant 0 : i32
    %c0_i32_1 = arith.constant 0 : i32
    return %arg0, %c0_i32, %c0_i32_0 : i32, i32, i32
  }
  func.func @transform_1(%arg0: i32) -> (i32, i32, i32) {
    %c0_i32 = arith.constant 0 : i32
    %c0_i32_0 = arith.constant 0 : i32
    %c0_i32_1 = arith.constant 0 : i32
    %c0_i32_2 = arith.constant 0 : i32
    return %c0_i32, %c0_i32_0, %c0_i32_1 : i32, i32, i32
  }
  func.func @transform_2(%arg0: i32) -> (i32, i32) {
    %c0_i32 = arith.constant 0 : i32
    %c0_i32_0 = arith.constant 0 : i32
    %c0_i32_1 = arith.constant 0 : i32
    return %c0_i32, %c0_i32_0 : i32, i32
  }
  func.func @transform_3(%arg0: i32) -> (i32, i32, i32) {
    %c0_i32 = arith.constant 0 : i32
    %c0_i32_0 = arith.constant 0 : i32
    %c0_i32_1 = arith.constant 0 : i32
    %c0_i32_2 = arith.constant 0 : i32
    return %c0_i32, %c0_i32_0, %c0_i32_1 : i32, i32, i32
  }
  func.func @transform_4(%arg0: i32) -> (i32, i32, i32) {
    %c0_i32 = arith.constant 0 : i32
    %c0_i32_0 = arith.constant 0 : i32
    %c0_i32_1 = arith.constant 0 : i32
    %c0_i32_2 = arith.constant 0 : i32
    return %c0_i32, %c0_i32_0, %c0_i32_1 : i32, i32, i32
  }
  func.func @transform_5(%arg0: i32) -> (i32, i32) {
    %c0_i32 = arith.constant 0 : i32
    %c0_i32_0 = arith.constant 0 : i32
    %c0_i32_1 = arith.constant 0 : i32
    return %c0_i32, %c0_i32_0 : i32, i32
  }
  func.func @transform_6(%arg0: i32) -> (i32, i32, i32) {
    %c0_i32 = arith.constant 0 : i32
    %c0_i32_0 = arith.constant 0 : i32
    %c0_i32_1 = arith.constant 0 : i32
    %c0_i32_2 = arith.constant 0 : i32
    return %c0_i32, %c0_i32_0, %c0_i32_1 : i32, i32, i32
  }
  func.func @transform_7(%arg0: i32) -> (i32, i32, i32) {
    %c0_i32 = arith.constant 0 : i32
    %c0_i32_0 = arith.constant 0 : i32
    %c0_i32_1 = arith.constant 0 : i32
    %c0_i32_2 = arith.constant 0 : i32
    return %c0_i32, %c0_i32_0, %c0_i32_1 : i32, i32, i32
  }
  func.func @transform_8(%arg0: i32) -> (i32, i32) {
    %c0_i32 = arith.constant 0 : i32
    %c0_i32_0 = arith.constant 0 : i32
    %c0_i32_1 = arith.constant 0 : i32
    return %c0_i32, %c0_i32_0 : i32, i32
  }
  func.func @transform_9(%arg0: i32) -> (i32, i32, i32) {
    %c0_i32 = arith.constant 0 : i32
    %c0_i32_0 = arith.constant 0 : i32
    %c0_i32_1 = arith.constant 0 : i32
    %c0_i32_2 = arith.constant 0 : i32
    return %c0_i32, %c0_i32_0, %c0_i32_1 : i32, i32, i32
  }
  func.func @transform_10(%arg0: i32) -> (i32, i32, i32) {
    %c0_i32 = arith.constant 0 : i32
    %c0_i32_0 = arith.constant 0 : i32
    %c0_i32_1 = arith.constant 0 : i32
    %c0_i32_2 = arith.constant 0 : i32
    return %c0_i32, %c0_i32_0, %c0_i32_1 : i32, i32, i32
  }
  func.func @transform_11(%arg0: i32) -> (i32, i32) {
    %c0_i32 = arith.constant 0 : i32
    %c0_i32_0 = arith.constant 0 : i32
    %c0_i32_1 = arith.constant 0 : i32
    return %c0_i32, %c0_i32_0 : i32, i32
  }
  func.func @transform_12(%arg0: i32) -> (i32, i32) {
    %c0_i32 = arith.constant 0 : i32
    %c0_i32_0 = arith.constant 0 : i32
    %c0_i32_1 = arith.constant 0 : i32
    return %c0_i32, %c0_i32_0 : i32, i32
  }
  func.func @transform_13(%arg0: i32) -> (i32, i32, i32) {
    %c0_i32 = arith.constant 0 : i32
    %c0_i32_0 = arith.constant 0 : i32
    %c0_i32_1 = arith.constant 0 : i32
    %c0_i32_2 = arith.constant 0 : i32
    return %c0_i32, %c0_i32_0, %c0_i32_1 : i32, i32, i32
  }
  func.func @transform_14(%arg0: i32) -> (i32, i32) {
    %c0_i32 = arith.constant 0 : i32
    %c0_i32_0 = arith.constant 0 : i32
    %c0_i32_1 = arith.constant 0 : i32
    return %c0_i32, %c0_i32_0 : i32, i32
  }
  func.func @transform_15(%arg0: i32) -> (i32, i32) {
    %c0_i32 = arith.constant 0 : i32
    %c0_i32_0 = arith.constant 0 : i32
    %c0_i32_1 = arith.constant 0 : i32
    return %c0_i32, %c0_i32_0 : i32, i32
  }
  func.func @transform_16(%arg0: i32) -> (i32, i32) {
    %c0_i32 = arith.constant 0 : i32
    %c0_i32_0 = arith.constant 0 : i32
    %c0_i32_1 = arith.constant 0 : i32
    return %c0_i32, %c0_i32_0 : i32, i32
  }
  func.func @transform_17(%arg0: i32) -> (i32, i32) {
    %c0_i32 = arith.constant 0 : i32
    %c0_i32_0 = arith.constant 0 : i32
    %c0_i32_1 = arith.constant 0 : i32
    return %c0_i32, %c0_i32_0 : i32, i32
  }
  func.func @transform_18(%arg0: i32) -> (i32, i32, i32) {
    %c0_i32 = arith.constant 0 : i32
    %c0_i32_0 = arith.constant 0 : i32
    %c0_i32_1 = arith.constant 0 : i32
    return %arg0, %c0_i32, %c0_i32_0 : i32, i32, i32
  }
}

</mosaic_0001>

<llo_original>
// kernel: conv_denoiser_forward.1
$region0: #{conv_denoiser_forward.1}
  #allocation0 [shape = 'u32[]', space=smem, size = 0x4, offset = 0x4, fixed_abs, tag = 'smem constant byte address 0x4 - core index']
  #allocation1 [shape = 'u32[144,128]{1,0:T(1,128)}', space=vmem, size = 0x12000, scoped, tag = 'internal scratch']
  #allocation2 [shape = 'f32[1,1]{1,0:T(1,128)S(1)}', space=vmem, size = 0x200, scoped, tag = 'scoped memory for conv_denoiser_forward.1']
  %s0 = inlined_call_operand.vmem [shape: f32[2,1,256], index: 0, kind: input, shape index: {}]
  %s1 = inlined_call_operand.vmem [shape: f32[9,32,1], index: 1, kind: input, shape index: {}]
  %s2 = inlined_call_operand.vmem [shape: f32[32,1], index: 2, kind: input, shape index: {}]
  %s3 = inlined_call_operand.vmem [shape: f32[9,1,256], index: 3, kind: input, shape index: {}]
  %s4 = inlined_call_operand.vmem [shape: f32[9,16,32], index: 4, kind: input, shape index: {}]
  %s5 = inlined_call_operand.vmem [shape: f32[16,1], index: 5, kind: input, shape index: {}]
  %s6 = inlined_call_operand.vmem [shape: f32[9,1,256], index: 6, kind: input, shape index: {}]
  %s7 = inlined_call_operand.vmem [shape: f32[9,4,16], index: 7, kind: input, shape index: {}]
  %s8 = inlined_call_operand.vmem [shape: f32[4,1], index: 8, kind: input, shape index: {}]
  %s9 = inlined_call_operand.vmem [shape: f32[9,1,256], index: 9, kind: input, shape index: {}]
  %s10 = inlined_call_operand.vmem [shape: f32[4,16,4], index: 10, kind: input, shape index: {}]
  %s11 = inlined_call_operand.vmem [shape: f32[16,1], index: 11, kind: input, shape index: {}]
  %s12 = inlined_call_operand.vmem [shape: f32[1,256], index: 12, kind: input, shape index: {}]
  %s13 = inlined_call_operand.vmem [shape: f32[4,32,16], index: 13, kind: input, shape index: {}]
  %s14 = inlined_call_operand.vmem [shape: f32[32,1], index: 14, kind: input, shape index: {}]
  %s15 = inlined_call_operand.vmem [shape: f32[1,256], index: 15, kind: input, shape index: {}]
  %s16 = inlined_call_operand.vmem [shape: f32[9,32], index: 16, kind: input, shape index: {}]
  %s17 = inlined_call_operand.<no memory space> [shape: f32[1,1], index: 17, kind: input, shape index: {}]
  %s18 = inlined_call_operand.vmem [shape: f32[2,1,256], index: 18, kind: output, shape index: {}]
  %s19 = sld [smem:[#allocation0]]
  $region105: #{conv_denoiser_forward.1} parent=0
    _
  %s21 = ssub.s32 1, %s19
  %s22 = scalar_select 0, %s21, %s19
  %v23 = vstv %s17
  %24 = vst [vmem:[#allocation2] sm:$0x1] %v23
  loop: start=0, step=1, limit=4
  $region2: #{conv_denoiser_forward.1} parent=0 // loop_pre_header
    _
  $region3: #{conv_denoiser_forward.1} parent=0 // loop_header
    %s26 = sphi 0, %s30
    %p27 = scmp.ge.s32.totalorder %s26, 4
    %s36 = sphi 0, %s38
    %s39 = sphi 0, %s36
    %s40 = sphi 0, %s39
    %s56 = sphi 0, %s40
    %s60 = sphi 0, %s60
    %s62 = sphi 0, %s60
    %s63 = sphi 0, %s62
    %s77 = sphi 0, %s63
    %s81 = sphi 0, %s81
    %s83 = sphi 0, %s81
    %s84 = sphi 0, %s83
    %s98 = sphi 0, %s84
    %s102 = sphi 0, %s102
    %s104 = sphi 0, %s102
    %s105 = sphi 0, %s104
    %s119 = sphi 0, %s105
    %s123 = sphi 0, %s123
    %s125 = sphi 0, %s123
    %s126 = sphi 0, %s125
    %s140 = sphi 0, %s126
    %s144 = sphi 0, %s144
    %s146 = sphi 0, %s144
    %s147 = sphi 0, %s146
    %s161 = sphi 0, %s147
    %s165 = sphi 0, %s165
    %s167 = sphi 0, %s165
    %s168 = sphi 0, %s167
    %s182 = sphi 0, %s168
    %s186 = sphi 0, %s186
    %s188 = sphi 0, %s186
    %s189 = sphi 0, %s188
    %s203 = sphi 0, %s189
    %s207 = sphi 0, %s207
    %s209 = sphi 0, %s207
    %s210 = sphi 0, %s209
    %s224 = sphi 0, %s210
    %s228 = sphi 0, %s228
    %s230 = sphi 0, %s228
    %s231 = sphi 0, %s230
    %s245 = sphi 0, %s231
    %s249 = sphi 0, %s249
    %s251 = sphi 0, %s249
    %s252 = sphi 0, %s251
    %s266 = sphi 0, %s252
    %s270 = sphi 0, %s270
    %s272 = sphi 0, %s270
    %s273 = sphi 0, %s272
    %s287 = sphi 0, %s273
    %s291 = sphi 0, %s291
    %s293 = sphi 0, %s291
    %s294 = sphi 0, %s293
    %s308 = sphi 0, %s294
    %s312 = sphi 0, %s312
    %s314 = sphi 0, %s312
    %s315 = sphi 0, %s314
    %s329 = sphi 0, %s315
    %s333 = sphi 0, %s333
    %s335 = sphi 0, %s333
    %s336 = sphi 0, %s335
    %s350 = sphi 0, %s336
    %s354 = sphi 0, %s354
    %s356 = sphi 0, %s354
    %s357 = sphi 0, %s356
    %s371 = sphi 0, %s357
    %s375 = sphi 0, %s375
    %s377 = sphi 0, %s375
    %s378 = sphi 0, %s377
    %s392 = sphi 0, %s378
    %s396 = sphi 0, %s396
    %s398 = sphi 0, %s396
    %s399 = sphi 0, %s398
    %s413 = sphi 0, %s399
    %s419 = sphi 0, %s421
    %s422 = sphi 0, %s419
    %s423 = sphi 0, %s422
    %s439 = sphi 0, %s423
  $region4: #{conv_denoiser_forward.1} parent=0 // loop_header_branch
    %29 = sbr.rel (%p27) target = $region8
  $region5: #{conv_denoiser_forward.1} parent=0 // loop_body
    %s31 = ssub.s32 %s26, 1
    %s32 = ssub.s32 %s26, 2
    %s33 = sadd.s32 %s26, 1
    %s34 = ssub.s32 %s26, %s33
    %p35 = scmp.eq.s32.totalorder %s34, 0
    %s37 = sadd.s32 %s36, 1
    %s38 = scalar_select %p35, %s36, %s37
    %p41 = pneg %p35
    %p42 = scmp.eq.s32.totalorder %s26, 1
    %p43 = por %p41, %p42
    %p44 = scmp.ne.s32.totalorder %s36, %s39
    %p45 = scmp.eq.s32.totalorder %s26, 0
    %p46 = por %p44, %p45
    %p47 = scmp.ne.s32.totalorder %s36, %s39
    %p48 = scmp.eq.s32.totalorder %s31, 1
    %p49 = por %p47, %p48
    %p50 = scmp.ne.s32.totalorder %s39, %s40
    %p51 = scmp.eq.s32.totalorder %s31, 0
    %p52 = por %p50, %p51
    %p53 = scmp.ne.s32.totalorder %s39, %s40
    %p54 = scmp.eq.s32.totalorder %s32, 1
    %p55 = por %p53, %p54
    %p57 = scmp.ne.s32.totalorder %s40, %s56
    %p58 = scmp.eq.s32.totalorder %s32, 0
    %p59 = por %p57, %p58
    %s61 = sadd.s32 %s60, 1
    %p64 = scmp.eq.s32.totalorder %s26, 1
    %p65 = scmp.ne.s32.totalorder %s60, %s62
    %p66 = scmp.eq.s32.totalorder %s26, 0
    %p67 = por %p65, %p66
    %p68 = scmp.ne.s32.totalorder %s60, %s62
    %p69 = scmp.eq.s32.totalorder %s31, 1
    %p70 = por %p68, %p69
    %p71 = scmp.ne.s32.totalorder %s62, %s63
    %p72 = scmp.eq.s32.totalorder %s31, 0
    %p73 = por %p71, %p72
    %p74 = scmp.ne.s32.totalorder %s62, %s63
    %p75 = scmp.eq.s32.totalorder %s32, 1
    %p76 = por %p74, %p75
    %p78 = scmp.ne.s32.totalorder %s63, %s77
    %p79 = scmp.eq.s32.totalorder %s32, 0
    %p80 = por %p78, %p79
    %s82 = sadd.s32 %s81, 1
    %p85 = scmp.eq.s32.totalorder %s26, 1
    %p86 = scmp.ne.s32.totalorder %s81, %s83
    %p87 = scmp.eq.s32.totalorder %s26, 0
    %p88 = por %p86, %p87
    %p89 = scmp.ne.s32.totalorder %s81, %s83
    %p90 = scmp.eq.s32.totalorder %s31, 1
    %p91 = por %p89, %p90
    %p92 = scmp.ne.s32.totalorder %s83, %s84
    %p93 = scmp.eq.s32.totalorder %s31, 0
    %p94 = por %p92, %p93
    %p95 = scmp.ne.s32.totalorder %s83, %s84
    %p96 = scmp.eq.s32.totalorder %s32, 1
    %p97 = por %p95, %p96
    %p99 = scmp.ne.s32.totalorder %s84, %s98
    %p100 = scmp.eq.s32.totalorder %s32, 0
    %p101 = por %p99, %p100
    %s103 = sadd.s32 %s102, 1
    %p106 = scmp.eq.s32.totalorder %s26, 1
    %p107 = scmp.ne.s32.totalorder %s102, %s104
    %p108 = scmp.eq.s32.totalorder %s26, 0
    %p109 = por %p107, %p108
    %p110 = scmp.ne.s32.totalorder %s102, %s104
    %p111 = scmp.eq.s32.totalorder %s31, 1
    %p112 = por %p110, %p111
    %p113 = scmp.ne.s32.totalorder %s104, %s105
    %p114 = scmp.eq.s32.totalorder %s31, 0
    %p115 = por %p113, %p114
    %p116 = scmp.ne.s32.totalorder %s104, %s105
    %p117 = scmp.eq.s32.totalorder %s32, 1
    %p118 = por %p116, %p117
    %p120 = scmp.ne.s32.totalorder %s105, %s119
    %p121 = scmp.eq.s32.totalorder %s32, 0
    %p122 = por %p120, %p121
    %s124 = sadd.s32 %s123, 1
    %p127 = scmp.eq.s32.totalorder %s26, 1
    %p128 = scmp.ne.s32.totalorder %s123, %s125
    %p129 = scmp.eq.s32.totalorder %s26, 0
    %p130 = por %p128, %p129
    %p131 = scmp.ne.s32.totalorder %s123, %s125
    %p132 = scmp.eq.s32.totalorder %s31, 1
    %p133 = por %p131, %p132
    %p134 = scmp.ne.s32.totalorder %s125, %s126
    %p135 = scmp.eq.s32.totalorder %s31, 0
    %p136 = por %p134, %p135
    %p137 = scmp.ne.s32.totalorder %s125, %s126
    %p138 = scmp.eq.s32.totalorder %s32, 1
    %p139 = por %p137, %p138
    %p141 = scmp.ne.s32.totalorder %s126, %s140
    %p142 = scmp.eq.s32.totalorder %s32, 0
    %p143 = por %p141, %p142
    %s145 = sadd.s32 %s144, 1
    %p148 = scmp.eq.s32.totalorder %s26, 1
    %p149 = scmp.ne.s32.totalorder %s144, %s146
    %p150 = scmp.eq.s32.totalorder %s26, 0
    %p151 = por %p149, %p150
    %p152 = scmp.ne.s32.totalorder %s144, %s146
    %p153 = scmp.eq.s32.totalorder %s31, 1
    %p154 = por %p152, %p153
    %p155 = scmp.ne.s32.totalorder %s146, %s147
    %p156 = scmp.eq.s32.totalorder %s31, 0
    %p157 = por %p155, %p156
    %p158 = scmp.ne.s32.totalorder %s146, %s147
    %p159 = scmp.eq.s32.totalorder %s32, 1
    %p160 = por %p158, %p159
    %p162 = scmp.ne.s32.totalorder %s147, %s161
    %p163 = scmp.eq.s32.totalorder %s32, 0
    %p164 = por %p162, %p163
    %s166 = sadd.s32 %s165, 1
    %p169 = scmp.eq.s32.totalorder %s26, 1
    %p170 = scmp.ne.s32.totalorder %s165, %s167
    %p171 = scmp.eq.s32.totalorder %s26, 0
    %p172 = por %p170, %p171
    %p173 = scmp.ne.s32.totalorder %s165, %s167
    %p174 = scmp.eq.s32.totalorder %s31, 1
    %p175 = por %p173, %p174
    %p176 = scmp.ne.s32.totalorder %s167, %s168
    %p177 = scmp.eq.s32.totalorder %s31, 0
    %p178 = por %p176, %p177
    %p179 = scmp.ne.s32.totalorder %s167, %s168
    %p180 = scmp.eq.s32.totalorder %s32, 1
    %p181 = por %p179, %p180
    %p183 = scmp.ne.s32.totalorder %s168, %s182
    %p184 = scmp.eq.s32.totalorder %s32, 0
    %p185 = por %p183, %p184
    %s187 = sadd.s32 %s186, 1
    %p190 = scmp.eq.s32.totalorder %s26, 1
    %p191 = scmp.ne.s32.totalorder %s186, %s188
    %p192 = scmp.eq.s32.totalorder %s26, 0
    %p193 = por %p191, %p192
    %p194 = scmp.ne.s32.totalorder %s186, %s188
    %p195 = scmp.eq.s32.totalorder %s31, 1
    %p196 = por %p194, %p195
    %p197 = scmp.ne.s32.totalorder %s188, %s189
    %p198 = scmp.eq.s32.totalorder %s31, 0
    %p199 = por %p197, %p198
    %p200 = scmp.ne.s32.totalorder %s188, %s189
    %p201 = scmp.eq.s32.totalorder %s32, 1
    %p202 = por %p200, %p201
    %p204 = scmp.ne.s32.totalorder %s189, %s203
    %p205 = scmp.eq.s32.totalorder %s32, 0
    %p206 = por %p204, %p205
    %s208 = sadd.s32 %s207, 1
    %p211 = scmp.eq.s32.totalorder %s26, 1
    %p212 = scmp.ne.s32.totalorder %s207, %s209
    %p213 = scmp.eq.s32.totalorder %s26, 0
    %p214 = por %p212, %p213
    %p215 = scmp.ne.s32.totalorder %s207, %s209
    %p216 = scmp.eq.s32.totalorder %s31, 1
    %p217 = por %p215, %p216
    %p218 = scmp.ne.s32.totalorder %s209, %s210
    %p219 = scmp.eq.s32.totalorder %s31, 0
    %p220 = por %p218, %p219
    %p221 = scmp.ne.s32.totalorder %s209, %s210
    %p222 = scmp.eq.s32.totalorder %s32, 1
    %p223 = por %p221, %p222
    %p225 = scmp.ne.s32.totalorder %s210, %s224
    %p226 = scmp.eq.s32.totalorder %s32, 0
    %p227 = por %p225, %p226
    %s229 = sadd.s32 %s228, 1
    %p232 = scmp.eq.s32.totalorder %s26, 1
    %p233 = scmp.ne.s32.totalorder %s228, %s230
    %p234 = scmp.eq.s32.totalorder %s26, 0
    %p235 = por %p233, %p234
    %p236 = scmp.ne.s32.totalorder %s228, %s230
    %p237 = scmp.eq.s32.totalorder %s31, 1
    %p238 = por %p236, %p237
    %p239 = scmp.ne.s32.totalorder %s230, %s231
    %p240 = scmp.eq.s32.totalorder %s31, 0
    %p241 = por %p239, %p240
    %p242 = scmp.ne.s32.totalorder %s230, %s231
    %p243 = scmp.eq.s32.totalorder %s32, 1
    %p244 = por %p242, %p243
    %p246 = scmp.ne.s32.totalorder %s231, %s245
    %p247 = scmp.eq.s32.totalorder %s32, 0
    %p248 = por %p246, %p247
    %s250 = sadd.s32 %s249, 1
    %p253 = scmp.eq.s32.totalorder %s26, 1
    %p254 = scmp.ne.s32.totalorder %s249, %s251
    %p255 = scmp.eq.s32.totalorder %s26, 0
    %p256 = por %p254, %p255
    %p257 = scmp.ne.s32.totalorder %s249, %s251
    %p258 = scmp.eq.s32.totalorder %s31, 1
    %p259 = por %p257, %p258
    %p260 = scmp.ne.s32.totalorder %s251, %s252
    %p261 = scmp.eq.s32.totalorder %s31, 0
    %p262 = por %p260, %p261
    %p263 = scmp.ne.s32.totalorder %s251, %s252
    %p264 = scmp.eq.s32.totalorder %s32, 1
    %p265 = por %p263, %p264
    %p267 = scmp.ne.s32.totalorder %s252, %s266
    %p268 = scmp.eq.s32.totalorder %s32, 0
    %p269 = por %p267, %p268
    %s271 = sadd.s32 %s270, 1
    %p274 = scmp.eq.s32.totalorder %s26, 1
    %p275 = scmp.ne.s32.totalorder %s270, %s272
    %p276 = scmp.eq.s32.totalorder %s26, 0
    %p277 = por %p275, %p276
    %p278 = scmp.ne.s32.totalorder %s270, %s272
    %p279 = scmp.eq.s32.totalorder %s31, 1
    %p280 = por %p278, %p279
    %p281 = scmp.ne.s32.totalorder %s272, %s273
    %p282 = scmp.eq.s32.totalorder %s31, 0
    %p283 = por %p281, %p282
    %p284 = scmp.ne.s32.totalorder %s272, %s273
    %p285 = scmp.eq.s32.totalorder %s32, 1
    %p286 = por %p284, %p285
    %p288 = scmp.ne.s32.totalorder %s273, %s287
    %p289 = scmp.eq.s32.totalorder %s32, 0
    %p290 = por %p288, %p289
    %s292 = sadd.s32 %s291, 1
    %p295 = scmp.eq.s32.totalorder %s26, 1
    %p296 = scmp.ne.s32.totalorder %s291, %s293
    %p297 = scmp.eq.s32.totalorder %s26, 0
    %p298 = por %p296, %p297
    %p299 = scmp.ne.s32.totalorder %s291, %s293
    %p300 = scmp.eq.s32.totalorder %s31, 1
    %p301 = por %p299, %p300
    %p302 = scmp.ne.s32.totalorder %s293, %s294
    %p303 = scmp.eq.s32.totalorder %s31, 0
    %p304 = por %p302, %p303
    %p305 = scmp.ne.s32.totalorder %s293, %s294
    %p306 = scmp.eq.s32.totalorder %s32, 1
    %p307 = por %p305, %p306
    %p309 = scmp.ne.s32.totalorder %s294, %s308
    %p310 = scmp.eq.s32.totalorder %s32, 0
    %p311 = por %p309, %p310
    %s313 = sadd.s32 %s312, 1
    %p316 = scmp.eq.s32.totalorder %s26, 1
    %p317 = scmp.ne.s32.totalorder %s312, %s314
    %p318 = scmp.eq.s32.totalorder %s26, 0
    %p319 = por %p317, %p318
    %p320 = scmp.ne.s32.totalorder %s312, %s314
    %p321 = scmp.eq.s32.totalorder %s31, 1
    %p322 = por %p320, %p321
    %p323 = scmp.ne.s32.totalorder %s314, %s315
    %p324 = scmp.eq.s32.totalorder %s31, 0
    %p325 = por %p323, %p324
    %p326 = scmp.ne.s32.totalorder %s314, %s315
    %p327 = scmp.eq.s32.totalorder %s32, 1
    %p328 = por %p326, %p327
    %p330 = scmp.ne.s32.totalorder %s315, %s329
    %p331 = scmp.eq.s32.totalorder %s32, 0
    %p332 = por %p330, %p331
    %s334 = sadd.s32 %s333, 1
    %p337 = scmp.eq.s32.totalorder %s26, 1
    %p338 = scmp.ne.s32.totalorder %s333, %s335
    %p339 = scmp.eq.s32.totalorder %s26, 0
    %p340 = por %p338, %p339
    %p341 = scmp.ne.s32.totalorder %s333, %s335
    %p342 = scmp.eq.s32.totalorder %s31, 1
    %p343 = por %p341, %p342
    %p344 = scmp.ne.s32.totalorder %s335, %s336
    %p345 = scmp.eq.s32.totalorder %s31, 0
    %p346 = por %p344, %p345
    %p347 = scmp.ne.s32.totalorder %s335, %s336
    %p348 = scmp.eq.s32.totalorder %s32, 1
    %p349 = por %p347, %p348
    %p351 = scmp.ne.s32.totalorder %s336, %s350
    %p352 = scmp.eq.s32.totalorder %s32, 0
    %p353 = por %p351, %p352
    %s355 = sadd.s32 %s354, 1
    %p358 = scmp.eq.s32.totalorder %s26, 1
    %p359 = scmp.ne.s32.totalorder %s354, %s356
    %p360 = scmp.eq.s32.totalorder %s26, 0
    %p361 = por %p359, %p360
    %p362 = scmp.ne.s32.totalorder %s354, %s356
    %p363 = scmp.eq.s32.totalorder %s31, 1
    %p364 = por %p362, %p363
    %p365 = scmp.ne.s32.totalorder %s356, %s357
    %p366 = scmp.eq.s32.totalorder %s31, 0
    %p367 = por %p365, %p366
    %p368 = scmp.ne.s32.totalorder %s356, %s357
    %p369 = scmp.eq.s32.totalorder %s32, 1
    %p370 = por %p368, %p369
    %p372 = scmp.ne.s32.totalorder %s357, %s371
    %p373 = scmp.eq.s32.totalorder %s32, 0
    %p374 = por %p372, %p373
    %s376 = sadd.s32 %s375, 1
    %p379 = scmp.eq.s32.totalorder %s26, 1
    %p380 = scmp.ne.s32.totalorder %s375, %s377
    %p381 = scmp.eq.s32.totalorder %s26, 0
    %p382 = por %p380, %p381
    %p383 = scmp.ne.s32.totalorder %s375, %s377
    %p384 = scmp.eq.s32.totalorder %s31, 1
    %p385 = por %p383, %p384
    %p386 = scmp.ne.s32.totalorder %s377, %s378
    %p387 = scmp.eq.s32.totalorder %s31, 0
    %p388 = por %p386, %p387
    %p389 = scmp.ne.s32.totalorder %s377, %s378
    %p390 = scmp.eq.s32.totalorder %s32, 1
    %p391 = por %p389, %p390
    %p393 = scmp.ne.s32.totalorder %s378, %s392
    %p394 = scmp.eq.s32.totalorder %s32, 0
    %p395 = por %p393, %p394
    %s397 = sadd.s32 %s396, 1
    %p400 = scmp.eq.s32.totalorder %s26, 1
    %p401 = scmp.ne.s32.totalorder %s396, %s398
    %p402 = scmp.eq.s32.totalorder %s26, 0
    %p403 = por %p401, %p402
    %p404 = scmp.ne.s32.totalorder %s396, %s398
    %p405 = scmp.eq.s32.totalorder %s31, 1
    %p406 = por %p404, %p405
    %p407 = scmp.ne.s32.totalorder %s398, %s399
    %p408 = scmp.eq.s32.totalorder %s31, 0
    %p409 = por %p407, %p408
    %p410 = scmp.ne.s32.totalorder %s398, %s399
    %p411 = scmp.eq.s32.totalorder %s32, 1
    %p412 = por %p410, %p411
    %p414 = scmp.ne.s32.totalorder %s399, %s413
    %p415 = scmp.eq.s32.totalorder %s32, 0
    %p416 = por %p414, %p415
    %s417 = ssub.s32 %s26, %s33
    %p418 = scmp.eq.s32.totalorder %s417, 0
    %s420 = sadd.s32 %s419, 1
    %s421 = scalar_select %p418, %s419, %s420
    %p424 = pneg %p418
    %p425 = scmp.eq.s32.totalorder %s26, 1
    %p426 = por %p424, %p425
    %p427 = scmp.ne.s32.totalorder %s419, %s422
    %p428 = scmp.eq.s32.totalorder %s26, 0
    %p429 = por %p427, %p428
    %p430 = scmp.ne.s32.totalorder %s419, %s422
    %p431 = scmp.eq.s32.totalorder %s31, 1
    %p432 = por %p430, %p431
    %p433 = scmp.ne.s32.totalorder %s422, %s423
    %p434 = scmp.eq.s32.totalorder %s31, 0
    %p435 = por %p433, %p434
    %p436 = scmp.ne.s32.totalorder %s422, %s423
    %p437 = scmp.eq.s32.totalorder %s32, 1
    %p438 = por %p436, %p437
    %p440 = scmp.ne.s32.totalorder %s423, %s439
    %p441 = scmp.eq.s32.totalorder %s32, 0
    %p442 = por %p440, %p441
    %p443 = scmp.le.s32.totalorder 1, %s26
    %p444 = scmp.lt.s32.totalorder %s26, 3
    %p445 = pnand %p443, %p444
    %p446 = pneg %p445
    // Predicated region
    $region9: #{conv_denoiser_forward.1} parent=5 // pred_check
      _
    $region10: #{conv_denoiser_forward.1} parent=5 // pred_check_branch
      %448 = sbr.rel (%p445) target = $region12
    $region11: #{conv_denoiser_forward.1} parent=5 // pred_region
      %s449 = ssub.s32 %s26, 1
      // Predicated region
      $region13: #{conv_denoiser_forward.1} parent=11 // pred_check
        %p450 = pneg %p73
      $region14: #{conv_denoiser_forward.1} parent=11 // pred_check_branch
        %452 = sbr.rel (%p450) target = $region16
      $region15: #{conv_denoiser_forward.1} parent=11 // pred_region
        _
      $region16: #{conv_denoiser_forward.1} parent=11 // pred_fallthru
        _
      // Predicated region
      $region17: #{conv_denoiser_forward.1} parent=11 // pred_check
        %p453 = pneg %p94
      $region18: #{conv_denoiser_forward.1} parent=11 // pred_check_branch
        %455 = sbr.rel (%p453) target = $region20
      $region19: #{conv_denoiser_forward.1} parent=11 // pred_region
        _
      $region20: #{conv_denoiser_forward.1} parent=11 // pred_fallthru
        _
      // Predicated region
      $region21: #{conv_denoiser_forward.1} parent=11 // pred_check
        %p456 = pneg %p115
      $region22: #{conv_denoiser_forward.1} parent=11 // pred_check_branch
        %458 = sbr.rel (%p456) target = $region24
      $region23: #{conv_denoiser_forward.1} parent=11 // pred_region
        _
      $region24: #{conv_denoiser_forward.1} parent=11 // pred_fallthru
        _
      // Predicated region
      $region25: #{conv_denoiser_forward.1} parent=11 // pred_check
        %p459 = pneg %p136
      $region26: #{conv_denoiser_forward.1} parent=11 // pred_check_branch
        %461 = sbr.rel (%p459) target = $region28
      $region27: #{conv_denoiser_forward.1} parent=11 // pred_region
        _
      $region28: #{conv_denoiser_forward.1} parent=11 // pred_fallthru
        _
      // Predicated region
      $region29: #{conv_denoiser_forward.1} parent=11 // pred_check
        %p462 = pneg %p157
      $region30: #{conv_denoiser_forward.1} parent=11 // pred_check_branch
        %464 = sbr.rel (%p462) target = $region32
      $region31: #{conv_denoiser_forward.1} parent=11 // pred_region
        _
      $region32: #{conv_denoiser_forward.1} parent=11 // pred_fallthru
        _
      // Predicated region
      $region33: #{conv_denoiser_forward.1} parent=11 // pred_check
        %p465 = pneg %p178
      $region34: #{conv_denoiser_forward.1} parent=11 // pred_check_branch
        %467 = sbr.rel (%p465) target = $region36
      $region35: #{conv_denoiser_forward.1} parent=11 // pred_region
        _
      $region36: #{conv_denoiser_forward.1} parent=11 // pred_fallthru
        _
      // Predicated region
      $region37: #{conv_denoiser_forward.1} parent=11 // pred_check
        %p468 = pneg %p199
      $region38: #{conv_denoiser_forward.1} parent=11 // pred_check_branch
        %470 = sbr.rel (%p468) target = $region40
      $region39: #{conv_denoiser_forward.1} parent=11 // pred_region
        _
      $region40: #{conv_denoiser_forward.1} parent=11 // pred_fallthru
        _
      // Predicated region
      $region41: #{conv_denoiser_forward.1} parent=11 // pred_check
        %p471 = pneg %p220
      $region42: #{conv_denoiser_forward.1} parent=11 // pred_check_branch
        %473 = sbr.rel (%p471) target = $region44
      $region43: #{conv_denoiser_forward.1} parent=11 // pred_region
        _
      $region44: #{conv_denoiser_forward.1} parent=11 // pred_fallthru
        _
      // Predicated region
      $region45: #{conv_denoiser_forward.1} parent=11 // pred_check
        %p474 = pneg %p241
      $region46: #{conv_denoiser_forward.1} parent=11 // pred_check_branch
        %476 = sbr.rel (%p474) target = $region48
      $region47: #{conv_denoiser_forward.1} parent=11 // pred_region
        _
      $region48: #{conv_denoiser_forward.1} parent=11 // pred_fallthru
        _
      // Predicated region
      $region49: #{conv_denoiser_forward.1} parent=11 // pred_check
        %p477 = pneg %p262
      $region50: #{conv_denoiser_forward.1} parent=11 // pred_check_branch
        %479 = sbr.rel (%p477) target = $region52
      $region51: #{conv_denoiser_forward.1} parent=11 // pred_region
        _
      $region52: #{conv_denoiser_forward.1} parent=11 // pred_fallthru
        _
      // Predicated region
      $region53: #{conv_denoiser_forward.1} parent=11 // pred_check
        %p480 = pneg %p283
      $region54: #{conv_denoiser_forward.1} parent=11 // pred_check_branch
        %482 = sbr.rel (%p480) target = $region56
      $region55: #{conv_denoiser_forward.1} parent=11 // pred_region
        _
      $region56: #{conv_denoiser_forward.1} parent=11 // pred_fallthru
        _
      // Predicated region
      $region57: #{conv_denoiser_forward.1} parent=11 // pred_check
        %p483 = pneg %p304
      $region58: #{conv_denoiser_forward.1} parent=11 // pred_check_branch
        %485 = sbr.rel (%p483) target = $region60
      $region59: #{conv_denoiser_forward.1} parent=11 // pred_region
        _
      $region60: #{conv_denoiser_forward.1} parent=11 // pred_fallthru
        _
      // Predicated region
      $region61: #{conv_denoiser_forward.1} parent=11 // pred_check
        %p486 = pneg %p325
      $region62: #{conv_denoiser_forward.1} parent=11 // pred_check_branch
        %488 = sbr.rel (%p486) target = $region64
      $region63: #{conv_denoiser_forward.1} parent=11 // pred_region
        _
      $region64: #{conv_denoiser_forward.1} parent=11 // pred_fallthru
        _
      // Predicated region
      $region65: #{conv_denoiser_forward.1} parent=11 // pred_check
        %p489 = pneg %p346
      $region66: #{conv_denoiser_forward.1} parent=11 // pred_check_branch
        %491 = sbr.rel (%p489) target = $region68
      $region67: #{conv_denoiser_forward.1} parent=11 // pred_region
        _
      $region68: #{conv_denoiser_forward.1} parent=11 // pred_fallthru
        _
      // Predicated region
      $region69: #{conv_denoiser_forward.1} parent=11 // pred_check
        %p492 = pneg %p367
      $region70: #{conv_denoiser_forward.1} parent=11 // pred_check_branch
        %494 = sbr.rel (%p492) target = $region72
      $region71: #{conv_denoiser_forward.1} parent=11 // pred_region
        _
      $region72: #{conv_denoiser_forward.1} parent=11 // pred_fallthru
        _
      // Predicated region
      $region73: #{conv_denoiser_forward.1} parent=11 // pred_check
        %p495 = pneg %p388
      $region74: #{conv_denoiser_forward.1} parent=11 // pred_check_branch
        %497 = sbr.rel (%p495) target = $region76
      $region75: #{conv_denoiser_forward.1} parent=11 // pred_region
        _
      $region76: #{conv_denoiser_forward.1} parent=11 // pred_fallthru
        _
      // Predicated region
      $region77: #{conv_denoiser_forward.1} parent=11 // pred_check
        %p498 = pneg %p409
      $region78: #{conv_denoiser_forward.1} parent=11 // pred_check_branch
        %500 = sbr.rel (%p498) target = $region80
      $region79: #{conv_denoiser_forward.1} parent=11 // pred_region
        _
      $region80: #{conv_denoiser_forward.1} parent=11 // pred_fallthru
        _
    $region12: #{conv_denoiser_forward.1} parent=5 // pred_fallthru
      _
    %p501 = scmp.lt.s32.totalorder %s26, 2
    // Predicated region
    $region81: #{conv_denoiser_forward.1} parent=5 // pred_check
      %p502 = pneg %p501
    $region82: #{conv_denoiser_forward.1} parent=5 // pred_check_branch
      %504 = sbr.rel (%p502) target = $region84
    $region83: #{conv_denoiser_forward.1} parent=5 // pred_region
      // Predicated region
      $region85: #{conv_denoiser_forward.1} parent=83 // pred_check
        %p505 = pneg %p46
      $region86: #{conv_denoiser_forward.1} parent=83 // pred_check_branch
        %507 = sbr.rel (%p505) target = $region88
      $region87: #{conv_denoiser_forward.1} parent=83 // pred_region
        %p508 = scmp.lt.s32.totalorder %s26, 1
        %s509 = scalar_select %p508, %s26, 1
        %s510 = smul.addr %s509, 2
        %s511 = scalar_lea.vmem %s0, %s510
      $region88: #{conv_denoiser_forward.1} parent=83 // pred_fallthru
        _
    $region84: #{conv_denoiser_forward.1} parent=5 // pred_fallthru
      _
    %p512 = scmp.le.s32.totalorder 1, %s26
    %p513 = scmp.lt.s32.totalorder %s26, 3
    %p514 = pnand %p512, %p513
    %p515 = pneg %p514
    // Predicated region
    $region89: #{conv_denoiser_forward.1} parent=5 // pred_check
      _
    $region90: #{conv_denoiser_forward.1} parent=5 // pred_check_branch
      %517 = sbr.rel (%p514) target = $region92
    $region91: #{conv_denoiser_forward.1} parent=5 // pred_region
      %s518 = ssub.s32 %s26, 1
      %p519 = scmp.lt.s32.totalorder %s31, 1
      %s520 = scalar_select %p519, %s31, 1
      %s521 = smul.addr %s520, 2
      %s522 = scalar_lea.vmem %s0, %s521
      %p523 = pneg %p52
      %p524 = pneg %p49
      %p525 = pneg %p73
      %p526 = pneg %p70
      %p527 = pneg %p94
      %p528 = pneg %p91
      %p529 = pneg %p115
      %p530 = pneg %p112
      %p531 = pneg %p136
      %p532 = pneg %p133
      %p533 = pneg %p157
      %p534 = pneg %p154
      %p535 = pneg %p178
      %p536 = pneg %p175
      %p537 = pneg %p199
      %p538 = pneg %p196
      %p539 = pneg %p220
      %p540 = pneg %p217
      %p541 = pneg %p241
      %p542 = pneg %p238
      %p543 = pneg %p262
      %p544 = pneg %p259
      %p545 = pneg %p283
      %p546 = pneg %p280
      %p547 = pneg %p304
      %p548 = pneg %p301
      %p549 = pneg %p325
      %p550 = pneg %p322
      %p551 = pneg %p346
      %p552 = pneg %p343
      %p553 = pneg %p367
      %p554 = pneg %p364
      %p555 = pneg %p388
      %p556 = pneg %p385
      %p557 = pneg %p409
      %p558 = pneg %p406
      %p559 = pneg %p435
      %p560 = pneg %p432
      %p561 = scmp.lt.s32.totalorder %s31, 1
      %s562 = scalar_select %p561, %s31, 1
      %s563 = smul.addr %s562, 2
      %s564 = scalar_lea.vmem %s18, %s563
      %p565 = scmp.lt.s32.totalorder %s31, 1
      %s566 = scalar_select %p565, %s31, 1
      %s567 = smul.addr %s566, 2
      %s568 = scalar_lea.vmem %s0, %s567
      %p569 = scmp.lt.s32.totalorder %s31, 1
      %s570 = scalar_select %p569, %s31, 1
      %s571 = smul.addr %s570, 2
      %s572 = scalar_lea.vmem %s18, %s571
      %v573 = vld [vmem:[%s568] sm:$0x3]
      %v574 = vld [vmem:[%s1] sm:$0xff]
      %v575 = vld [vmem:[%s1 + $0x8] sm:$0xff]
      %v576 = vld [vmem:[%s1 + $0x10] sm:$0xff]
      %v577 = vld [vmem:[%s1 + $0x18] sm:$0xff]
      %v578 = vld [vmem:[%s3] sm:$0x3]
      %v580 = vlaneseq
      %v581 = vshrl.u32 %v580, 7
      %v582 = vsub.s32 0, %v581
      %v583 = vrot.slane %v573, %v582
      %v584 = vlaneseq
      %v585 = vshrl.u32 %v584, 7
      %v586 = vsub.s32 1, %v585
      %v587 = vrot.slane %v573, %v586
      %590 = vrot.lane.b32.xlu0 %v583, 17
      %v591 = vpop.permute.xlu0 %590
      %592 = vrot.lane.b32.xlu0 %v587, 17
      %v593 = vpop.permute.xlu0 %592
      %v594 = vlaneseq
      %v595 = vand.u32 %v594, 127
      %vm596 = vcmp.lt.s32.totalorder %v595, 17
      %v597 = vsel %vm596, %v591, %v593
      %v598 = vsel %vm596, %v593, %v591
      %v601 = vcombine.low %v598, %v597
      %v603 = vunpack.c.l.s4 1966171168
      %v604 = vunpack.c.0.s8 %v603
      %v605 = vlaneseq
      %v606 = vshrl.u32 %v605, 7
      %v607 = vsub.s32 %v604, %v606
      %v608 = vrot.slane %v601, %v607
      %v610 = vunpack.c.l.s4 1966171168
      %v611 = vunpack.c.0.s8 %v610
      %v612 = vlaneseq
      %v613 = vshrl.u32 %v612, 7
      %v614 = vsub.s32 %v611, %v613
      %v615 = vrot.slane %v608, %v614
      %v617 = vmul.f32 %v578, %v615
      %619 = vset.pattern.permute.xlu0 0
      %620 = vperm.xlu0 %619, %v574
      %v621 = vpop.permute.xlu0 %620
      %624 = vset.pattern.permute.xlu0 0
      %625 = vperm.xlu0 %624, %v575
      %v626 = vpop.permute.xlu0 %625
      %629 = vset.pattern.permute.xlu0 0
      %630 = vperm.xlu0 %629, %v576
      %v631 = vpop.permute.xlu0 %630
      %634 = vset.pattern.permute.xlu0 0
      %635 = vperm.xlu0 %634, %v577
      %v636 = vpop.permute.xlu0 %635
      %v639 = vlaneseq
      %v640 = vshrl.u32 %v639, 7
      %v641 = vsub.s32 0, %v640
      %v642 = vrot.slane %v617, %v641
      %v643 = vlaneseq
      %v644 = vshrl.u32 %v643, 7
      %v645 = vsub.s32 1, %v644
      %v646 = vrot.slane %v617, %v645
      %v649 = vmul.f32 %v621, %v642
      %v650 = vmul.f32 %v621, %v646
      %v651 = vmul.f32 %v626, %v642
      %v652 = vmul.f32 %v626, %v646
      %v653 = vmul.f32 %v631, %v642
      %v654 = vmul.f32 %v631, %v646
      %v655 = vmul.f32 %v636, %v642
      %v656 = vmul.f32 %v636, %v646
      %s657 = scalar_lea.vmem %s1, 32
      %v658 = vld [vmem:[%s657] sm:$0xff]
      %v659 = vld [vmem:[%s657 + $0x8] sm:$0xff]
      %v660 = vld [vmem:[%s657 + $0x10] sm:$0xff]
      %v661 = vld [vmem:[%s657 + $0x18] sm:$0xff]
      %s662 = scalar_lea.vmem %s3, 2
      %v663 = vld [vmem:[%s662] sm:$0x3]
      %664 = vrot.lane.b32.xlu0 %v583, 16
      %v665 = vpop.permute.xlu0 %664
      %666 = vrot.lane.b32.xlu0 %v587, 16
      %v667 = vpop.permute.xlu0 %666
      %vm668 = vcmp.lt.s32.totalorder %v595, 16
      %v669 = vsel %vm668, %v665, %v667
      %v670 = vsel %vm668, %v667, %v665
      %v673 = vcombine.low %v670, %v669
      %v675 = vunpack.c.l.s4 1966171168
      %v676 = vunpack.c.0.s8 %v675
      %v677 = vlaneseq
      %v678 = vshrl.u32 %v677, 7
      %v679 = vsub.s32 %v676, %v678
      %v680 = vrot.slane %v673, %v679
      %v682 = vunpack.c.l.s4 1966171168
      %v683 = vunpack.c.0.s8 %v682
      %v684 = vlaneseq
      %v685 = vshrl.u32 %v684, 7
      %v686 = vsub.s32 %v683, %v685
      %v687 = vrot.slane %v680, %v686
      %v689 = vmul.f32 %v663, %v687
      %691 = vset.pattern.permute.xlu0 0
      %692 = vperm.xlu0 %691, %v658
      %v693 = vpop.permute.xlu0 %692
      %696 = vset.pattern.permute.xlu0 0
      %697 = vperm.xlu0 %696, %v659
      %v698 = vpop.permute.xlu0 %697
      %701 = vset.pattern.permute.xlu0 0
      %702 = vperm.xlu0 %701, %v660
      %v703 = vpop.permute.xlu0 %702
      %706 = vset.pattern.permute.xlu0 0
      %707 = vperm.xlu0 %706, %v661
      %v708 = vpop.permute.xlu0 %707
      %v711 = vlaneseq
      %v712 = vshrl.u32 %v711, 7
      %v713 = vsub.s32 0, %v712
      %v714 = vrot.slane %v689, %v713
      %v715 = vlaneseq
      %v716 = vshrl.u32 %v715, 7
      %v717 = vsub.s32 1, %v716
      %v718 = vrot.slane %v689, %v717
      %v721 = vmul.f32 %v693, %v714
      %v722 = vmul.f32 %v693, %v718
      %v723 = vmul.f32 %v698, %v714
      %v724 = vmul.f32 %v698, %v718
      %v725 = vmul.f32 %v703, %v714
      %v726 = vmul.f32 %v703, %v718
      %v727 = vmul.f32 %v708, %v714
      %v728 = vmul.f32 %v708, %v718
      %v729 = vadd.f32 %v649, %v721
      %v730 = vadd.f32 %v650, %v722
      %v731 = vadd.f32 %v651, %v723
      %v732 = vadd.f32 %v652, %v724
      %v733 = vadd.f32 %v653, %v725
      %v734 = vadd.f32 %v654, %v726
      %v735 = vadd.f32 %v655, %v727
      %v736 = vadd.f32 %v656, %v728
      %s737 = scalar_lea.vmem %s1, 64
      %v738 = vld [vmem:[%s737] sm:$0xff]
      %v739 = vld [vmem:[%s737 + $0x8] sm:$0xff]
      %v740 = vld [vmem:[%s737 + $0x10] sm:$0xff]
      %v741 = vld [vmem:[%s737 + $0x18] sm:$0xff]
      %s742 = scalar_lea.vmem %s3, 4
      %v743 = vld [vmem:[%s742] sm:$0x3]
      %744 = vrot.lane.b32.xlu0 %v583, 15
      %v745 = vpop.permute.xlu0 %744
      %746 = vrot.lane.b32.xlu0 %v587, 15
      %v747 = vpop.permute.xlu0 %746
      %vm748 = vcmp.lt.s32.totalorder %v595, 15
      %v749 = vsel %vm748, %v745, %v747
      %v750 = vsel %vm748, %v747, %v745
      %v753 = vcombine.low %v750, %v749
      %v755 = vunpack.c.l.s4 1966171168
      %v756 = vunpack.c.0.s8 %v755
      %v757 = vlaneseq
      %v758 = vshrl.u32 %v757, 7
      %v759 = vsub.s32 %v756, %v758
      %v760 = vrot.slane %v753, %v759
      %v762 = vunpack.c.l.s4 1966171168
      %v763 = vunpack.c.0.s8 %v762
      %v764 = vlaneseq
      %v765 = vshrl.u32 %v764, 7
      %v766 = vsub.s32 %v763, %v765
      %v767 = vrot.slane %v760, %v766
      %v769 = vmul.f32 %v743, %v767
      %771 = vset.pattern.permute.xlu0 0
      %772 = vperm.xlu0 %771, %v738
      %v773 = vpop.permute.xlu0 %772
      %776 = vset.pattern.permute.xlu0 0
      %777 = vperm.xlu0 %776, %v739
      %v778 = vpop.permute.xlu0 %777
      %781 = vset.pattern.permute.xlu0 0
      %782 = vperm.xlu0 %781, %v740
      %v783 = vpop.permute.xlu0 %782
      %786 = vset.pattern.permute.xlu0 0
      %787 = vperm.xlu0 %786, %v741
      %v788 = vpop.permute.xlu0 %787
      %v791 = vlaneseq
      %v792 = vshrl.u32 %v791, 7
      %v793 = vsub.s32 0, %v792
      %v794 = vrot.slane %v769, %v793
      %v795 = vlaneseq
      %v796 = vshrl.u32 %v795, 7
      %v797 = vsub.s32 1, %v796
      %v798 = vrot.slane %v769, %v797
      %v801 = vmul.f32 %v773, %v794
      %v802 = vmul.f32 %v773, %v798
      %v803 = vmul.f32 %v778, %v794
      %v804 = vmul.f32 %v778, %v798
      %v805 = vmul.f32 %v783, %v794
      %v806 = vmul.f32 %v783, %v798
      %v807 = vmul.f32 %v788, %v794
      %v808 = vmul.f32 %v788, %v798
      %v809 = vadd.f32 %v729, %v801
      %v810 = vadd.f32 %v730, %v802
      %v811 = vadd.f32 %v731, %v803
      %v812 = vadd.f32 %v732, %v804
      %v813 = vadd.f32 %v733, %v805
      %v814 = vadd.f32 %v734, %v806
      %v815 = vadd.f32 %v735, %v807
      %v816 = vadd.f32 %v736, %v808
      %s817 = scalar_lea.vmem %s1, 96
      %v818 = vld [vmem:[%s817] sm:$0xff]
      %v819 = vld [vmem:[%s817 + $0x8] sm:$0xff]
      %v820 = vld [vmem:[%s817 + $0x10] sm:$0xff]
      %v821 = vld [vmem:[%s817 + $0x18] sm:$0xff]
      %s822 = scalar_lea.vmem %s3, 6
      %v823 = vld [vmem:[%s822] sm:$0x3]
      %824 = vrot.lane.b32.xlu0 %v583, 1
      %v825 = vpop.permute.xlu0 %824
      %826 = vrot.lane.b32.xlu0 %v587, 1
      %v827 = vpop.permute.xlu0 %826
      %vm828 = vcmp.lt.s32.totalorder %v595, 1
      %v829 = vsel %vm828, %v825, %v827
      %v830 = vsel %vm828, %v827, %v825
      %v833 = vcombine.low %v830, %v829
      %v835 = vunpack.c.l.s4 1966171168
      %v836 = vunpack.c.0.s8 %v835
      %v837 = vlaneseq
      %v838 = vshrl.u32 %v837, 7
      %v839 = vsub.s32 %v836, %v838
      %v840 = vrot.slane %v833, %v839
      %v842 = vunpack.c.l.s4 1966171168
      %v843 = vunpack.c.0.s8 %v842
      %v844 = vlaneseq
      %v845 = vshrl.u32 %v844, 7
      %v846 = vsub.s32 %v843, %v845
      %v847 = vrot.slane %v840, %v846
      %v849 = vmul.f32 %v823, %v847
      %851 = vset.pattern.permute.xlu0 0
      %852 = vperm.xlu0 %851, %v818
      %v853 = vpop.permute.xlu0 %852
      %856 = vset.pattern.permute.xlu0 0
      %857 = vperm.xlu0 %856, %v819
      %v858 = vpop.permute.xlu0 %857
      %861 = vset.pattern.permute.xlu0 0
      %862 = vperm.xlu0 %861, %v820
      %v863 = vpop.permute.xlu0 %862
      %866 = vset.pattern.permute.xlu0 0
      %867 = vperm.xlu0 %866, %v821
      %v868 = vpop.permute.xlu0 %867
      %v871 = vlaneseq
      %v872 = vshrl.u32 %v871, 7
      %v873 = vsub.s32 0, %v872
      %v874 = vrot.slane %v849, %v873
      %v875 = vlaneseq
      %v876 = vshrl.u32 %v875, 7
      %v877 = vsub.s32 1, %v876
      %v878 = vrot.slane %v849, %v877
      %v881 = vmul.f32 %v853, %v874
      %v882 = vmul.f32 %v853, %v878
      %v883 = vmul.f32 %v858, %v874
      %v884 = vmul.f32 %v858, %v878
      %v885 = vmul.f32 %v863, %v874
      %v886 = vmul.f32 %v863, %v878
      %v887 = vmul.f32 %v868, %v874
      %v888 = vmul.f32 %v868, %v878
      %v889 = vadd.f32 %v809, %v881
      %v890 = vadd.f32 %v810, %v882
      %v891 = vadd.f32 %v811, %v883
      %v892 = vadd.f32 %v812, %v884
      %v893 = vadd.f32 %v813, %v885
      %v894 = vadd.f32 %v814, %v886
      %v895 = vadd.f32 %v815, %v887
      %v896 = vadd.f32 %v816, %v888
      %s897 = scalar_lea.vmem %s1, 128
      %v898 = vld [vmem:[%s897] sm:$0xff]
      %v899 = vld [vmem:[%s897 + $0x8] sm:$0xff]
      %v900 = vld [vmem:[%s897 + $0x10] sm:$0xff]
      %v901 = vld [vmem:[%s897 + $0x18] sm:$0xff]
      %s902 = scalar_lea.vmem %s3, 8
      %v903 = vld [vmem:[%s902] sm:$0x3]
      %v904 = vmul.f32 %v903, %v573
      %906 = vset.pattern.permute.xlu0 0
      %907 = vperm.xlu0 %906, %v898
      %v908 = vpop.permute.xlu0 %907
      %911 = vset.pattern.permute.xlu0 0
      %912 = vperm.xlu0 %911, %v899
      %v913 = vpop.permute.xlu0 %912
      %916 = vset.pattern.permute.xlu0 0
      %917 = vperm.xlu0 %916, %v900
      %v918 = vpop.permute.xlu0 %917
      %921 = vset.pattern.permute.xlu0 0
      %922 = vperm.xlu0 %921, %v901
      %v923 = vpop.permute.xlu0 %922
      %v926 = vlaneseq
      %v927 = vshrl.u32 %v926, 7
      %v928 = vsub.s32 0, %v927
      %v929 = vrot.slane %v904, %v928
      %v930 = vlaneseq
      %v931 = vshrl.u32 %v930, 7
      %v932 = vsub.s32 1, %v931
      %v933 = vrot.slane %v904, %v932
      %v936 = vmul.f32 %v908, %v929
      %v937 = vmul.f32 %v908, %v933
      %v938 = vmul.f32 %v913, %v929
      %v939 = vmul.f32 %v913, %v933
      %v940 = vmul.f32 %v918, %v929
      %v941 = vmul.f32 %v918, %v933
      %v942 = vmul.f32 %v923, %v929
      %v943 = vmul.f32 %v923, %v933
      %v944 = vadd.f32 %v889, %v936
      %v945 = vadd.f32 %v890, %v937
      %v946 = vadd.f32 %v891, %v938
      %v947 = vadd.f32 %v892, %v939
      %v948 = vadd.f32 %v893, %v940
      %v949 = vadd.f32 %v894, %v941
      %v950 = vadd.f32 %v895, %v942
      %v951 = vadd.f32 %v896, %v943
      %s952 = scalar_lea.vmem %s1, 160
      %v953 = vld [vmem:[%s952] sm:$0xff]
      %v954 = vld [vmem:[%s952 + $0x8] sm:$0xff]
      %v955 = vld [vmem:[%s952 + $0x10] sm:$0xff]
      %v956 = vld [vmem:[%s952 + $0x18] sm:$0xff]
      %s957 = scalar_lea.vmem %s3, 10
      %v958 = vld [vmem:[%s957] sm:$0x3]
      %959 = vrot.lane.b32.xlu0 %v583, 127
      %v960 = vpop.permute.xlu0 %959
      %961 = vrot.lane.b32.xlu0 %v587, 127
      %v962 = vpop.permute.xlu0 %961
      %vm963 = vcmp.lt.s32.totalorder %v595, 127
      %v964 = vsel %vm963, %v960, %v962
      %v965 = vsel %vm963, %v962, %v960
      %v968 = vcombine.low %v964, %v965
      %v970 = vunpack.c.l.s4 1966171168
      %v971 = vunpack.c.0.s8 %v970
      %v972 = vlaneseq
      %v973 = vshrl.u32 %v972, 7
      %v974 = vsub.s32 %v971, %v973
      %v975 = vrot.slane %v968, %v974
      %v977 = vunpack.c.l.s4 1966171168
      %v978 = vunpack.c.0.s8 %v977
      %v979 = vlaneseq
      %v980 = vshrl.u32 %v979, 7
      %v981 = vsub.s32 %v978, %v980
      %v982 = vrot.slane %v975, %v981
      %v984 = vmul.f32 %v958, %v982
      %986 = vset.pattern.permute.xlu0 0
      %987 = vperm.xlu0 %986, %v953
      %v988 = vpop.permute.xlu0 %987
      %991 = vset.pattern.permute.xlu0 0
      %992 = vperm.xlu0 %991, %v954
      %v993 = vpop.permute.xlu0 %992
      %996 = vset.pattern.permute.xlu0 0
      %997 = vperm.xlu0 %996, %v955
      %v998 = vpop.permute.xlu0 %997
      %1001 = vset.pattern.permute.xlu0 0
      %1002 = vperm.xlu0 %1001, %v956
      %v1003 = vpop.permute.xlu0 %1002
      %v1006 = vlaneseq
      %v1007 = vshrl.u32 %v1006, 7
      %v1008 = vsub.s32 0, %v1007
      %v1009 = vrot.slane %v984, %v1008
      %v1010 = vlaneseq
      %v1011 = vshrl.u32 %v1010, 7
      %v1012 = vsub.s32 1, %v1011
      %v1013 = vrot.slane %v984, %v1012
      %v1016 = vmul.f32 %v988, %v1009
      %v1017 = vmul.f32 %v988, %v1013
      %v1018 = vmul.f32 %v993, %v1009
      %v1019 = vmul.f32 %v993, %v1013
      %v1020 = vmul.f32 %v998, %v1009
      %v1021 = vmul.f32 %v998, %v1013
      %v1022 = vmul.f32 %v1003, %v1009
      %v1023 = vmul.f32 %v1003, %v1013
      %v1024 = vadd.f32 %v944, %v1016
      %v1025 = vadd.f32 %v945, %v1017
      %v1026 = vadd.f32 %v946, %v1018
      %v1027 = vadd.f32 %v947, %v1019
      %v1028 = vadd.f32 %v948, %v1020
      %v1029 = vadd.f32 %v949, %v1021
      %v1030 = vadd.f32 %v950, %v1022
      %v1031 = vadd.f32 %v951, %v1023
      %s1032 = scalar_lea.vmem %s1, 192
      %v1033 = vld [vmem:[%s1032] sm:$0xff]
      %v1034 = vld [vmem:[%s1032 + $0x8] sm:$0xff]
      %v1035 = vld [vmem:[%s1032 + $0x10] sm:$0xff]
      %v1036 = vld [vmem:[%s1032 + $0x18] sm:$0xff]
      %s1037 = scalar_lea.vmem %s3, 12
      %v1038 = vld [vmem:[%s1037] sm:$0x3]
      %1039 = vrot.lane.b32.xlu0 %v583, 113
      %v1040 = vpop.permute.xlu0 %1039
      %1041 = vrot.lane.b32.xlu0 %v587, 113
      %v1042 = vpop.permute.xlu0 %1041
      %vm1043 = vcmp.lt.s32.totalorder %v595, 113
      %v1044 = vsel %vm1043, %v1040, %v1042
      %v1045 = vsel %vm1043, %v1042, %v1040
      %v1048 = vcombine.low %v1044, %v1045
      %v1050 = vunpack.c.l.s4 1966171168
      %v1051 = vunpack.c.0.s8 %v1050
      %v1052 = vlaneseq
      %v1053 = vshrl.u32 %v1052, 7
      %v1054 = vsub.s32 %v1051, %v1053
      %v1055 = vrot.slane %v1048, %v1054
      %v1057 = vunpack.c.l.s4 1966171168
      %v1058 = vunpack.c.0.s8 %v1057
      %v1059 = vlaneseq
      %v1060 = vshrl.u32 %v1059, 7
      %v1061 = vsub.s32 %v1058, %v1060
      %v1062 = vrot.slane %v1055, %v1061
      %v1064 = vmul.f32 %v1038, %v1062
      %1066 = vset.pattern.permute.xlu0 0
      %1067 = vperm.xlu0 %1066, %v1033
      %v1068 = vpop.permute.xlu0 %1067
      %1071 = vset.pattern.permute.xlu0 0
      %1072 = vperm.xlu0 %1071, %v1034
      %v1073 = vpop.permute.xlu0 %1072
      %1076 = vset.pattern.permute.xlu0 0
      %1077 = vperm.xlu0 %1076, %v1035
      %v1078 = vpop.permute.xlu0 %1077
      %1081 = vset.pattern.permute.xlu0 0
      %1082 = vperm.xlu0 %1081, %v1036
      %v1083 = vpop.permute.xlu0 %1082
      %v1086 = vlaneseq
      %v1087 = vshrl.u32 %v1086, 7
      %v1088 = vsub.s32 0, %v1087
      %v1089 = vrot.slane %v1064, %v1088
      %v1090 = vlaneseq
      %v1091 = vshrl.u32 %v1090, 7
      %v1092 = vsub.s32 1, %v1091
      %v1093 = vrot.slane %v1064, %v1092
      %v1096 = vmul.f32 %v1068, %v1089
      %v1097 = vmul.f32 %v1068, %v1093
      %v1098 = vmul.f32 %v1073, %v1089
      %v1099 = vmul.f32 %v1073, %v1093
      %v1100 = vmul.f32 %v1078, %v1089
      %v1101 = vmul.f32 %v1078, %v1093
      %v1102 = vmul.f32 %v1083, %v1089
      %v1103 = vmul.f32 %v1083, %v1093
      %v1104 = vadd.f32 %v1024, %v1096
      %v1105 = vadd.f32 %v1025, %v1097
      %v1106 = vadd.f32 %v1026, %v1098
      %v1107 = vadd.f32 %v1027, %v1099
      %v1108 = vadd.f32 %v1028, %v1100
      %v1109 = vadd.f32 %v1029, %v1101
      %v1110 = vadd.f32 %v1030, %v1102
      %v1111 = vadd.f32 %v1031, %v1103
      %s1112 = scalar_lea.vmem %s1, 224
      %v1113 = vld [vmem:[%s1112] sm:$0xff]
      %v1114 = vld [vmem:[%s1112 + $0x8] sm:$0xff]
      %v1115 = vld [vmem:[%s1112 + $0x10] sm:$0xff]
      %v1116 = vld [vmem:[%s1112 + $0x18] sm:$0xff]
      %s1117 = scalar_lea.vmem %s3, 14
      %v1118 = vld [vmem:[%s1117] sm:$0x3]
      %1119 = vrot.lane.b32.xlu0 %v583, 112
      %v1120 = vpop.permute.xlu0 %1119
      %1121 = vrot.lane.b32.xlu0 %v587, 112
      %v1122 = vpop.permute.xlu0 %1121
      %vm1123 = vcmp.lt.s32.totalorder %v595, 112
      %v1124 = vsel %vm1123, %v1120, %v1122
      %v1125 = vsel %vm1123, %v1122, %v1120
      %v1128 = vcombine.low %v1124, %v1125
      %v1130 = vunpack.c.l.s4 1966171168
      %v1131 = vunpack.c.0.s8 %v1130
      %v1132 = vlaneseq
      %v1133 = vshrl.u32 %v1132, 7
      %v1134 = vsub.s32 %v1131, %v1133
      %v1135 = vrot.slane %v1128, %v1134
      %v1137 = vunpack.c.l.s4 1966171168
      %v1138 = vunpack.c.0.s8 %v1137
      %v1139 = vlaneseq
      %v1140 = vshrl.u32 %v1139, 7
      %v1141 = vsub.s32 %v1138, %v1140
      %v1142 = vrot.slane %v1135, %v1141
      %v1144 = vmul.f32 %v1118, %v1142
      %1146 = vset.pattern.permute.xlu0 0
      %1147 = vperm.xlu0 %1146, %v1113
      %v1148 = vpop.permute.xlu0 %1147
      %1151 = vset.pattern.permute.xlu0 0
      %1152 = vperm.xlu0 %1151, %v1114
      %v1153 = vpop.permute.xlu0 %1152
      %1156 = vset.pattern.permute.xlu0 0
      %1157 = vperm.xlu0 %1156, %v1115
      %v1158 = vpop.permute.xlu0 %1157
      %1161 = vset.pattern.permute.xlu0 0
      %1162 = vperm.xlu0 %1161, %v1116
      %v1163 = vpop.permute.xlu0 %1162
      %v1166 = vlaneseq
      %v1167 = vshrl.u32 %v1166, 7
      %v1168 = vsub.s32 0, %v1167
      %v1169 = vrot.slane %v1144, %v1168
      %v1170 = vlaneseq
      %v1171 = vshrl.u32 %v1170, 7
      %v1172 = vsub.s32 1, %v1171
      %v1173 = vrot.slane %v1144, %v1172
      %v1176 = vmul.f32 %v1148, %v1169
      %v1177 = vmul.f32 %v1148, %v1173
      %v1178 = vmul.f32 %v1153, %v1169
      %v1179 = vmul.f32 %v1153, %v1173
      %v1180 = vmul.f32 %v1158, %v1169
      %v1181 = vmul.f32 %v1158, %v1173
      %v1182 = vmul.f32 %v1163, %v1169
      %v1183 = vmul.f32 %v1163, %v1173
      %v1184 = vadd.f32 %v1104, %v1176
      %v1185 = vadd.f32 %v1105, %v1177
      %v1186 = vadd.f32 %v1106, %v1178
      %v1187 = vadd.f32 %v1107, %v1179
      %v1188 = vadd.f32 %v1108, %v1180
      %v1189 = vadd.f32 %v1109, %v1181
      %v1190 = vadd.f32 %v1110, %v1182
      %v1191 = vadd.f32 %v1111, %v1183
      %s1192 = scalar_lea.vmem %s1, 256
      %v1193 = vld [vmem:[%s1192] sm:$0xff]
      %v1194 = vld [vmem:[%s1192 + $0x8] sm:$0xff]
      %v1195 = vld [vmem:[%s1192 + $0x10] sm:$0xff]
      %v1196 = vld [vmem:[%s1192 + $0x18] sm:$0xff]
      %s1197 = scalar_lea.vmem %s3, 16
      %v1198 = vld [vmem:[%s1197] sm:$0x3]
      %1199 = vrot.lane.b32.xlu0 %v583, 111
      %v1200 = vpop.permute.xlu0 %1199
      %1201 = vrot.lane.b32.xlu0 %v587, 111
      %v1202 = vpop.permute.xlu0 %1201
      %vm1203 = vcmp.lt.s32.totalorder %v595, 111
      %v1204 = vsel %vm1203, %v1200, %v1202
      %v1205 = vsel %vm1203, %v1202, %v1200
      %v1208 = vcombine.low %v1204, %v1205
      %v1210 = vunpack.c.l.s4 1966171168
      %v1211 = vunpack.c.0.s8 %v1210
      %v1212 = vlaneseq
      %v1213 = vshrl.u32 %v1212, 7
      %v1214 = vsub.s32 %v1211, %v1213
      %v1215 = vrot.slane %v1208, %v1214
      %v1217 = vunpack.c.l.s4 1966171168
      %v1218 = vunpack.c.0.s8 %v1217
      %v1219 = vlaneseq
      %v1220 = vshrl.u32 %v1219, 7
      %v1221 = vsub.s32 %v1218, %v1220
      %v1222 = vrot.slane %v1215, %v1221
      %v1224 = vmul.f32 %v1198, %v1222
      %1226 = vset.pattern.permute.xlu0 0
      %1227 = vperm.xlu0 %1226, %v1193
      %v1228 = vpop.permute.xlu0 %1227
      %1231 = vset.pattern.permute.xlu0 0
      %1232 = vperm.xlu0 %1231, %v1194
      %v1233 = vpop.permute.xlu0 %1232
      %1236 = vset.pattern.permute.xlu0 0
      %1237 = vperm.xlu0 %1236, %v1195
      %v1238 = vpop.permute.xlu0 %1237
      %1241 = vset.pattern.permute.xlu0 0
      %1242 = vperm.xlu0 %1241, %v1196
      %v1243 = vpop.permute.xlu0 %1242
      %v1246 = vlaneseq
      %v1247 = vshrl.u32 %v1246, 7
      %v1248 = vsub.s32 0, %v1247
      %v1249 = vrot.slane %v1224, %v1248
      %v1250 = vlaneseq
      %v1251 = vshrl.u32 %v1250, 7
      %v1252 = vsub.s32 1, %v1251
      %v1253 = vrot.slane %v1224, %v1252
      %v1256 = vmul.f32 %v1228, %v1249
      %v1257 = vmul.f32 %v1228, %v1253
      %v1258 = vmul.f32 %v1233, %v1249
      %v1259 = vmul.f32 %v1233, %v1253
      %v1260 = vmul.f32 %v1238, %v1249
      %v1261 = vmul.f32 %v1238, %v1253
      %v1262 = vmul.f32 %v1243, %v1249
      %v1263 = vmul.f32 %v1243, %v1253
      %v1264 = vadd.f32 %v1184, %v1256
      %v1265 = vadd.f32 %v1185, %v1257
      %v1266 = vadd.f32 %v1186, %v1258
      %v1267 = vadd.f32 %v1187, %v1259
      %v1268 = vadd.f32 %v1188, %v1260
      %v1269 = vadd.f32 %v1189, %v1261
      %v1270 = vadd.f32 %v1190, %v1262
      %v1271 = vadd.f32 %v1191, %v1263
      %v1272 = vld [vmem:[%s2] sm:$0xff]
      %v1273 = vld [vmem:[%s2 + $0x8] sm:$0xff]
      %v1274 = vld [vmem:[%s2 + $0x10] sm:$0xff]
      %v1275 = vld [vmem:[%s2 + $0x18] sm:$0xff]
      %1277 = vset.pattern.permute.xlu0 0
      %1278 = vperm.xlu0 %1277, %v1272
      %v1279 = vpop.permute.xlu0 %1278
      %1282 = vset.pattern.permute.xlu0 0
      %1283 = vperm.xlu0 %1282, %v1273
      %v1284 = vpop.permute.xlu0 %1283
      %1287 = vset.pattern.permute.xlu0 0
      %1288 = vperm.xlu0 %1287, %v1274
      %v1289 = vpop.permute.xlu0 %1288
      %1292 = vset.pattern.permute.xlu0 0
      %1293 = vperm.xlu0 %1292, %v1275
      %v1294 = vpop.permute.xlu0 %1293
      %v1296 = vadd.f32 %v1264, %v1279
      %v1297 = vadd.f32 %v1265, %v1279
      %v1298 = vadd.f32 %v1266, %v1284
      %v1299 = vadd.f32 %v1267, %v1284
      %v1300 = vadd.f32 %v1268, %v1289
      %v1301 = vadd.f32 %v1269, %v1289
      %v1302 = vadd.f32 %v1270, %v1294
      %v1303 = vadd.f32 %v1271, %v1294
      %v1304 = vmax.f32 %v1296, 0.0
      %v1305 = vmax.f32 %v1297, 0.0
      %v1306 = vmax.f32 %v1298, 0.0
      %v1307 = vmax.f32 %v1299, 0.0
      %v1308 = vmax.f32 %v1300, 0.0
      %v1309 = vmax.f32 %v1301, 0.0
      %v1310 = vmax.f32 %v1302, 0.0
      %v1311 = vmax.f32 %v1303, 0.0
      %1312 = vrot.lane.b32.xlu0 %v1304, 127
      %v1313 = vpop.permute.xlu0 %1312
      %1314 = vrot.lane.b32.xlu0 %v1306, 127
      %v1315 = vpop.permute.xlu0 %1314
      %1316 = vrot.lane.b32.xlu0 %v1308, 127
      %v1317 = vpop.permute.xlu0 %1316
      %1318 = vrot.lane.b32.xlu0 %v1310, 127
      %v1319 = vpop.permute.xlu0 %1318
      %1320 = vrot.lane.b32.xlu0 %v1305, 127
      %v1321 = vpop.permute.xlu0 %1320
      %1322 = vrot.lane.b32.xlu0 %v1307, 127
      %v1323 = vpop.permute.xlu0 %1322
      %1324 = vrot.lane.b32.xlu0 %v1309, 127
      %v1325 = vpop.permute.xlu0 %1324
      %1326 = vrot.lane.b32.xlu0 %v1311, 127
      %v1327 = vpop.permute.xlu0 %1326
      %v1328 = vsel %vm963, %v1313, %v1321
      %v1329 = vsel %vm963, %v1315, %v1323
      %v1330 = vsel %vm963, %v1317, %v1325
      %v1331 = vsel %vm963, %v1319, %v1327
      %v1332 = vsel %vm963, %v1321, %v1313
      %v1333 = vsel %vm963, %v1323, %v1315
      %v1334 = vsel %vm963, %v1325, %v1317
      %v1335 = vsel %vm963, %v1327, %v1319
      %v1336 = vmax.f32 %v1304, %v1328
      %v1337 = vmax.f32 %v1305, %v1332
      %v1338 = vmax.f32 %v1306, %v1329
      %v1339 = vmax.f32 %v1307, %v1333
      %v1340 = vmax.f32 %v1308, %v1330
      %v1341 = vmax.f32 %v1309, %v1334
      %v1342 = vmax.f32 %v1310, %v1331
      %v1343 = vmax.f32 %v1311, %v1335
      %1344 = vrot.lane.b32.xlu0 %v1304, 112
      %v1345 = vpop.permute.xlu0 %1344
      %1346 = vrot.lane.b32.xlu0 %v1306, 112
      %v1347 = vpop.permute.xlu0 %1346
      %1348 = vrot.lane.b32.xlu0 %v1308, 112
      %v1349 = vpop.permute.xlu0 %1348
      %1350 = vrot.lane.b32.xlu0 %v1310, 112
      %v1351 = vpop.permute.xlu0 %1350
      %1352 = vrot.lane.b32.xlu0 %v1305, 112
      %v1353 = vpop.permute.xlu0 %1352
      %1354 = vrot.lane.b32.xlu0 %v1307, 112
      %v1355 = vpop.permute.xlu0 %1354
      %1356 = vrot.lane.b32.xlu0 %v1309, 112
      %v1357 = vpop.permute.xlu0 %1356
      %1358 = vrot.lane.b32.xlu0 %v1311, 112
      %v1359 = vpop.permute.xlu0 %1358
      %v1360 = vsel %vm1123, %v1345, %v1353
      %v1361 = vsel %vm1123, %v1347, %v1355
      %v1362 = vsel %vm1123, %v1349, %v1357
      %v1363 = vsel %vm1123, %v1351, %v1359
      %v1364 = vsel %vm1123, %v1353, %v1345
      %v1365 = vsel %vm1123, %v1355, %v1347
      %v1366 = vsel %vm1123, %v1357, %v1349
      %v1367 = vsel %vm1123, %v1359, %v1351
      %1368 = vrot.lane.b32.xlu0 %v1304, 111
      %v1369 = vpop.permute.xlu0 %1368
      %1370 = vrot.lane.b32.xlu0 %v1306, 111
      %v1371 = vpop.permute.xlu0 %1370
      %1372 = vrot.lane.b32.xlu0 %v1308, 111
      %v1373 = vpop.permute.xlu0 %1372
      %1374 = vrot.lane.b32.xlu0 %v1310, 111
      %v1375 = vpop.permute.xlu0 %1374
      %1376 = vrot.lane.b32.xlu0 %v1305, 111
      %v1377 = vpop.permute.xlu0 %1376
      %1378 = vrot.lane.b32.xlu0 %v1307, 111
      %v1379 = vpop.permute.xlu0 %1378
      %1380 = vrot.lane.b32.xlu0 %v1309, 111
      %v1381 = vpop.permute.xlu0 %1380
      %1382 = vrot.lane.b32.xlu0 %v1311, 111
      %v1383 = vpop.permute.xlu0 %1382
      %v1384 = vsel %vm1203, %v1369, %v1377
      %v1385 = vsel %vm1203, %v1371, %v1379
      %v1386 = vsel %vm1203, %v1373, %v1381
      %v1387 = vsel %vm1203, %v1375, %v1383
      %v1388 = vsel %vm1203, %v1377, %v1369
      %v1389 = vsel %vm1203, %v1379, %v1371
      %v1390 = vsel %vm1203, %v1381, %v1373
      %v1391 = vsel %vm1203, %v1383, %v1375
      %v1392 = vmax.f32 %v1360, %v1384
      %v1393 = vmax.f32 %v1364, %v1388
      %v1394 = vmax.f32 %v1361, %v1385
      %v1395 = vmax.f32 %v1365, %v1389
      %v1396 = vmax.f32 %v1362, %v1386
      %v1397 = vmax.f32 %v1366, %v1390
      %v1398 = vmax.f32 %v1363, %v1387
      %v1399 = vmax.f32 %v1367, %v1391
      %v1400 = vmax.f32 %v1336, %v1392
      %v1401 = vmax.f32 %v1337, %v1393
      %v1402 = vmax.f32 %v1338, %v1394
      %v1403 = vmax.f32 %v1339, %v1395
      %v1404 = vmax.f32 %v1340, %v1396
      %v1405 = vmax.f32 %v1341, %v1397
      %v1406 = vmax.f32 %v1342, %v1398
      %v1407 = vmax.f32 %v1343, %v1399
      %v1408 = vld [vmem:[%s4] sm:$0xff]
      %v1409 = vld [vmem:[%s4 + $0x8] sm:$0xff]
      %vm1410 = vcmask 261120
      %v1412 = vsel %vm1410, %v1408, 0
      %v1415 = vsel %vm1410, %v1409, 0
      %1417 = vmatprep.subr.mxu0 %v1401
      %1418 = vmatpush1.msra.mxu0 %v1400
      %1419 = vmatprep.subr.mxu0 %v1403
      %1420 = vmatpush1.msra.mxu0 %v1402
      %1421 = vmatprep.subr.mxu0 %v1405
      %1422 = vmatpush1.msra.mxu0 %v1404
      %1423 = vmatprep.subr.mxu0 %v1407
      %1424 = vmatpush1.msra.mxu0 %v1406
      %1425 = vmatprep.subr.mxu0 0.0
      %1426 = vmatpush1.msra.mxu0 0.0
      %1427 = vmatprep.subr.mxu0 0.0
      %1428 = vmatpush1.msra.mxu0 0.0
      %1429 = vmatprep.subr.mxu0 0.0
      %1430 = vmatpush1.msra.mxu0 0.0
      %1431 = vmatprep.subr.mxu0 0.0
      %1432 = vmatpush1.msra.mxu0 0.0
      %1433 = vmatprep.subr.mxu0 0.0
      %1434 = vmatpush1.msra.mxu0 0.0
      %1435 = vmatprep.subr.mxu0 0.0
      %1436 = vmatpush1.msra.mxu0 0.0
      %1437 = vmatprep.subr.mxu0 0.0
      %1438 = vmatpush1.msra.mxu0 0.0
      %1439 = vmatprep.subr.mxu0 0.0
      %1440 = vmatpush1.msra.mxu0 0.0
      %1441 = vmatprep.subr.mxu0 0.0
      %1442 = vmatpush1.msra.mxu0 0.0
      %1443 = vmatprep.subr.mxu0 0.0
      %1444 = vmatpush1.msra.mxu0 0.0
      %1445 = vmatprep.subr.mxu0 0.0
      %1446 = vmatpush1.msra.mxu0 0.0
      %1447 = vmatprep.subr.mxu0 0.0
      %1448 = vmatpush1.msra.mxu0 0.0
      %1449 = vmatprep.subr.mxu0 0.0
      %1450 = vmatpush1.msra.mxu0 0.0
      %1451 = vmatprep.subr.mxu0 0.0
      %1452 = vmatpush1.msra.mxu0 0.0
      %1453 = vmatprep.subr.mxu0 0.0
      %1454 = vmatpush1.msra.mxu0 0.0
      %1455 = vmatprep.subr.mxu0 0.0
      %1456 = vmatpush1.msra.mxu0 0.0
      %1457 = vmatprep.subr.mxu0 0.0
      %1458 = vmatpush1.msra.mxu0 0.0
      %1459 = vmatprep.subr.mxu0 0.0
      %1460 = vmatpush1.msra.mxu0 0.0
      %1461 = vmatprep.subr.mxu0 0.0
      %1462 = vmatpush1.msra.mxu0 0.0
      %1463 = vmatprep.subr.mxu0 0.0
      %1464 = vmatpush1.msra.mxu0 0.0
      %1465 = vmatprep.subr.mxu0 0.0
      %1466 = vmatpush1.msra.mxu0 0.0
      %1467 = vmatprep.subr.mxu0 0.0
      %1468 = vmatpush1.msra.mxu0 0.0
      %1469 = vmatprep.subr.mxu0 0.0
      %1470 = vmatpush1.msra.mxu0 0.0
      %1471 = vmatprep.subr.mxu0 0.0
      %1472 = vmatpush1.msra.mxu0 0.0
      %1473 = vmatprep.subr.mxu0 0.0
      %1474 = vmatpush1.msra.mxu0 0.0
      %1475 = vmatprep.subr.mxu0 0.0
      %1476 = vmatpush1.msra.mxu0 0.0
      %1477 = vmatprep.subr.mxu0 0.0
      %1478 = vmatpush1.msra.mxu0 0.0
      %1479 = vmatprep.subr.mxu0 0.0
      %1480 = vmatpush1.msra.mxu0 0.0
      %1481 = vmatprep.mubr.f32.mxu0 0.0
      %1482 = vmatmul.mubr.f32.gmra.mrb[0].mxu0 %v1412
      %v1483 = vpop.f32.mrb[0].mxu0
      %v1484 = vadd.f32 0.0, %v1483
      %v1485 = vpop.f32.mrb[0].mxu0
      %v1486 = vadd.f32 0.0, %v1485
      %1487 = vmatprep.mubr.f32.mxu0 0.0
      %1488 = vmatmul.mubr.f32.gmra.mrb[0].mxu0 %v1415
      %v1489 = vpop.f32.mrb[0].mxu0
      %v1490 = vadd.f32 0.0, %v1489
      %v1491 = vpop.f32.mrb[0].mxu0
      %v1492 = vadd.f32 0.0, %v1491
      %1493 = vdwg.mxu0
      %v1494 = vld [vmem:[%s6] sm:$0x3]
      %1495 = vrot.lane.b32.xlu0 %v1484, 34
      %v1496 = vpop.permute.xlu0 %1495
      %1497 = vrot.lane.b32.xlu0 %v1490, 34
      %v1498 = vpop.permute.xlu0 %1497
      %1499 = vrot.lane.b32.xlu0 %v1486, 34
      %v1500 = vpop.permute.xlu0 %1499
      %1501 = vrot.lane.b32.xlu0 %v1492, 34
      %v1502 = vpop.permute.xlu0 %1501
      %vm1503 = vcmp.lt.s32.totalorder %v595, 34
      %v1504 = vsel %vm1503, %v1496, %v1500
      %v1505 = vsel %vm1503, %v1498, %v1502
      %v1506 = vsel %vm1503, %v1500, %v1496
      %v1507 = vsel %vm1503, %v1502, %v1498
      %v1509 = vlaneseq
      %v1510 = vshrl.u32 %v1509, 7
      %v1511 = vsub.s32 0, %v1510
      %v1512 = vrot.slane %v1494, %v1511
      %v1513 = vlaneseq
      %v1514 = vshrl.u32 %v1513, 7
      %v1515 = vsub.s32 1, %v1514
      %v1516 = vrot.slane %v1494, %v1515
      %v1519 = vmul.f32 %v1512, %v1506
      %v1520 = vmul.f32 %v1516, %v1504
      %v1521 = vmul.f32 %v1512, %v1507
      %v1522 = vmul.f32 %v1516, %v1505
      %s1523 = scalar_lea.vmem %s4, 16
      %v1524 = vld [vmem:[%s1523] sm:$0xff]
      %v1525 = vld [vmem:[%s1523 + $0x8] sm:$0xff]
      %v1527 = vsel %vm1410, %v1524, 0
      %v1530 = vsel %vm1410, %v1525, 0
      %1532 = vmatprep.subr.mxu0 %v1401
      %1533 = vmatpush1.msra.mxu0 %v1400
      %1534 = vmatprep.subr.mxu0 %v1403
      %1535 = vmatpush1.msra.mxu0 %v1402
      %1536 = vmatprep.subr.mxu0 %v1405
      %1537 = vmatpush1.msra.mxu0 %v1404
      %1538 = vmatprep.subr.mxu0 %v1407
      %1539 = vmatpush1.msra.mxu0 %v1406
      %1540 = vmatprep.subr.mxu0 0.0
      %1541 = vmatpush1.msra.mxu0 0.0
      %1542 = vmatprep.subr.mxu0 0.0
      %1543 = vmatpush1.msra.mxu0 0.0
      %1544 = vmatprep.subr.mxu0 0.0
      %1545 = vmatpush1.msra.mxu0 0.0
      %1546 = vmatprep.subr.mxu0 0.0
      %1547 = vmatpush1.msra.mxu0 0.0
      %1548 = vmatprep.subr.mxu0 0.0
      %1549 = vmatpush1.msra.mxu0 0.0
      %1550 = vmatprep.subr.mxu0 0.0
      %1551 = vmatpush1.msra.mxu0 0.0
      %1552 = vmatprep.subr.mxu0 0.0
      %1553 = vmatpush1.msra.mxu0 0.0
      %1554 = vmatprep.subr.mxu0 0.0
      %1555 = vmatpush1.msra.mxu0 0.0
      %1556 = vmatprep.subr.mxu0 0.0
      %1557 = vmatpush1.msra.mxu0 0.0
      %1558 = vmatprep.subr.mxu0 0.0
      %1559 = vmatpush1.msra.mxu0 0.0
      %1560 = vmatprep.subr.mxu0 0.0
      %1561 = vmatpush1.msra.mxu0 0.0
      %1562 = vmatprep.subr.mxu0 0.0
      %1563 = vmatpush1.msra.mxu0 0.0
      %1564 = vmatprep.subr.mxu0 0.0
      %1565 = vmatpush1.msra.mxu0 0.0
      %1566 = vmatprep.subr.mxu0 0.0
      %1567 = vmatpush1.msra.mxu0 0.0
      %1568 = vmatprep.subr.mxu0 0.0
      %1569 = vmatpush1.msra.mxu0 0.0
      %1570 = vmatprep.subr.mxu0 0.0
      %1571 = vmatpush1.msra.mxu0 0.0
      %1572 = vmatprep.subr.mxu0 0.0
      %1573 = vmatpush1.msra.mxu0 0.0
      %1574 = vmatprep.subr.mxu0 0.0
      %1575 = vmatpush1.msra.mxu0 0.0
      %1576 = vmatprep.subr.mxu0 0.0
      %1577 = vmatpush1.msra.mxu0 0.0
      %1578 = vmatprep.subr.mxu0 0.0
      %1579 = vmatpush1.msra.mxu0 0.0
      %1580 = vmatprep.subr.mxu0 0.0
      %1581 = vmatpush1.msra.mxu0 0.0
      %1582 = vmatprep.subr.mxu0 0.0
      %1583 = vmatpush1.msra.mxu0 0.0
      %1584 = vmatprep.subr.mxu0 0.0
      %1585 = vmatpush1.msra.mxu0 0.0
      %1586 = vmatprep.subr.mxu0 0.0
      %1587 = vmatpush1.msra.mxu0 0.0
      %1588 = vmatprep.subr.mxu0 0.0
      %1589 = vmatpush1.msra.mxu0 0.0
      %1590 = vmatprep.subr.mxu0 0.0
      %1591 = vmatpush1.msra.mxu0 0.0
      %1592 = vmatprep.subr.mxu0 0.0
      %1593 = vmatpush1.msra.mxu0 0.0
      %1594 = vmatprep.subr.mxu0 0.0
      %1595 = vmatpush1.msra.mxu0 0.0
      %1596 = vmatprep.mubr.f32.mxu0 0.0
      %1597 = vmatmul.mubr.f32.gmra.mrb[0].mxu0 %v1527
      %v1598 = vpop.f32.mrb[0].mxu0
      %v1599 = vadd.f32 0.0, %v1598
      %v1600 = vpop.f32.mrb[0].mxu0
      %v1601 = vadd.f32 0.0, %v1600
      %1602 = vmatprep.mubr.f32.mxu0 0.0
      %1603 = vmatmul.mubr.f32.gmra.mrb[0].mxu0 %v1530
      %v1604 = vpop.f32.mrb[0].mxu0
      %v1605 = vadd.f32 0.0, %v1604
      %v1606 = vpop.f32.mrb[0].mxu0
      %v1607 = vadd.f32 0.0, %v1606
      %1608 = vdwg.mxu0
      %s1609 = scalar_lea.vmem %s6, 2
      %v1610 = vld [vmem:[%s1609] sm:$0x3]
      %1611 = vrot.lane.b32.xlu0 %v1599, 32
      %v1612 = vpop.permute.xlu0 %1611
      %1613 = vrot.lane.b32.xlu0 %v1605, 32
      %v1614 = vpop.permute.xlu0 %1613
      %1615 = vrot.lane.b32.xlu0 %v1601, 32
      %v1616 = vpop.permute.xlu0 %1615
      %1617 = vrot.lane.b32.xlu0 %v1607, 32
      %v1618 = vpop.permute.xlu0 %1617
      %vm1619 = vcmp.lt.s32.totalorder %v595, 32
      %v1620 = vsel %vm1619, %v1612, %v1616
      %v1621 = vsel %vm1619, %v1614, %v1618
      %v1622 = vsel %vm1619, %v1616, %v1612
      %v1623 = vsel %vm1619, %v1618, %v1614
      %v1625 = vlaneseq
      %v1626 = vshrl.u32 %v1625, 7
      %v1627 = vsub.s32 0, %v1626
      %v1628 = vrot.slane %v1610, %v1627
      %v1629 = vlaneseq
      %v1630 = vshrl.u32 %v1629, 7
      %v1631 = vsub.s32 1, %v1630
      %v1632 = vrot.slane %v1610, %v1631
      %v1635 = vmul.f32 %v1628, %v1622
      %v1636 = vmul.f32 %v1632, %v1620
      %v1637 = vmul.f32 %v1628, %v1623
      %v1638 = vmul.f32 %v1632, %v1621
      %v1639 = vadd.f32 %v1519, %v1635
      %v1640 = vadd.f32 %v1520, %v1636
      %v1641 = vadd.f32 %v1521, %v1637
      %v1642 = vadd.f32 %v1522, %v1638
      %s1643 = scalar_lea.vmem %s4, 32
      %v1644 = vld [vmem:[%s1643] sm:$0xff]
      %v1645 = vld [vmem:[%s1643 + $0x8] sm:$0xff]
      %v1647 = vsel %vm1410, %v1644, 0
      %v1650 = vsel %vm1410, %v1645, 0
      %1652 = vmatprep.subr.mxu0 %v1401
      %1653 = vmatpush1.msra.mxu0 %v1400
      %1654 = vmatprep.subr.mxu0 %v1403
      %1655 = vmatpush1.msra.mxu0 %v1402
      %1656 = vmatprep.subr.mxu0 %v1405
      %1657 = vmatpush1.msra.mxu0 %v1404
      %1658 = vmatprep.subr.mxu0 %v1407
      %1659 = vmatpush1.msra.mxu0 %v1406
      %1660 = vmatprep.subr.mxu0 0.0
      %1661 = vmatpush1.msra.mxu0 0.0
      %1662 = vmatprep.subr.mxu0 0.0
      %1663 = vmatpush1.msra.mxu0 0.0
      %1664 = vmatprep.subr.mxu0 0.0
      %1665 = vmatpush1.msra.mxu0 0.0
      %1666 = vmatprep.subr.mxu0 0.0
      %1667 = vmatpush1.msra.mxu0 0.0
      %1668 = vmatprep.subr.mxu0 0.0
      %1669 = vmatpush1.msra.mxu0 0.0
      %1670 = vmatprep.subr.mxu0 0.0
      %1671 = vmatpush1.msra.mxu0 0.0
      %1672 = vmatprep.subr.mxu0 0.0
      %1673 = vmatpush1.msra.mxu0 0.0
      %1674 = vmatprep.subr.mxu0 0.0
      %1675 = vmatpush1.msra.mxu0 0.0
      %1676 = vmatprep.subr.mxu0 0.0
      %1677 = vmatpush1.msra.mxu0 0.0
      %1678 = vmatprep.subr.mxu0 0.0
      %1679 = vmatpush1.msra.mxu0 0.0
      %1680 = vmatprep.subr.mxu0 0.0
      %1681 = vmatpush1.msra.mxu0 0.0
      %1682 = vmatprep.subr.mxu0 0.0
      %1683 = vmatpush1.msra.mxu0 0.0
      %1684 = vmatprep.subr.mxu0 0.0
      %1685 = vmatpush1.msra.mxu0 0.0
      %1686 = vmatprep.subr.mxu0 0.0
      %1687 = vmatpush1.msra.mxu0 0.0
      %1688 = vmatprep.subr.mxu0 0.0
      %1689 = vmatpush1.msra.mxu0 0.0
      %1690 = vmatprep.subr.mxu0 0.0
      %1691 = vmatpush1.msra.mxu0 0.0
      %1692 = vmatprep.subr.mxu0 0.0
      %1693 = vmatpush1.msra.mxu0 0.0
      %1694 = vmatprep.subr.mxu0 0.0
      %1695 = vmatpush1.msra.mxu0 0.0
      %1696 = vmatprep.subr.mxu0 0.0
      %1697 = vmatpush1.msra.mxu0 0.0
      %1698 = vmatprep.subr.mxu0 0.0
      %1699 = vmatpush1.msra.mxu0 0.0
      %1700 = vmatprep.subr.mxu0 0.0
      %1701 = vmatpush1.msra.mxu0 0.0
      %1702 = vmatprep.subr.mxu0 0.0
      %1703 = vmatpush1.msra.mxu0 0.0
      %1704 = vmatprep.subr.mxu0 0.0
      %1705 = vmatpush1.msra.mxu0 0.0
      %1706 = vmatprep.subr.mxu0 0.0
      %1707 = vmatpush1.msra.mxu0 0.0
      %1708 = vmatprep.subr.mxu0 0.0
      %1709 = vmatpush1.msra.mxu0 0.0
      %1710 = vmatprep.subr.mxu0 0.0
      %1711 = vmatpush1.msra.mxu0 0.0
      %1712 = vmatprep.subr.mxu0 0.0
      %1713 = vmatpush1.msra.mxu0 0.0
      %1714 = vmatprep.subr.mxu0 0.0
      %1715 = vmatpush1.msra.mxu0 0.0
      %1716 = vmatprep.mubr.f32.mxu0 0.0
      %1717 = vmatmul.mubr.f32.gmra.mrb[0].mxu0 %v1647
      %v1718 = vpop.f32.mrb[0].mxu0
      %v1719 = vadd.f32 0.0, %v1718
      %v1720 = vpop.f32.mrb[0].mxu0
      %v1721 = vadd.f32 0.0, %v1720
      %1722 = vmatprep.mubr.f32.mxu0 0.0
      %1723 = vmatmul.mubr.f32.gmra.mrb[0].mxu0 %v1650
      %v1724 = vpop.f32.mrb[0].mxu0
      %v1725 = vadd.f32 0.0, %v1724
      %v1726 = vpop.f32.mrb[0].mxu0
      %v1727 = vadd.f32 0.0, %v1726
      %1728 = vdwg.mxu0
      %s1729 = scalar_lea.vmem %s6, 4
      %v1730 = vld [vmem:[%s1729] sm:$0x3]
      %1731 = vrot.lane.b32.xlu0 %v1719, 30
      %v1732 = vpop.permute.xlu0 %1731
      %1733 = vrot.lane.b32.xlu0 %v1725, 30
      %v1734 = vpop.permute.xlu0 %1733
      %1735 = vrot.lane.b32.xlu0 %v1721, 30
      %v1736 = vpop.permute.xlu0 %1735
      %1737 = vrot.lane.b32.xlu0 %v1727, 30
      %v1738 = vpop.permute.xlu0 %1737
      %vm1739 = vcmp.lt.s32.totalorder %v595, 30
      %v1740 = vsel %vm1739, %v1732, %v1736
      %v1741 = vsel %vm1739, %v1734, %v1738
      %v1742 = vsel %vm1739, %v1736, %v1732
      %v1743 = vsel %vm1739, %v1738, %v1734
      %v1745 = vlaneseq
      %v1746 = vshrl.u32 %v1745, 7
      %v1747 = vsub.s32 0, %v1746
      %v1748 = vrot.slane %v1730, %v1747
      %v1749 = vlaneseq
      %v1750 = vshrl.u32 %v1749, 7
      %v1751 = vsub.s32 1, %v1750
      %v1752 = vrot.slane %v1730, %v1751
      %v1755 = vmul.f32 %v1748, %v1742
      %v1756 = vmul.f32 %v1752, %v1740
      %v1757 = vmul.f32 %v1748, %v1743
      %v1758 = vmul.f32 %v1752, %v1741
      %v1759 = vadd.f32 %v1639, %v1755
      %v1760 = vadd.f32 %v1640, %v1756
      %v1761 = vadd.f32 %v1641, %v1757
      %v1762 = vadd.f32 %v1642, %v1758
      %s1763 = scalar_lea.vmem %s4, 48
      %v1764 = vld [vmem:[%s1763] sm:$0xff]
      %v1765 = vld [vmem:[%s1763 + $0x8] sm:$0xff]
      %v1767 = vsel %vm1410, %v1764, 0
      %v1770 = vsel %vm1410, %v1765, 0
      %1772 = vmatprep.subr.mxu0 %v1401
      %1773 = vmatpush1.msra.mxu0 %v1400
      %1774 = vmatprep.subr.mxu0 %v1403
      %1775 = vmatpush1.msra.mxu0 %v1402
      %1776 = vmatprep.subr.mxu0 %v1405
      %1777 = vmatpush1.msra.mxu0 %v1404
      %1778 = vmatprep.subr.mxu0 %v1407
      %1779 = vmatpush1.msra.mxu0 %v1406
      %1780 = vmatprep.subr.mxu0 0.0
      %1781 = vmatpush1.msra.mxu0 0.0
      %1782 = vmatprep.subr.mxu0 0.0
      %1783 = vmatpush1.msra.mxu0 0.0
      %1784 = vmatprep.subr.mxu0 0.0
      %1785 = vmatpush1.msra.mxu0 0.0
      %1786 = vmatprep.subr.mxu0 0.0
      %1787 = vmatpush1.msra.mxu0 0.0
      %1788 = vmatprep.subr.mxu0 0.0
      %1789 = vmatpush1.msra.mxu0 0.0
      %1790 = vmatprep.subr.mxu0 0.0
      %1791 = vmatpush1.msra.mxu0 0.0
      %1792 = vmatprep.subr.mxu0 0.0
      %1793 = vmatpush1.msra.mxu0 0.0
      %1794 = vmatprep.subr.mxu0 0.0
      %1795 = vmatpush1.msra.mxu0 0.0
      %1796 = vmatprep.subr.mxu0 0.0
      %1797 = vmatpush1.msra.mxu0 0.0
      %1798 = vmatprep.subr.mxu0 0.0
      %1799 = vmatpush1.msra.mxu0 0.0
      %1800 = vmatprep.subr.mxu0 0.0
      %1801 = vmatpush1.msra.mxu0 0.0
      %1802 = vmatprep.subr.mxu0 0.0
      %1803 = vmatpush1.msra.mxu0 0.0
      %1804 = vmatprep.subr.mxu0 0.0
      %1805 = vmatpush1.msra.mxu0 0.0
      %1806 = vmatprep.subr.mxu0 0.0
      %1807 = vmatpush1.msra.mxu0 0.0
      %1808 = vmatprep.subr.mxu0 0.0
      %1809 = vmatpush1.msra.mxu0 0.0
      %1810 = vmatprep.subr.mxu0 0.0
      %1811 = vmatpush1.msra.mxu0 0.0
      %1812 = vmatprep.subr.mxu0 0.0
      %1813 = vmatpush1.msra.mxu0 0.0
      %1814 = vmatprep.subr.mxu0 0.0
      %1815 = vmatpush1.msra.mxu0 0.0
      %1816 = vmatprep.subr.mxu0 0.0
      %1817 = vmatpush1.msra.mxu0 0.0
      %1818 = vmatprep.subr.mxu0 0.0
      %1819 = vmatpush1.msra.mxu0 0.0
      %1820 = vmatprep.subr.mxu0 0.0
      %1821 = vmatpush1.msra.mxu0 0.0
      %1822 = vmatprep.subr.mxu0 0.0
      %1823 = vmatpush1.msra.mxu0 0.0
      %1824 = vmatprep.subr.mxu0 0.0
      %1825 = vmatpush1.msra.mxu0 0.0
      %1826 = vmatprep.subr.mxu0 0.0
      %1827 = vmatpush1.msra.mxu0 0.0
      %1828 = vmatprep.subr.mxu0 0.0
      %1829 = vmatpush1.msra.mxu0 0.0
      %1830 = vmatprep.subr.mxu0 0.0
      %1831 = vmatpush1.msra.mxu0 0.0
      %1832 = vmatprep.subr.mxu0 0.0
      %1833 = vmatpush1.msra.mxu0 0.0
      %1834 = vmatprep.subr.mxu0 0.0
      %1835 = vmatpush1.msra.mxu0 0.0
      %1836 = vmatprep.mubr.f32.mxu0 0.0
      %1837 = vmatmul.mubr.f32.gmra.mrb[0].mxu0 %v1767
      %v1838 = vpop.f32.mrb[0].mxu0
      %v1839 = vadd.f32 0.0, %v1838
      %v1840 = vpop.f32.mrb[0].mxu0
      %v1841 = vadd.f32 0.0, %v1840
      %1842 = vmatprep.mubr.f32.mxu0 0.0
      %1843 = vmatmul.mubr.f32.gmra.mrb[0].mxu0 %v1770
      %v1844 = vpop.f32.mrb[0].mxu0
      %v1845 = vadd.f32 0.0, %v1844
      %v1846 = vpop.f32.mrb[0].mxu0
      %v1847 = vadd.f32 0.0, %v1846
      %1848 = vdwg.mxu0
      %s1849 = scalar_lea.vmem %s6, 6
      %v1850 = vld [vmem:[%s1849] sm:$0x3]
      %1851 = vrot.lane.b32.xlu0 %v1839, 2
      %v1852 = vpop.permute.xlu0 %1851
      %1853 = vrot.lane.b32.xlu0 %v1845, 2
      %v1854 = vpop.permute.xlu0 %1853
      %1855 = vrot.lane.b32.xlu0 %v1841, 2
      %v1856 = vpop.permute.xlu0 %1855
      %1857 = vrot.lane.b32.xlu0 %v1847, 2
      %v1858 = vpop.permute.xlu0 %1857
      %vm1859 = vcmp.lt.s32.totalorder %v595, 2
      %v1860 = vsel %vm1859, %v1852, %v1856
      %v1861 = vsel %vm1859, %v1854, %v1858
      %v1862 = vsel %vm1859, %v1856, %v1852
      %v1863 = vsel %vm1859, %v1858, %v1854
      %v1865 = vlaneseq
      %v1866 = vshrl.u32 %v1865, 7
      %v1867 = vsub.s32 0, %v1866
      %v1868 = vrot.slane %v1850, %v1867
      %v1869 = vlaneseq
      %v1870 = vshrl.u32 %v1869, 7
      %v1871 = vsub.s32 1, %v1870
      %v1872 = vrot.slane %v1850, %v1871
      %v1875 = vmul.f32 %v1868, %v1862
      %v1876 = vmul.f32 %v1872, %v1860
      %v1877 = vmul.f32 %v1868, %v1863
      %v1878 = vmul.f32 %v1872, %v1861
      %v1879 = vadd.f32 %v1759, %v1875
      %v1880 = vadd.f32 %v1760, %v1876
      %v1881 = vadd.f32 %v1761, %v1877
      %v1882 = vadd.f32 %v1762, %v1878
      %s1883 = scalar_lea.vmem %s4, 64
      %v1884 = vld [vmem:[%s1883] sm:$0xff]
      %v1885 = vld [vmem:[%s1883 + $0x8] sm:$0xff]
      %v1887 = vsel %vm1410, %v1884, 0
      %v1890 = vsel %vm1410, %v1885, 0
      %1892 = vmatprep.subr.mxu0 %v1401
      %1893 = vmatpush1.msra.mxu0 %v1400
      %1894 = vmatprep.subr.mxu0 %v1403
      %1895 = vmatpush1.msra.mxu0 %v1402
      %1896 = vmatprep.subr.mxu0 %v1405
      %1897 = vmatpush1.msra.mxu0 %v1404
      %1898 = vmatprep.subr.mxu0 %v1407
      %1899 = vmatpush1.msra.mxu0 %v1406
      %1900 = vmatprep.subr.mxu0 0.0
      %1901 = vmatpush1.msra.mxu0 0.0
      %1902 = vmatprep.subr.mxu0 0.0
      %1903 = vmatpush1.msra.mxu0 0.0
      %1904 = vmatprep.subr.mxu0 0.0
      %1905 = vmatpush1.msra.mxu0 0.0
      %1906 = vmatprep.subr.mxu0 0.0
      %1907 = vmatpush1.msra.mxu0 0.0
      %1908 = vmatprep.subr.mxu0 0.0
      %1909 = vmatpush1.msra.mxu0 0.0
      %1910 = vmatprep.subr.mxu0 0.0
      %1911 = vmatpush1.msra.mxu0 0.0
      %1912 = vmatprep.subr.mxu0 0.0
      %1913 = vmatpush1.msra.mxu0 0.0
      %1914 = vmatprep.subr.mxu0 0.0
      %1915 = vmatpush1.msra.mxu0 0.0
      %1916 = vmatprep.subr.mxu0 0.0
      %1917 = vmatpush1.msra.mxu0 0.0
      %1918 = vmatprep.subr.mxu0 0.0
      %1919 = vmatpush1.msra.mxu0 0.0
      %1920 = vmatprep.subr.mxu0 0.0
      %1921 = vmatpush1.msra.mxu0 0.0
      %1922 = vmatprep.subr.mxu0 0.0
      %1923 = vmatpush1.msra.mxu0 0.0
      %1924 = vmatprep.subr.mxu0 0.0
      %1925 = vmatpush1.msra.mxu0 0.0
      %1926 = vmatprep.subr.mxu0 0.0
      %1927 = vmatpush1.msra.mxu0 0.0
      %1928 = vmatprep.subr.mxu0 0.0
      %1929 = vmatpush1.msra.mxu0 0.0
      %1930 = vmatprep.subr.mxu0 0.0
      %1931 = vmatpush1.msra.mxu0 0.0
      %1932 = vmatprep.subr.mxu0 0.0
      %1933 = vmatpush1.msra.mxu0 0.0
      %1934 = vmatprep.subr.mxu0 0.0
      %1935 = vmatpush1.msra.mxu0 0.0
      %1936 = vmatprep.subr.mxu0 0.0
      %1937 = vmatpush1.msra.mxu0 0.0
      %1938 = vmatprep.subr.mxu0 0.0
      %1939 = vmatpush1.msra.mxu0 0.0
      %1940 = vmatprep.subr.mxu0 0.0
      %1941 = vmatpush1.msra.mxu0 0.0
      %1942 = vmatprep.subr.mxu0 0.0
      %1943 = vmatpush1.msra.mxu0 0.0
      %1944 = vmatprep.subr.mxu0 0.0
      %1945 = vmatpush1.msra.mxu0 0.0
      %1946 = vmatprep.subr.mxu0 0.0
      %1947 = vmatpush1.msra.mxu0 0.0
      %1948 = vmatprep.subr.mxu0 0.0
      %1949 = vmatpush1.msra.mxu0 0.0
      %1950 = vmatprep.subr.mxu0 0.0
      %1951 = vmatpush1.msra.mxu0 0.0
      %1952 = vmatprep.subr.mxu0 0.0
      %1953 = vmatpush1.msra.mxu0 0.0
      %1954 = vmatprep.subr.mxu0 0.0
      %1955 = vmatpush1.msra.mxu0 0.0
      %1956 = vmatprep.mubr.f32.mxu0 0.0
      %1957 = vmatmul.mubr.f32.gmra.mrb[0].mxu0 %v1887
      %v1958 = vpop.f32.mrb[0].mxu0
      %v1959 = vadd.f32 0.0, %v1958
      %v1960 = vpop.f32.mrb[0].mxu0
      %v1961 = vadd.f32 0.0, %v1960
      %1962 = vmatprep.mubr.f32.mxu0 0.0
      %1963 = vmatmul.mubr.f32.gmra.mrb[0].mxu0 %v1890
      %v1964 = vpop.f32.mrb[0].mxu0
      %v1965 = vadd.f32 0.0, %v1964
      %v1966 = vpop.f32.mrb[0].mxu0
      %v1967 = vadd.f32 0.0, %v1966
      %1968 = vdwg.mxu0
      %s1969 = scalar_lea.vmem %s6, 8
      %v1970 = vld [vmem:[%s1969] sm:$0x3]
      %v1972 = vlaneseq
      %v1973 = vshrl.u32 %v1972, 7
      %v1974 = vsub.s32 0, %v1973
      %v1975 = vrot.slane %v1970, %v1974
      %v1976 = vlaneseq
      %v1977 = vshrl.u32 %v1976, 7
      %v1978 = vsub.s32 1, %v1977
      %v1979 = vrot.slane %v1970, %v1978
      %v1982 = vmul.f32 %v1975, %v1959
      %v1983 = vmul.f32 %v1979, %v1961
      %v1984 = vmul.f32 %v1975, %v1965
      %v1985 = vmul.f32 %v1979, %v1967
      %v1986 = vadd.f32 %v1879, %v1982
      %v1987 = vadd.f32 %v1880, %v1983
      %v1988 = vadd.f32 %v1881, %v1984
      %v1989 = vadd.f32 %v1882, %v1985
      %s1990 = scalar_lea.vmem %s4, 80
      %v1991 = vld [vmem:[%s1990] sm:$0xff]
      %v1992 = vld [vmem:[%s1990 + $0x8] sm:$0xff]
      %v1994 = vsel %vm1410, %v1991, 0
      %v1997 = vsel %vm1410, %v1992, 0
      %1999 = vmatprep.subr.mxu0 %v1401
      %2000 = vmatpush1.msra.mxu0 %v1400
      %2001 = vmatprep.subr.mxu0 %v1403
      %2002 = vmatpush1.msra.mxu0 %v1402
      %2003 = vmatprep.subr.mxu0 %v1405
      %2004 = vmatpush1.msra.mxu0 %v1404
      %2005 = vmatprep.subr.mxu0 %v1407
      %2006 = vmatpush1.msra.mxu0 %v1406
      %2007 = vmatprep.subr.mxu0 0.0
      %2008 = vmatpush1.msra.mxu0 0.0
      %2009 = vmatprep.subr.mxu0 0.0
      %2010 = vmatpush1.msra.mxu0 0.0
      %2011 = vmatprep.subr.mxu0 0.0
      %2012 = vmatpush1.msra.mxu0 0.0
      %2013 = vmatprep.subr.mxu0 0.0
      %2014 = vmatpush1.msra.mxu0 0.0
      %2015 = vmatprep.subr.mxu0 0.0
      %2016 = vmatpush1.msra.mxu0 0.0
      %2017 = vmatprep.subr.mxu0 0.0
      %2018 = vmatpush1.msra.mxu0 0.0
      %2019 = vmatprep.subr.mxu0 0.0
      %2020 = vmatpush1.msra.mxu0 0.0
      %2021 = vmatprep.subr.mxu0 0.0
      %2022 = vmatpush1.msra.mxu0 0.0
      %2023 = vmatprep.subr.mxu0 0.0
      %2024 = vmatpush1.msra.mxu0 0.0
      %2025 = vmatprep.subr.mxu0 0.0
      %2026 = vmatpush1.msra.mxu0 0.0
      %2027 = vmatprep.subr.mxu0 0.0
      %2028 = vmatpush1.msra.mxu0 0.0
      %2029 = vmatprep.subr.mxu0 0.0
      %2030 = vmatpush1.msra.mxu0 0.0
      %2031 = vmatprep.subr.mxu0 0.0
      %2032 = vmatpush1.msra.mxu0 0.0
      %2033 = vmatprep.subr.mxu0 0.0
      %2034 = vmatpush1.msra.mxu0 0.0
      %2035 = vmatprep.subr.mxu0 0.0
      %2036 = vmatpush1.msra.mxu0 0.0
      %2037 = vmatprep.subr.mxu0 0.0
      %2038 = vmatpush1.msra.mxu0 0.0
      %2039 = vmatprep.subr.mxu0 0.0
      %2040 = vmatpush1.msra.mxu0 0.0
      %2041 = vmatprep.subr.mxu0 0.0
      %2042 = vmatpush1.msra.mxu0 0.0
      %2043 = vmatprep.subr.mxu0 0.0
      %2044 = vmatpush1.msra.mxu0 0.0
      %2045 = vmatprep.subr.mxu0 0.0
      %2046 = vmatpush1.msra.mxu0 0.0
      %2047 = vmatprep.subr.mxu0 0.0
      %2048 = vmatpush1.msra.mxu0 0.0
      %2049 = vmatprep.subr.mxu0 0.0
      %2050 = vmatpush1.msra.mxu0 0.0
      %2051 = vmatprep.subr.mxu0 0.0
      %2052 = vmatpush1.msra.mxu0 0.0
      %2053 = vmatprep.subr.mxu0 0.0
      %2054 = vmatpush1.msra.mxu0 0.0
      %2055 = vmatprep.subr.mxu0 0.0
      %2056 = vmatpush1.msra.mxu0 0.0
      %2057 = vmatprep.subr.mxu0 0.0
      %2058 = vmatpush1.msra.mxu0 0.0
      %2059 = vmatprep.subr.mxu0 0.0
      %2060 = vmatpush1.msra.mxu0 0.0
      %2061 = vmatprep.subr.mxu0 0.0
      %2062 = vmatpush1.msra.mxu0 0.0
      %2063 = vmatprep.mubr.f32.mxu0 0.0
      %2064 = vmatmul.mubr.f32.gmra.mrb[0].mxu0 %v1994
      %v2065 = vpop.f32.mrb[0].mxu0
      %v2066 = vadd.f32 0.0, %v2065
      %v2067 = vpop.f32.mrb[0].mxu0
      %v2068 = vadd.f32 0.0, %v2067
      %2069 = vmatprep.mubr.f32.mxu0 0.0
      %2070 = vmatmul.mubr.f32.gmra.mrb[0].mxu0 %v1997
      %v2071 = vpop.f32.mrb[0].mxu0
      %v2072 = vadd.f32 0.0, %v2071
      %v2073 = vpop.f32.mrb[0].mxu0
      %v2074 = vadd.f32 0.0, %v2073
      %2075 = vdwg.mxu0
      %s2076 = scalar_lea.vmem %s6, 10
      %v2077 = vld [vmem:[%s2076] sm:$0x3]
      %2078 = vrot.lane.b32.xlu0 %v2066, 126
      %v2079 = vpop.permute.xlu0 %2078
      %2080 = vrot.lane.b32.xlu0 %v2072, 126
      %v2081 = vpop.permute.xlu0 %2080
      %2082 = vrot.lane.b32.xlu0 %v2068, 126
      %v2083 = vpop.permute.xlu0 %2082
      %2084 = vrot.lane.b32.xlu0 %v2074, 126
      %v2085 = vpop.permute.xlu0 %2084
      %vm2086 = vcmp.lt.s32.totalorder %v595, 126
      %v2087 = vsel %vm2086, %v2079, %v2083
      %v2088 = vsel %vm2086, %v2081, %v2085
      %v2089 = vsel %vm2086, %v2083, %v2079
      %v2090 = vsel %vm2086, %v2085, %v2081
      %v2092 = vlaneseq
      %v2093 = vshrl.u32 %v2092, 7
      %v2094 = vsub.s32 0, %v2093
      %v2095 = vrot.slane %v2077, %v2094
      %v2096 = vlaneseq
      %v2097 = vshrl.u32 %v2096, 7
      %v2098 = vsub.s32 1, %v2097
      %v2099 = vrot.slane %v2077, %v2098
      %v2102 = vmul.f32 %v2095, %v2087
      %v2103 = vmul.f32 %v2099, %v2089
      %v2104 = vmul.f32 %v2095, %v2088
      %v2105 = vmul.f32 %v2099, %v2090
      %v2106 = vadd.f32 %v1986, %v2102
      %v2107 = vadd.f32 %v1987, %v2103
      %v2108 = vadd.f32 %v1988, %v2104
      %v2109 = vadd.f32 %v1989, %v2105
      %s2110 = scalar_lea.vmem %s4, 96
      %v2111 = vld [vmem:[%s2110] sm:$0xff]
      %v2112 = vld [vmem:[%s2110 + $0x8] sm:$0xff]
      %v2114 = vsel %vm1410, %v2111, 0
      %v2117 = vsel %vm1410, %v2112, 0
      %2119 = vmatprep.subr.mxu0 %v1401
      %2120 = vmatpush1.msra.mxu0 %v1400
      %2121 = vmatprep.subr.mxu0 %v1403
      %2122 = vmatpush1.msra.mxu0 %v1402
      %2123 = vmatprep.subr.mxu0 %v1405
      %2124 = vmatpush1.msra.mxu0 %v1404
      %2125 = vmatprep.subr.mxu0 %v1407
      %2126 = vmatpush1.msra.mxu0 %v1406
      %2127 = vmatprep.subr.mxu0 0.0
      %2128 = vmatpush1.msra.mxu0 0.0
      %2129 = vmatprep.subr.mxu0 0.0
      %2130 = vmatpush1.msra.mxu0 0.0
      %2131 = vmatprep.subr.mxu0 0.0
      %2132 = vmatpush1.msra.mxu0 0.0
      %2133 = vmatprep.subr.mxu0 0.0
      %2134 = vmatpush1.msra.mxu0 0.0
      %2135 = vmatprep.subr.mxu0 0.0
      %2136 = vmatpush1.msra.mxu0 0.0
      %2137 = vmatprep.subr.mxu0 0.0
      %2138 = vmatpush1.msra.mxu0 0.0
      %2139 = vmatprep.subr.mxu0 0.0
      %2140 = vmatpush1.msra.mxu0 0.0
      %2141 = vmatprep.subr.mxu0 0.0
      %2142 = vmatpush1.msra.mxu0 0.0
      %2143 = vmatprep.subr.mxu0 0.0
      %2144 = vmatpush1.msra.mxu0 0.0
      %2145 = vmatprep.subr.mxu0 0.0
      %2146 = vmatpush1.msra.mxu0 0.0
      %2147 = vmatprep.subr.mxu0 0.0
      %2148 = vmatpush1.msra.mxu0 0.0
      %2149 = vmatprep.subr.mxu0 0.0
      %2150 = vmatpush1.msra.mxu0 0.0
      %2151 = vmatprep.subr.mxu0 0.0
      %2152 = vmatpush1.msra.mxu0 0.0
      %2153 = vmatprep.subr.mxu0 0.0
      %2154 = vmatpush1.msra.mxu0 0.0
      %2155 = vmatprep.subr.mxu0 0.0
      %2156 = vmatpush1.msra.mxu0 0.0
      %2157 = vmatprep.subr.mxu0 0.0
      %2158 = vmatpush1.msra.mxu0 0.0
      %2159 = vmatprep.subr.mxu0 0.0
      %2160 = vmatpush1.msra.mxu0 0.0
      %2161 = vmatprep.subr.mxu0 0.0
      %2162 = vmatpush1.msra.mxu0 0.0
      %2163 = vmatprep.subr.mxu0 0.0
      %2164 = vmatpush1.msra.mxu0 0.0
      %2165 = vmatprep.subr.mxu0 0.0
      %2166 = vmatpush1.msra.mxu0 0.0
      %2167 = vmatprep.subr.mxu0 0.0
      %2168 = vmatpush1.msra.mxu0 0.0
      %2169 = vmatprep.subr.mxu0 0.0
      %2170 = vmatpush1.msra.mxu0 0.0
      %2171 = vmatprep.subr.mxu0 0.0
      %2172 = vmatpush1.msra.mxu0 0.0
      %2173 = vmatprep.subr.mxu0 0.0
      %2174 = vmatpush1.msra.mxu0 0.0
      %2175 = vmatprep.subr.mxu0 0.0
      %2176 = vmatpush1.msra.mxu0 0.0
      %2177 = vmatprep.subr.mxu0 0.0
      %2178 = vmatpush1.msra.mxu0 0.0
      %2179 = vmatprep.subr.mxu0 0.0
      %2180 = vmatpush1.msra.mxu0 0.0
      %2181 = vmatprep.subr.mxu0 0.0
      %2182 = vmatpush1.msra.mxu0 0.0
      %2183 = vmatprep.mubr.f32.mxu0 0.0
      %2184 = vmatmul.mubr.f32.gmra.mrb[0].mxu0 %v2114
      %v2185 = vpop.f32.mrb[0].mxu0
      %v2186 = vadd.f32 0.0, %v2185
      %v2187 = vpop.f32.mrb[0].mxu0
      %v2188 = vadd.f32 0.0, %v2187
      %2189 = vmatprep.mubr.f32.mxu0 0.0
      %2190 = vmatmul.mubr.f32.gmra.mrb[0].mxu0 %v2117
      %v2191 = vpop.f32.mrb[0].mxu0
      %v2192 = vadd.f32 0.0, %v2191
      %v2193 = vpop.f32.mrb[0].mxu0
      %v2194 = vadd.f32 0.0, %v2193
      %2195 = vdwg.mxu0
      %s2196 = scalar_lea.vmem %s6, 12
      %v2197 = vld [vmem:[%s2196] sm:$0x3]
      %2198 = vrot.lane.b32.xlu0 %v2186, 98
      %v2199 = vpop.permute.xlu0 %2198
      %2200 = vrot.lane.b32.xlu0 %v2192, 98
      %v2201 = vpop.permute.xlu0 %2200
      %2202 = vrot.lane.b32.xlu0 %v2188, 98
      %v2203 = vpop.permute.xlu0 %2202
      %2204 = vrot.lane.b32.xlu0 %v2194, 98
      %v2205 = vpop.permute.xlu0 %2204
      %vm2206 = vcmp.lt.s32.totalorder %v595, 98
      %v2207 = vsel %vm2206, %v2199, %v2203
      %v2208 = vsel %vm2206, %v2201, %v2205
      %v2209 = vsel %vm2206, %v2203, %v2199
      %v2210 = vsel %vm2206, %v2205, %v2201
      %v2212 = vlaneseq
      %v2213 = vshrl.u32 %v2212, 7
      %v2214 = vsub.s32 0, %v2213
      %v2215 = vrot.slane %v2197, %v2214
      %v2216 = vlaneseq
      %v2217 = vshrl.u32 %v2216, 7
      %v2218 = vsub.s32 1, %v2217
      %v2219 = vrot.slane %v2197, %v2218
      %v2222 = vmul.f32 %v2215, %v2207
      %v2223 = vmul.f32 %v2219, %v2209
      %v2224 = vmul.f32 %v2215, %v2208
      %v2225 = vmul.f32 %v2219, %v2210
      %v2226 = vadd.f32 %v2106, %v2222
      %v2227 = vadd.f32 %v2107, %v2223
      %v2228 = vadd.f32 %v2108, %v2224
      %v2229 = vadd.f32 %v2109, %v2225
      %s2230 = scalar_lea.vmem %s4, 112
      %v2231 = vld [vmem:[%s2230] sm:$0xff]
      %v2232 = vld [vmem:[%s2230 + $0x8] sm:$0xff]
      %v2234 = vsel %vm1410, %v2231, 0
      %v2237 = vsel %vm1410, %v2232, 0
      %2239 = vmatprep.subr.mxu0 %v1401
      %2240 = vmatpush1.msra.mxu0 %v1400
      %2241 = vmatprep.subr.mxu0 %v1403
      %2242 = vmatpush1.msra.mxu0 %v1402
      %2243 = vmatprep.subr.mxu0 %v1405
      %2244 = vmatpush1.msra.mxu0 %v1404
      %2245 = vmatprep.subr.mxu0 %v1407
      %2246 = vmatpush1.msra.mxu0 %v1406
      %2247 = vmatprep.subr.mxu0 0.0
      %2248 = vmatpush1.msra.mxu0 0.0
      %2249 = vmatprep.subr.mxu0 0.0
      %2250 = vmatpush1.msra.mxu0 0.0
      %2251 = vmatprep.subr.mxu0 0.0
      %2252 = vmatpush1.msra.mxu0 0.0
      %2253 = vmatprep.subr.mxu0 0.0
      %2254 = vmatpush1.msra.mxu0 0.0
      %2255 = vmatprep.subr.mxu0 0.0
      %2256 = vmatpush1.msra.mxu0 0.0
      %2257 = vmatprep.subr.mxu0 0.0
      %2258 = vmatpush1.msra.mxu0 0.0
      %2259 = vmatprep.subr.mxu0 0.0
      %2260 = vmatpush1.msra.mxu0 0.0
      %2261 = vmatprep.subr.mxu0 0.0
      %2262 = vmatpush1.msra.mxu0 0.0
      %2263 = vmatprep.subr.mxu0 0.0
      %2264 = vmatpush1.msra.mxu0 0.0
      %2265 = vmatprep.subr.mxu0 0.0
      %2266 = vmatpush1.msra.mxu0 0.0
      %2267 = vmatprep.subr.mxu0 0.0
      %2268 = vmatpush1.msra.mxu0 0.0
      %2269 = vmatprep.subr.mxu0 0.0
      %2270 = vmatpush1.msra.mxu0 0.0
      %2271 = vmatprep.subr.mxu0 0.0
      %2272 = vmatpush1.msra.mxu0 0.0
      %2273 = vmatprep.subr.mxu0 0.0
      %2274 = vmatpush1.msra.mxu0 0.0
      %2275 = vmatprep.subr.mxu0 0.0
      %2276 = vmatpush1.msra.mxu0 0.0
      %2277 = vmatprep.subr.mxu0 0.0
      %2278 = vmatpush1.msra.mxu0 0.0
      %2279 = vmatprep.subr.mxu0 0.0
      %2280 = vmatpush1.msra.mxu0 0.0
      %2281 = vmatprep.subr.mxu0 0.0
      %2282 = vmatpush1.msra.mxu0 0.0
      %2283 = vmatprep.subr.mxu0 0.0
      %2284 = vmatpush1.msra.mxu0 0.0
      %2285 = vmatprep.subr.mxu0 0.0
      %2286 = vmatpush1.msra.mxu0 0.0
      %2287 = vmatprep.subr.mxu0 0.0
      %2288 = vmatpush1.msra.mxu0 0.0
      %2289 = vmatprep.subr.mxu0 0.0
      %2290 = vmatpush1.msra.mxu0 0.0
      %2291 = vmatprep.subr.mxu0 0.0
      %2292 = vmatpush1.msra.mxu0 0.0
      %2293 = vmatprep.subr.mxu0 0.0
      %2294 = vmatpush1.msra.mxu0 0.0
      %2295 = vmatprep.subr.mxu0 0.0
      %2296 = vmatpush1.msra.mxu0 0.0
      %2297 = vmatprep.subr.mxu0 0.0
      %2298 = vmatpush1.msra.mxu0 0.0
      %2299 = vmatprep.subr.mxu0 0.0
      %2300 = vmatpush1.msra.mxu0 0.0
      %2301 = vmatprep.subr.mxu0 0.0
      %2302 = vmatpush1.msra.mxu0 0.0
      %2303 = vmatprep.mubr.f32.mxu0 0.0
      %2304 = vmatmul.mubr.f32.gmra.mrb[0].mxu0 %v2234
      %v2305 = vpop.f32.mrb[0].mxu0
      %v2306 = vadd.f32 0.0, %v2305
      %v2307 = vpop.f32.mrb[0].mxu0
      %v2308 = vadd.f32 0.0, %v2307
      %2309 = vmatprep.mubr.f32.mxu0 0.0
      %2310 = vmatmul.mubr.f32.gmra.mrb[0].mxu0 %v2237
      %v2311 = vpop.f32.mrb[0].mxu0
      %v2312 = vadd.f32 0.0, %v2311
      %v2313 = vpop.f32.mrb[0].mxu0
      %v2314 = vadd.f32 0.0, %v2313
      %2315 = vdwg.mxu0
      %s2316 = scalar_lea.vmem %s6, 14
      %v2317 = vld [vmem:[%s2316] sm:$0x3]
      %2318 = vrot.lane.b32.xlu0 %v2306, 96
      %v2319 = vpop.permute.xlu0 %2318
      %2320 = vrot.lane.b32.xlu0 %v2312, 96
      %v2321 = vpop.permute.xlu0 %2320
      %2322 = vrot.lane.b32.xlu0 %v2308, 96
      %v2323 = vpop.permute.xlu0 %2322
      %2324 = vrot.lane.b32.xlu0 %v2314, 96
      %v2325 = vpop.permute.xlu0 %2324
      %vm2326 = vcmp.lt.s32.totalorder %v595, 96
      %v2327 = vsel %vm2326, %v2319, %v2323
      %v2328 = vsel %vm2326, %v2321, %v2325
      %v2329 = vsel %vm2326, %v2323, %v2319
      %v2330 = vsel %vm2326, %v2325, %v2321
      %v2332 = vlaneseq
      %v2333 = vshrl.u32 %v2332, 7
      %v2334 = vsub.s32 0, %v2333
      %v2335 = vrot.slane %v2317, %v2334
      %v2336 = vlaneseq
      %v2337 = vshrl.u32 %v2336, 7
      %v2338 = vsub.s32 1, %v2337
      %v2339 = vrot.slane %v2317, %v2338
      %v2342 = vmul.f32 %v2335, %v2327
      %v2343 = vmul.f32 %v2339, %v2329
      %v2344 = vmul.f32 %v2335, %v2328
      %v2345 = vmul.f32 %v2339, %v2330
      %v2346 = vadd.f32 %v2226, %v2342
      %v2347 = vadd.f32 %v2227, %v2343
      %v2348 = vadd.f32 %v2228, %v2344
      %v2349 = vadd.f32 %v2229, %v2345
      %s2350 = scalar_lea.vmem %s4, 128
      %v2351 = vld [vmem:[%s2350] sm:$0xff]
      %v2352 = vld [vmem:[%s2350 + $0x8] sm:$0xff]
      %v2354 = vsel %vm1410, %v2351, 0
      %v2357 = vsel %vm1410, %v2352, 0
      %2359 = vmatprep.subr.mxu0 %v1401
      %2360 = vmatpush1.msra.mxu0 %v1400
      %2361 = vmatprep.subr.mxu0 %v1403
      %2362 = vmatpush1.msra.mxu0 %v1402
      %2363 = vmatprep.subr.mxu0 %v1405
      %2364 = vmatpush1.msra.mxu0 %v1404
      %2365 = vmatprep.subr.mxu0 %v1407
      %2366 = vmatpush1.msra.mxu0 %v1406
      %2367 = vmatprep.subr.mxu0 0.0
      %2368 = vmatpush1.msra.mxu0 0.0
      %2369 = vmatprep.subr.mxu0 0.0
      %2370 = vmatpush1.msra.mxu0 0.0
      %2371 = vmatprep.subr.mxu0 0.0
      %2372 = vmatpush1.msra.mxu0 0.0
      %2373 = vmatprep.subr.mxu0 0.0
      %2374 = vmatpush1.msra.mxu0 0.0
      %2375 = vmatprep.subr.mxu0 0.0
      %2376 = vmatpush1.msra.mxu0 0.0
      %2377 = vmatprep.subr.mxu0 0.0
      %2378 = vmatpush1.msra.mxu0 0.0
      %2379 = vmatprep.subr.mxu0 0.0
      %2380 = vmatpush1.msra.mxu0 0.0
      %2381 = vmatprep.subr.mxu0 0.0
      %2382 = vmatpush1.msra.mxu0 0.0
      %2383 = vmatprep.subr.mxu0 0.0
      %2384 = vmatpush1.msra.mxu0 0.0
      %2385 = vmatprep.subr.mxu0 0.0
      %2386 = vmatpush1.msra.mxu0 0.0
      %2387 = vmatprep.subr.mxu0 0.0
      %2388 = vmatpush1.msra.mxu0 0.0
      %2389 = vmatprep.subr.mxu0 0.0
      %2390 = vmatpush1.msra.mxu0 0.0
      %2391 = vmatprep.subr.mxu0 0.0
      %2392 = vmatpush1.msra.mxu0 0.0
      %2393 = vmatprep.subr.mxu0 0.0
      %2394 = vmatpush1.msra.mxu0 0.0
      %2395 = vmatprep.subr.mxu0 0.0
      %2396 = vmatpush1.msra.mxu0 0.0
      %2397 = vmatprep.subr.mxu0 0.0
      %2398 = vmatpush1.msra.mxu0 0.0
      %2399 = vmatprep.subr.mxu0 0.0
      %2400 = vmatpush1.msra.mxu0 0.0
      %2401 = vmatprep.subr.mxu0 0.0
      %2402 = vmatpush1.msra.mxu0 0.0
      %2403 = vmatprep.subr.mxu0 0.0
      %2404 = vmatpush1.msra.mxu0 0.0
      %2405 = vmatprep.subr.mxu0 0.0
      %2406 = vmatpush1.msra.mxu0 0.0
      %2407 = vmatprep.subr.mxu0 0.0
      %2408 = vmatpush1.msra.mxu0 0.0
      %2409 = vmatprep.subr.mxu0 0.0
      %2410 = vmatpush1.msra.mxu0 0.0
      %2411 = vmatprep.subr.mxu0 0.0
      %2412 = vmatpush1.msra.mxu0 0.0
      %2413 = vmatprep.subr.mxu0 0.0
      %2414 = vmatpush1.msra.mxu0 0.0
      %2415 = vmatprep.subr.mxu0 0.0
      %2416 = vmatpush1.msra.mxu0 0.0
      %2417 = vmatprep.subr.mxu0 0.0
      %2418 = vmatpush1.msra.mxu0 0.0
      %2419 = vmatprep.subr.mxu0 0.0
      %2420 = vmatpush1.msra.mxu0 0.0
      %2421 = vmatprep.subr.mxu0 0.0
      %2422 = vmatpush1.msra.mxu0 0.0
      %2423 = vmatprep.mubr.f32.mxu0 0.0
      %2424 = vmatmul.mubr.f32.gmra.mrb[0].mxu0 %v2354
      %v2425 = vpop.f32.mrb[0].mxu0
      %v2426 = vadd.f32 0.0, %v2425
      %v2427 = vpop.f32.mrb[0].mxu0
      %v2428 = vadd.f32 0.0, %v2427
      %2429 = vmatprep.mubr.f32.mxu0 0.0
      %2430 = vmatmul.mubr.f32.gmra.mrb[0].mxu0 %v2357
      %v2431 = vpop.f32.mrb[0].mxu0
      %v2432 = vadd.f32 0.0, %v2431
      %v2433 = vpop.f32.mrb[0].mxu0
      %v2434 = vadd.f32 0.0, %v2433
      %2435 = vdwg.mxu0
      %s2436 = scalar_lea.vmem %s6, 16
      %v2437 = vld [vmem:[%s2436] sm:$0x3]
      %2438 = vrot.lane.b32.xlu0 %v2426, 94
      %v2439 = vpop.permute.xlu0 %2438
      %2440 = vrot.lane.b32.xlu0 %v2432, 94
      %v2441 = vpop.permute.xlu0 %2440
      %2442 = vrot.lane.b32.xlu0 %v2428, 94
      %v2443 = vpop.permute.xlu0 %2442
      %2444 = vrot.lane.b32.xlu0 %v2434, 94
      %v2445 = vpop.permute.xlu0 %2444
      %vm2446 = vcmp.lt.s32.totalorder %v595, 94
      %v2447 = vsel %vm2446, %v2439, %v2443
      %v2448 = vsel %vm2446, %v2441, %v2445
      %v2449 = vsel %vm2446, %v2443, %v2439
      %v2450 = vsel %vm2446, %v2445, %v2441
      %v2452 = vlaneseq
      %v2453 = vshrl.u32 %v2452, 7
      %v2454 = vsub.s32 0, %v2453
      %v2455 = vrot.slane %v2437, %v2454
      %v2456 = vlaneseq
      %v2457 = vshrl.u32 %v2456, 7
      %v2458 = vsub.s32 1, %v2457
      %v2459 = vrot.slane %v2437, %v2458
      %v2462 = vmul.f32 %v2455, %v2447
      %v2463 = vmul.f32 %v2459, %v2449
      %v2464 = vmul.f32 %v2455, %v2448
      %v2465 = vmul.f32 %v2459, %v2450
      %v2466 = vadd.f32 %v2346, %v2462
      %v2467 = vadd.f32 %v2347, %v2463
      %v2468 = vadd.f32 %v2348, %v2464
      %v2469 = vadd.f32 %v2349, %v2465
      %v2470 = vld [vmem:[%s5] sm:$0xff]
      %v2471 = vld [vmem:[%s5 + $0x8] sm:$0xff]
      %2473 = vset.pattern.permute.xlu0 0
      %2474 = vperm.xlu0 %2473, %v2470
      %v2475 = vpop.permute.xlu0 %2474
      %2478 = vset.pattern.permute.xlu0 0
      %2479 = vperm.xlu0 %2478, %v2471
      %v2480 = vpop.permute.xlu0 %2479
      %v2482 = vadd.f32 %v2466, %v2475
      %v2483 = vadd.f32 %v2467, %v2475
      %v2484 = vadd.f32 %v2468, %v2480
      %v2485 = vadd.f32 %v2469, %v2480
      %v2486 = vmax.f32 %v2482, 0.0
      %v2487 = vmax.f32 %v2483, 0.0
      %v2488 = vmax.f32 %v2484, 0.0
      %v2489 = vmax.f32 %v2485, 0.0
      %2490 = vrot.lane.b32.xlu0 %v2486, 126
      %v2491 = vpop.permute.xlu0 %2490
      %2492 = vrot.lane.b32.xlu0 %v2488, 126
      %v2493 = vpop.permute.xlu0 %2492
      %2494 = vrot.lane.b32.xlu0 %v2487, 126
      %v2495 = vpop.permute.xlu0 %2494
      %2496 = vrot.lane.b32.xlu0 %v2489, 126
      %v2497 = vpop.permute.xlu0 %2496
      %v2498 = vsel %vm2086, %v2491, %v2495
      %v2499 = vsel %vm2086, %v2493, %v2497
      %v2500 = vsel %vm2086, %v2495, %v2491
      %v2501 = vsel %vm2086, %v2497, %v2493
      %v2502 = vmax.f32 %v2486, %v2498
      %v2503 = vmax.f32 %v2487, %v2500
      %v2504 = vmax.f32 %v2488, %v2499
      %v2505 = vmax.f32 %v2489, %v2501
      %2506 = vrot.lane.b32.xlu0 %v2486, 96
      %v2507 = vpop.permute.xlu0 %2506
      %2508 = vrot.lane.b32.xlu0 %v2488, 96
      %v2509 = vpop.permute.xlu0 %2508
      %2510 = vrot.lane.b32.xlu0 %v2487, 96
      %v2511 = vpop.permute.xlu0 %2510
      %2512 = vrot.lane.b32.xlu0 %v2489, 96
      %v2513 = vpop.permute.xlu0 %2512
      %v2514 = vsel %vm2326, %v2507, %v2511
      %v2515 = vsel %vm2326, %v2509, %v2513
      %v2516 = vsel %vm2326, %v2511, %v2507
      %v2517 = vsel %vm2326, %v2513, %v2509
      %2518 = vrot.lane.b32.xlu0 %v2486, 94
      %v2519 = vpop.permute.xlu0 %2518
      %2520 = vrot.lane.b32.xlu0 %v2488, 94
      %v2521 = vpop.permute.xlu0 %2520
      %2522 = vrot.lane.b32.xlu0 %v2487, 94
      %v2523 = vpop.permute.xlu0 %2522
      %2524 = vrot.lane.b32.xlu0 %v2489, 94
      %v2525 = vpop.permute.xlu0 %2524
      %v2526 = vsel %vm2446, %v2519, %v2523
      %v2527 = vsel %vm2446, %v2521, %v2525
      %v2528 = vsel %vm2446, %v2523, %v2519
      %v2529 = vsel %vm2446, %v2525, %v2521
      %v2530 = vmax.f32 %v2514, %v2526
      %v2531 = vmax.f32 %v2516, %v2528
      %v2532 = vmax.f32 %v2515, %v2527
      %v2533 = vmax.f32 %v2517, %v2529
      %v2534 = vmax.f32 %v2502, %v2530
      %v2535 = vmax.f32 %v2503, %v2531
      %v2536 = vmax.f32 %v2504, %v2532
      %v2537 = vmax.f32 %v2505, %v2533
      %v2538 = vld [vmem:[%s7] sm:$0xf]
      %vm2539 = vcmask 130048
      %v2541 = vsel %vm2539, %v2538, 0
      %2543 = vmatprep.subr.mxu0 %v2535
      %2544 = vmatpush1.msra.mxu0 %v2534
      %2545 = vmatprep.subr.mxu0 %v2537
      %2546 = vmatpush1.msra.mxu0 %v2536
      %2547 = vmatprep.subr.mxu0 0.0
      %2548 = vmatpush1.msra.mxu0 0.0
      %2549 = vmatprep.subr.mxu0 0.0
      %2550 = vmatpush1.msra.mxu0 0.0
      %2551 = vmatprep.subr.mxu0 0.0
      %2552 = vmatpush1.msra.mxu0 0.0
      %2553 = vmatprep.subr.mxu0 0.0
      %2554 = vmatpush1.msra.mxu0 0.0
      %2555 = vmatprep.subr.mxu0 0.0
      %2556 = vmatpush1.msra.mxu0 0.0
      %2557 = vmatprep.subr.mxu0 0.0
      %2558 = vmatpush1.msra.mxu0 0.0
      %2559 = vmatprep.subr.mxu0 0.0
      %2560 = vmatpush1.msra.mxu0 0.0
      %2561 = vmatprep.subr.mxu0 0.0
      %2562 = vmatpush1.msra.mxu0 0.0
      %2563 = vmatprep.subr.mxu0 0.0
      %2564 = vmatpush1.msra.mxu0 0.0
      %2565 = vmatprep.subr.mxu0 0.0
      %2566 = vmatpush1.msra.mxu0 0.0
      %2567 = vmatprep.subr.mxu0 0.0
      %2568 = vmatpush1.msra.mxu0 0.0
      %2569 = vmatprep.subr.mxu0 0.0
      %2570 = vmatpush1.msra.mxu0 0.0
      %2571 = vmatprep.subr.mxu0 0.0
      %2572 = vmatpush1.msra.mxu0 0.0
      %2573 = vmatprep.subr.mxu0 0.0
      %2574 = vmatpush1.msra.mxu0 0.0
      %2575 = vmatprep.subr.mxu0 0.0
      %2576 = vmatpush1.msra.mxu0 0.0
      %2577 = vmatprep.subr.mxu0 0.0
      %2578 = vmatpush1.msra.mxu0 0.0
      %2579 = vmatprep.subr.mxu0 0.0
      %2580 = vmatpush1.msra.mxu0 0.0
      %2581 = vmatprep.subr.mxu0 0.0
      %2582 = vmatpush1.msra.mxu0 0.0
      %2583 = vmatprep.subr.mxu0 0.0
      %2584 = vmatpush1.msra.mxu0 0.0
      %2585 = vmatprep.subr.mxu0 0.0
      %2586 = vmatpush1.msra.mxu0 0.0
      %2587 = vmatprep.subr.mxu0 0.0
      %2588 = vmatpush1.msra.mxu0 0.0
      %2589 = vmatprep.subr.mxu0 0.0
      %2590 = vmatpush1.msra.mxu0 0.0
      %2591 = vmatprep.subr.mxu0 0.0
      %2592 = vmatpush1.msra.mxu0 0.0
      %2593 = vmatprep.subr.mxu0 0.0
      %2594 = vmatpush1.msra.mxu0 0.0
      %2595 = vmatprep.subr.mxu0 0.0
      %2596 = vmatpush1.msra.mxu0 0.0
      %2597 = vmatprep.subr.mxu0 0.0
      %2598 = vmatpush1.msra.mxu0 0.0
      %2599 = vmatprep.subr.mxu0 0.0
      %2600 = vmatpush1.msra.mxu0 0.0
      %2601 = vmatprep.subr.mxu0 0.0
      %2602 = vmatpush1.msra.mxu0 0.0
      %2603 = vmatprep.subr.mxu0 0.0
      %2604 = vmatpush1.msra.mxu0 0.0
      %2605 = vmatprep.subr.mxu0 0.0
      %2606 = vmatpush1.msra.mxu0 0.0
      %2607 = vmatprep.mubr.f32.mxu0 0.0
      %2608 = vmatmul.mubr.f32.gmra.mrb[0].mxu0 %v2541
      %v2609 = vpop.f32.mrb[0].mxu0
      %v2610 = vadd.f32 0.0, %v2609
      %v2611 = vpop.f32.mrb[0].mxu0
      %v2612 = vadd.f32 0.0, %v2611
      %2613 = vdwg.mxu0
      %v2614 = vld [vmem:[%s9] sm:$0x3]
      %2615 = vrot.lane.b32.xlu0 %v2610, 68
      %v2616 = vpop.permute.xlu0 %2615
      %2617 = vrot.lane.b32.xlu0 %v2612, 68
      %v2618 = vpop.permute.xlu0 %2617
      %vm2619 = vcmp.lt.s32.totalorder %v595, 68
      %v2620 = vsel %vm2619, %v2616, %v2618
      %v2621 = vsel %vm2619, %v2618, %v2616
      %v2623 = vlaneseq
      %v2624 = vshrl.u32 %v2623, 7
      %v2625 = vsub.s32 0, %v2624
      %v2626 = vrot.slane %v2614, %v2625
      %v2627 = vlaneseq
      %v2628 = vshrl.u32 %v2627, 7
      %v2629 = vsub.s32 1, %v2628
      %v2630 = vrot.slane %v2614, %v2629
      %v2633 = vmul.f32 %v2626, %v2621
      %v2634 = vmul.f32 %v2630, %v2620
      %s2635 = scalar_lea.vmem %s7, 4
      %v2636 = vld [vmem:[%s2635] sm:$0xf]
      %v2638 = vsel %vm2539, %v2636, 0
      %2640 = vmatprep.subr.mxu0 %v2535
      %2641 = vmatpush1.msra.mxu0 %v2534
      %2642 = vmatprep.subr.mxu0 %v2537
      %2643 = vmatpush1.msra.mxu0 %v2536
      %2644 = vmatprep.subr.mxu0 0.0
      %2645 = vmatpush1.msra.mxu0 0.0
      %2646 = vmatprep.subr.mxu0 0.0
      %2647 = vmatpush1.msra.mxu0 0.0
      %2648 = vmatprep.subr.mxu0 0.0
      %2649 = vmatpush1.msra.mxu0 0.0
      %2650 = vmatprep.subr.mxu0 0.0
      %2651 = vmatpush1.msra.mxu0 0.0
      %2652 = vmatprep.subr.mxu0 0.0
      %2653 = vmatpush1.msra.mxu0 0.0
      %2654 = vmatprep.subr.mxu0 0.0
      %2655 = vmatpush1.msra.mxu0 0.0
      %2656 = vmatprep.subr.mxu0 0.0
      %2657 = vmatpush1.msra.mxu0 0.0
      %2658 = vmatprep.subr.mxu0 0.0
      %2659 = vmatpush1.msra.mxu0 0.0
      %2660 = vmatprep.subr.mxu0 0.0
      %2661 = vmatpush1.msra.mxu0 0.0
      %2662 = vmatprep.subr.mxu0 0.0
      %2663 = vmatpush1.msra.mxu0 0.0
      %2664 = vmatprep.subr.mxu0 0.0
      %2665 = vmatpush1.msra.mxu0 0.0
      %2666 = vmatprep.subr.mxu0 0.0
      %2667 = vmatpush1.msra.mxu0 0.0
      %2668 = vmatprep.subr.mxu0 0.0
      %2669 = vmatpush1.msra.mxu0 0.0
      %2670 = vmatprep.subr.mxu0 0.0
      %2671 = vmatpush1.msra.mxu0 0.0
      %2672 = vmatprep.subr.mxu0 0.0
      %2673 = vmatpush1.msra.mxu0 0.0
      %2674 = vmatprep.subr.mxu0 0.0
      %2675 = vmatpush1.msra.mxu0 0.0
      %2676 = vmatprep.subr.mxu0 0.0
      %2677 = vmatpush1.msra.mxu0 0.0
      %2678 = vmatprep.subr.mxu0 0.0
      %2679 = vmatpush1.msra.mxu0 0.0
      %2680 = vmatprep.subr.mxu0 0.0
      %2681 = vmatpush1.msra.mxu0 0.0
      %2682 = vmatprep.subr.mxu0 0.0
      %2683 = vmatpush1.msra.mxu0 0.0
      %2684 = vmatprep.subr.mxu0 0.0
      %2685 = vmatpush1.msra.mxu0 0.0
      %2686 = vmatprep.subr.mxu0 0.0
      %2687 = vmatpush1.msra.mxu0 0.0
      %2688 = vmatprep.subr.mxu0 0.0
      %2689 = vmatpush1.msra.mxu0 0.0
      %2690 = vmatprep.subr.mxu0 0.0
      %2691 = vmatpush1.msra.mxu0 0.0
      %2692 = vmatprep.subr.mxu0 0.0
      %2693 = vmatpush1.msra.mxu0 0.0
      %2694 = vmatprep.subr.mxu0 0.0
      %2695 = vmatpush1.msra.mxu0 0.0
      %2696 = vmatprep.subr.mxu0 0.0
      %2697 = vmatpush1.msra.mxu0 0.0
      %2698 = vmatprep.subr.mxu0 0.0
      %2699 = vmatpush1.msra.mxu0 0.0
      %2700 = vmatprep.subr.mxu0 0.0
      %2701 = vmatpush1.msra.mxu0 0.0
      %2702 = vmatprep.subr.mxu0 0.0
      %2703 = vmatpush1.msra.mxu0 0.0
      %2704 = vmatprep.mubr.f32.mxu0 0.0
      %2705 = vmatmul.mubr.f32.gmra.mrb[0].mxu0 %v2638
      %v2706 = vpop.f32.mrb[0].mxu0
      %v2707 = vadd.f32 0.0, %v2706
      %v2708 = vpop.f32.mrb[0].mxu0
      %v2709 = vadd.f32 0.0, %v2708
      %2710 = vdwg.mxu0
      %s2711 = scalar_lea.vmem %s9, 2
      %v2712 = vld [vmem:[%s2711] sm:$0x3]
      %2713 = vrot.lane.b32.xlu0 %v2707, 64
      %v2714 = vpop.permute.xlu0 %2713
      %2715 = vrot.lane.b32.xlu0 %v2709, 64
      %v2716 = vpop.permute.xlu0 %2715
      %vm2717 = vcmp.lt.s32.totalorder %v595, 64
      %v2718 = vsel %vm2717, %v2714, %v2716
      %v2719 = vsel %vm2717, %v2716, %v2714
      %v2721 = vlaneseq
      %v2722 = vshrl.u32 %v2721, 7
      %v2723 = vsub.s32 0, %v2722
      %v2724 = vrot.slane %v2712, %v2723
      %v2725 = vlaneseq
      %v2726 = vshrl.u32 %v2725, 7
      %v2727 = vsub.s32 1, %v2726
      %v2728 = vrot.slane %v2712, %v2727
      %v2731 = vmul.f32 %v2724, %v2719
      %v2732 = vmul.f32 %v2728, %v2718
      %v2733 = vadd.f32 %v2633, %v2731
      %v2734 = vadd.f32 %v2634, %v2732
      %s2735 = scalar_lea.vmem %s7, 8
      %v2736 = vld [vmem:[%s2735] sm:$0xf]
      %v2738 = vsel %vm2539, %v2736, 0
      %2740 = vmatprep.subr.mxu0 %v2535
      %2741 = vmatpush1.msra.mxu0 %v2534
      %2742 = vmatprep.subr.mxu0 %v2537
      %2743 = vmatpush1.msra.mxu0 %v2536
      %2744 = vmatprep.subr.mxu0 0.0
      %2745 = vmatpush1.msra.mxu0 0.0
      %2746 = vmatprep.subr.mxu0 0.0
      %2747 = vmatpush1.msra.mxu0 0.0
      %2748 = vmatprep.subr.mxu0 0.0
      %2749 = vmatpush1.msra.mxu0 0.0
      %2750 = vmatprep.subr.mxu0 0.0
      %2751 = vmatpush1.msra.mxu0 0.0
      %2752 = vmatprep.subr.mxu0 0.0
      %2753 = vmatpush1.msra.mxu0 0.0
      %2754 = vmatprep.subr.mxu0 0.0
      %2755 = vmatpush1.msra.mxu0 0.0
      %2756 = vmatprep.subr.mxu0 0.0
      %2757 = vmatpush1.msra.mxu0 0.0
      %2758 = vmatprep.subr.mxu0 0.0
      %2759 = vmatpush1.msra.mxu0 0.0
      %2760 = vmatprep.subr.mxu0 0.0
      %2761 = vmatpush1.msra.mxu0 0.0
      %2762 = vmatprep.subr.mxu0 0.0
      %2763 = vmatpush1.msra.mxu0 0.0
      %2764 = vmatprep.subr.mxu0 0.0
      %2765 = vmatpush1.msra.mxu0 0.0
      %2766 = vmatprep.subr.mxu0 0.0
      %2767 = vmatpush1.msra.mxu0 0.0
      %2768 = vmatprep.subr.mxu0 0.0
      %2769 = vmatpush1.msra.mxu0 0.0
      %2770 = vmatprep.subr.mxu0 0.0
      %2771 = vmatpush1.msra.mxu0 0.0
      %2772 = vmatprep.subr.mxu0 0.0
      %2773 = vmatpush1.msra.mxu0 0.0
      %2774 = vmatprep.subr.mxu0 0.0
      %2775 = vmatpush1.msra.mxu0 0.0
      %2776 = vmatprep.subr.mxu0 0.0
      %2777 = vmatpush1.msra.mxu0 0.0
      %2778 = vmatprep.subr.mxu0 0.0
      %2779 = vmatpush1.msra.mxu0 0.0
      %2780 = vmatprep.subr.mxu0 0.0
      %2781 = vmatpush1.msra.mxu0 0.0
      %2782 = vmatprep.subr.mxu0 0.0
      %2783 = vmatpush1.msra.mxu0 0.0
      %2784 = vmatprep.subr.mxu0 0.0
      %2785 = vmatpush1.msra.mxu0 0.0
      %2786 = vmatprep.subr.mxu0 0.0
      %2787 = vmatpush1.msra.mxu0 0.0
      %2788 = vmatprep.subr.mxu0 0.0
      %2789 = vmatpush1.msra.mxu0 0.0
      %2790 = vmatprep.subr.mxu0 0.0
      %2791 = vmatpush1.msra.mxu0 0.0
      %2792 = vmatprep.subr.mxu0 0.0
      %2793 = vmatpush1.msra.mxu0 0.0
      %2794 = vmatprep.subr.mxu0 0.0
      %2795 = vmatpush1.msra.mxu0 0.0
      %2796 = vmatprep.subr.mxu0 0.0
      %2797 = vmatpush1.msra.mxu0 0.0
      %2798 = vmatprep.subr.mxu0 0.0
      %2799 = vmatpush1.msra.mxu0 0.0
      %2800 = vmatprep.subr.mxu0 0.0
      %2801 = vmatpush1.msra.mxu0 0.0
      %2802 = vmatprep.subr.mxu0 0.0
      %2803 = vmatpush1.msra.mxu0 0.0
      %2804 = vmatprep.mubr.f32.mxu0 0.0
      %2805 = vmatmul.mubr.f32.gmra.mrb[0].mxu0 %v2738
      %v2806 = vpop.f32.mrb[0].mxu0
      %v2807 = vadd.f32 0.0, %v2806
      %v2808 = vpop.f32.mrb[0].mxu0
      %v2809 = vadd.f32 0.0, %v2808
      %2810 = vdwg.mxu0
      %s2811 = scalar_lea.vmem %s9, 4
      %v2812 = vld [vmem:[%s2811] sm:$0x3]
      %2813 = vrot.lane.b32.xlu0 %v2807, 60
      %v2814 = vpop.permute.xlu0 %2813
      %2815 = vrot.lane.b32.xlu0 %v2809, 60
      %v2816 = vpop.permute.xlu0 %2815
      %vm2817 = vcmp.lt.s32.totalorder %v595, 60
      %v2818 = vsel %vm2817, %v2814, %v2816
      %v2819 = vsel %vm2817, %v2816, %v2814
      %v2821 = vlaneseq
      %v2822 = vshrl.u32 %v2821, 7
      %v2823 = vsub.s32 0, %v2822
      %v2824 = vrot.slane %v2812, %v2823
      %v2825 = vlaneseq
      %v2826 = vshrl.u32 %v2825, 7
      %v2827 = vsub.s32 1, %v2826
      %v2828 = vrot.slane %v2812, %v2827
      %v2831 = vmul.f32 %v2824, %v2819
      %v2832 = vmul.f32 %v2828, %v2818
      %v2833 = vadd.f32 %v2733, %v2831
      %v2834 = vadd.f32 %v2734, %v2832
      %s2835 = scalar_lea.vmem %s7, 12
      %v2836 = vld [vmem:[%s2835] sm:$0xf]
      %v2838 = vsel %vm2539, %v2836, 0
      %2840 = vmatprep.subr.mxu0 %v2535
      %2841 = vmatpush1.msra.mxu0 %v2534
      %2842 = vmatprep.subr.mxu0 %v2537
      %2843 = vmatpush1.msra.mxu0 %v2536
      %2844 = vmatprep.subr.mxu0 0.0
      %2845 = vmatpush1.msra.mxu0 0.0
      %2846 = vmatprep.subr.mxu0 0.0
      %2847 = vmatpush1.msra.mxu0 0.0
      %2848 = vmatprep.subr.mxu0 0.0
      %2849 = vmatpush1.msra.mxu0 0.0
      %2850 = vmatprep.subr.mxu0 0.0
      %2851 = vmatpush1.msra.mxu0 0.0
      %2852 = vmatprep.subr.mxu0 0.0
      %2853 = vmatpush1.msra.mxu0 0.0
      %2854 = vmatprep.subr.mxu0 0.0
      %2855 = vmatpush1.msra.mxu0 0.0
      %2856 = vmatprep.subr.mxu0 0.0
      %2857 = vmatpush1.msra.mxu0 0.0
      %2858 = vmatprep.subr.mxu0 0.0
      %2859 = vmatpush1.msra.mxu0 0.0
      %2860 = vmatprep.subr.mxu0 0.0
      %2861 = vmatpush1.msra.mxu0 0.0
      %2862 = vmatprep.subr.mxu0 0.0
      %2863 = vmatpush1.msra.mxu0 0.0
      %2864 = vmatprep.subr.mxu0 0.0
      %2865 = vmatpush1.msra.mxu0 0.0
      %2866 = vmatprep.subr.mxu0 0.0
      %2867 = vmatpush1.msra.mxu0 0.0
      %2868 = vmatprep.subr.mxu0 0.0
      %2869 = vmatpush1.msra.mxu0 0.0
      %2870 = vmatprep.subr.mxu0 0.0
      %2871 = vmatpush1.msra.mxu0 0.0
      %2872 = vmatprep.subr.mxu0 0.0
      %2873 = vmatpush1.msra.mxu0 0.0
      %2874 = vmatprep.subr.mxu0 0.0
      %2875 = vmatpush1.msra.mxu0 0.0
      %2876 = vmatprep.subr.mxu0 0.0
      %2877 = vmatpush1.msra.mxu0 0.0
      %2878 = vmatprep.subr.mxu0 0.0
      %2879 = vmatpush1.msra.mxu0 0.0
      %2880 = vmatprep.subr.mxu0 0.0
      %2881 = vmatpush1.msra.mxu0 0.0
      %2882 = vmatprep.subr.mxu0 0.0
      %2883 = vmatpush1.msra.mxu0 0.0
      %2884 = vmatprep.subr.mxu0 0.0
      %2885 = vmatpush1.msra.mxu0 0.0
      %2886 = vmatprep.subr.mxu0 0.0
      %2887 = vmatpush1.msra.mxu0 0.0
      %2888 = vmatprep.subr.mxu0 0.0
      %2889 = vmatpush1.msra.mxu0 0.0
      %2890 = vmatprep.subr.mxu0 0.0
      %2891 = vmatpush1.msra.mxu0 0.0
      %2892 = vmatprep.subr.mxu0 0.0
      %2893 = vmatpush1.msra.mxu0 0.0
      %2894 = vmatprep.subr.mxu0 0.0
      %2895 = vmatpush1.msra.mxu0 0.0
      %2896 = vmatprep.subr.mxu0 0.0
      %2897 = vmatpush1.msra.mxu0 0.0
      %2898 = vmatprep.subr.mxu0 0.0
      %2899 = vmatpush1.msra.mxu0 0.0
      %2900 = vmatprep.subr.mxu0 0.0
      %2901 = vmatpush1.msra.mxu0 0.0
      %2902 = vmatprep.subr.mxu0 0.0
      %2903 = vmatpush1.msra.mxu0 0.0
      %2904 = vmatprep.mubr.f32.mxu0 0.0
      %2905 = vmatmul.mubr.f32.gmra.mrb[0].mxu0 %v2838
      %v2906 = vpop.f32.mrb[0].mxu0
      %v2907 = vadd.f32 0.0, %v2906
      %v2908 = vpop.f32.mrb[0].mxu0
      %v2909 = vadd.f32 0.0, %v2908
      %2910 = vdwg.mxu0
      %s2911 = scalar_lea.vmem %s9, 6
      %v2912 = vld [vmem:[%s2911] sm:$0x3]
      %2913 = vrot.lane.b32.xlu0 %v2907, 4
      %v2914 = vpop.permute.xlu0 %2913
      %2915 = vrot.lane.b32.xlu0 %v2909, 4
      %v2916 = vpop.permute.xlu0 %2915
      %vm2917 = vcmp.lt.s32.totalorder %v595, 4
      %v2918 = vsel %vm2917, %v2914, %v2916
      %v2919 = vsel %vm2917, %v2916, %v2914
      %v2921 = vlaneseq
      %v2922 = vshrl.u32 %v2921, 7
      %v2923 = vsub.s32 0, %v2922
      %v2924 = vrot.slane %v2912, %v2923
      %v2925 = vlaneseq
      %v2926 = vshrl.u32 %v2925, 7
      %v2927 = vsub.s32 1, %v2926
      %v2928 = vrot.slane %v2912, %v2927
      %v2931 = vmul.f32 %v2924, %v2919
      %v2932 = vmul.f32 %v2928, %v2918
      %v2933 = vadd.f32 %v2833, %v2931
      %v2934 = vadd.f32 %v2834, %v2932
      %s2935 = scalar_lea.vmem %s7, 16
      %v2936 = vld [vmem:[%s2935] sm:$0xf]
      %v2938 = vsel %vm2539, %v2936, 0
      %2940 = vmatprep.subr.mxu0 %v2535
      %2941 = vmatpush1.msra.mxu0 %v2534
      %2942 = vmatprep.subr.mxu0 %v2537
      %2943 = vmatpush1.msra.mxu0 %v2536
      %2944 = vmatprep.subr.mxu0 0.0
      %2945 = vmatpush1.msra.mxu0 0.0
      %2946 = vmatprep.subr.mxu0 0.0
      %2947 = vmatpush1.msra.mxu0 0.0
      %2948 = vmatprep.subr.mxu0 0.0
      %2949 = vmatpush1.msra.mxu0 0.0
      %2950 = vmatprep.subr.mxu0 0.0
      %2951 = vmatpush1.msra.mxu0 0.0
      %2952 = vmatprep.subr.mxu0 0.0
      %2953 = vmatpush1.msra.mxu0 0.0
      %2954 = vmatprep.subr.mxu0 0.0
      %2955 = vmatpush1.msra.mxu0 0.0
      %2956 = vmatprep.subr.mxu0 0.0
      %2957 = vmatpush1.msra.mxu0 0.0
      %2958 = vmatprep.subr.mxu0 0.0
      %2959 = vmatpush1.msra.mxu0 0.0
      %2960 = vmatprep.subr.mxu0 0.0
      %2961 = vmatpush1.msra.mxu0 0.0
      %2962 = vmatprep.subr.mxu0 0.0
      %2963 = vmatpush1.msra.mxu0 0.0
      %2964 = vmatprep.subr.mxu0 0.0
      %2965 = vmatpush1.msra.mxu0 0.0
      %2966 = vmatprep.subr.mxu0 0.0
      %2967 = vmatpush1.msra.mxu0 0.0
      %2968 = vmatprep.subr.mxu0 0.0
      %2969 = vmatpush1.msra.mxu0 0.0
      %2970 = vmatprep.subr.mxu0 0.0
      %2971 = vmatpush1.msra.mxu0 0.0
      %2972 = vmatprep.subr.mxu0 0.0
      %2973 = vmatpush1.msra.mxu0 0.0
      %2974 = vmatprep.subr.mxu0 0.0
      %2975 = vmatpush1.msra.mxu0 0.0
      %2976 = vmatprep.subr.mxu0 0.0
      %2977 = vmatpush1.msra.mxu0 0.0
      %2978 = vmatprep.subr.mxu0 0.0
      %2979 = vmatpush1.msra.mxu0 0.0
      %2980 = vmatprep.subr.mxu0 0.0
      %2981 = vmatpush1.msra.mxu0 0.0
      %2982 = vmatprep.subr.mxu0 0.0
      %2983 = vmatpush1.msra.mxu0 0.0
      %2984 = vmatprep.subr.mxu0 0.0
      %2985 = vmatpush1.msra.mxu0 0.0
      %2986 = vmatprep.subr.mxu0 0.0
      %2987 = vmatpush1.msra.mxu0 0.0
      %2988 = vmatprep.subr.mxu0 0.0
      %2989 = vmatpush1.msra.mxu0 0.0
      %2990 = vmatprep.subr.mxu0 0.0
      %2991 = vmatpush1.msra.mxu0 0.0
      %2992 = vmatprep.subr.mxu0 0.0
      %2993 = vmatpush1.msra.mxu0 0.0
      %2994 = vmatprep.subr.mxu0 0.0
      %2995 = vmatpush1.msra.mxu0 0.0
      %2996 = vmatprep.subr.mxu0 0.0
      %2997 = vmatpush1.msra.mxu0 0.0
      %2998 = vmatprep.subr.mxu0 0.0
      %2999 = vmatpush1.msra.mxu0 0.0
      %3000 = vmatprep.subr.mxu0 0.0
      %3001 = vmatpush1.msra.mxu0 0.0
      %3002 = vmatprep.subr.mxu0 0.0
      %3003 = vmatpush1.msra.mxu0 0.0
      %3004 = vmatprep.mubr.f32.mxu0 0.0
      %3005 = vmatmul.mubr.f32.gmra.mrb[0].mxu0 %v2938
      %v3006 = vpop.f32.mrb[0].mxu0
      %v3007 = vadd.f32 0.0, %v3006
      %v3008 = vpop.f32.mrb[0].mxu0
      %v3009 = vadd.f32 0.0, %v3008
      %3010 = vdwg.mxu0
      %s3011 = scalar_lea.vmem %s9, 8
      %v3012 = vld [vmem:[%s3011] sm:$0x3]
      %v3014 = vlaneseq
      %v3015 = vshrl.u32 %v3014, 7
      %v3016 = vsub.s32 0, %v3015
      %v3017 = vrot.slane %v3012, %v3016
      %v3018 = vlaneseq
      %v3019 = vshrl.u32 %v3018, 7
      %v3020 = vsub.s32 1, %v3019
      %v3021 = vrot.slane %v3012, %v3020
      %v3024 = vmul.f32 %v3017, %v3007
      %v3025 = vmul.f32 %v3021, %v3009
      %v3026 = vadd.f32 %v2933, %v3024
      %v3027 = vadd.f32 %v2934, %v3025
      %s3028 = scalar_lea.vmem %s7, 20
      %v3029 = vld [vmem:[%s3028] sm:$0xf]
      %v3031 = vsel %vm2539, %v3029, 0
      %3033 = vmatprep.subr.mxu0 %v2535
      %3034 = vmatpush1.msra.mxu0 %v2534
      %3035 = vmatprep.subr.mxu0 %v2537
      %3036 = vmatpush1.msra.mxu0 %v2536
      %3037 = vmatprep.subr.mxu0 0.0
      %3038 = vmatpush1.msra.mxu0 0.0
      %3039 = vmatprep.subr.mxu0 0.0
      %3040 = vmatpush1.msra.mxu0 0.0
      %3041 = vmatprep.subr.mxu0 0.0
      %3042 = vmatpush1.msra.mxu0 0.0
      %3043 = vmatprep.subr.mxu0 0.0
      %3044 = vmatpush1.msra.mxu0 0.0
      %3045 = vmatprep.subr.mxu0 0.0
      %3046 = vmatpush1.msra.mxu0 0.0
      %3047 = vmatprep.subr.mxu0 0.0
      %3048 = vmatpush1.msra.mxu0 0.0
      %3049 = vmatprep.subr.mxu0 0.0
      %3050 = vmatpush1.msra.mxu0 0.0
      %3051 = vmatprep.subr.mxu0 0.0
      %3052 = vmatpush1.msra.mxu0 0.0
      %3053 = vmatprep.subr.mxu0 0.0
      %3054 = vmatpush1.msra.mxu0 0.0
      %3055 = vmatprep.subr.mxu0 0.0
      %3056 = vmatpush1.msra.mxu0 0.0
      %3057 = vmatprep.subr.mxu0 0.0
      %3058 = vmatpush1.msra.mxu0 0.0
      %3059 = vmatprep.subr.mxu0 0.0
      %3060 = vmatpush1.msra.mxu0 0.0
      %3061 = vmatprep.subr.mxu0 0.0
      %3062 = vmatpush1.msra.mxu0 0.0
      %3063 = vmatprep.subr.mxu0 0.0
      %3064 = vmatpush1.msra.mxu0 0.0
      %3065 = vmatprep.subr.mxu0 0.0
      %3066 = vmatpush1.msra.mxu0 0.0
      %3067 = vmatprep.subr.mxu0 0.0
      %3068 = vmatpush1.msra.mxu0 0.0
      %3069 = vmatprep.subr.mxu0 0.0
      %3070 = vmatpush1.msra.mxu0 0.0
      %3071 = vmatprep.subr.mxu0 0.0
      %3072 = vmatpush1.msra.mxu0 0.0
      %3073 = vmatprep.subr.mxu0 0.0
      %3074 = vmatpush1.msra.mxu0 0.0
      %3075 = vmatprep.subr.mxu0 0.0
      %3076 = vmatpush1.msra.mxu0 0.0
      %3077 = vmatprep.subr.mxu0 0.0
      %3078 = vmatpush1.msra.mxu0 0.0
      %3079 = vmatprep.subr.mxu0 0.0
      %3080 = vmatpush1.msra.mxu0 0.0
      %3081 = vmatprep.subr.mxu0 0.0
      %3082 = vmatpush1.msra.mxu0 0.0
      %3083 = vmatprep.subr.mxu0 0.0
      %3084 = vmatpush1.msra.mxu0 0.0
      %3085 = vmatprep.subr.mxu0 0.0
      %3086 = vmatpush1.msra.mxu0 0.0
      %3087 = vmatprep.subr.mxu0 0.0
      %3088 = vmatpush1.msra.mxu0 0.0
      %3089 = vmatprep.subr.mxu0 0.0
      %3090 = vmatpush1.msra.mxu0 0.0
      %3091 = vmatprep.subr.mxu0 0.0
      %3092 = vmatpush1.msra.mxu0 0.0
      %3093 = vmatprep.subr.mxu0 0.0
      %3094 = vmatpush1.msra.mxu0 0.0
      %3095 = vmatprep.subr.mxu0 0.0
      %3096 = vmatpush1.msra.mxu0 0.0
      %3097 = vmatprep.mubr.f32.mxu0 0.0
      %3098 = vmatmul.mubr.f32.gmra.mrb[0].mxu0 %v3031
      %v3099 = vpop.f32.mrb[0].mxu0
      %v3100 = vadd.f32 0.0, %v3099
      %v3101 = vpop.f32.mrb[0].mxu0
      %v3102 = vadd.f32 0.0, %v3101
      %3103 = vdwg.mxu0
      %s3104 = scalar_lea.vmem %s9, 10
      %v3105 = vld [vmem:[%s3104] sm:$0x3]
      %3106 = vrot.lane.b32.xlu0 %v3100, 124
      %v3107 = vpop.permute.xlu0 %3106
      %3108 = vrot.lane.b32.xlu0 %v3102, 124
      %v3109 = vpop.permute.xlu0 %3108
      %vm3110 = vcmp.lt.s32.totalorder %v595, 124
      %v3111 = vsel %vm3110, %v3107, %v3109
      %v3112 = vsel %vm3110, %v3109, %v3107
      %v3114 = vlaneseq
      %v3115 = vshrl.u32 %v3114, 7
      %v3116 = vsub.s32 0, %v3115
      %v3117 = vrot.slane %v3105, %v3116
      %v3118 = vlaneseq
      %v3119 = vshrl.u32 %v3118, 7
      %v3120 = vsub.s32 1, %v3119
      %v3121 = vrot.slane %v3105, %v3120
      %v3124 = vmul.f32 %v3117, %v3111
      %v3125 = vmul.f32 %v3121, %v3112
      %v3126 = vadd.f32 %v3026, %v3124
      %v3127 = vadd.f32 %v3027, %v3125
      %s3128 = scalar_lea.vmem %s7, 24
      %v3129 = vld [vmem:[%s3128] sm:$0xf]
      %v3131 = vsel %vm2539, %v3129, 0
      %3133 = vmatprep.subr.mxu0 %v2535
      %3134 = vmatpush1.msra.mxu0 %v2534
      %3135 = vmatprep.subr.mxu0 %v2537
      %3136 = vmatpush1.msra.mxu0 %v2536
      %3137 = vmatprep.subr.mxu0 0.0
      %3138 = vmatpush1.msra.mxu0 0.0
      %3139 = vmatprep.subr.mxu0 0.0
      %3140 = vmatpush1.msra.mxu0 0.0
      %3141 = vmatprep.subr.mxu0 0.0
      %3142 = vmatpush1.msra.mxu0 0.0
      %3143 = vmatprep.subr.mxu0 0.0
      %3144 = vmatpush1.msra.mxu0 0.0
      %3145 = vmatprep.subr.mxu0 0.0
      %3146 = vmatpush1.msra.mxu0 0.0
      %3147 = vmatprep.subr.mxu0 0.0
      %3148 = vmatpush1.msra.mxu0 0.0
      %3149 = vmatprep.subr.mxu0 0.0
      %3150 = vmatpush1.msra.mxu0 0.0
      %3151 = vmatprep.subr.mxu0 0.0
      %3152 = vmatpush1.msra.mxu0 0.0
      %3153 = vmatprep.subr.mxu0 0.0
      %3154 = vmatpush1.msra.mxu0 0.0
      %3155 = vmatprep.subr.mxu0 0.0
      %3156 = vmatpush1.msra.mxu0 0.0
      %3157 = vmatprep.subr.mxu0 0.0
      %3158 = vmatpush1.msra.mxu0 0.0
      %3159 = vmatprep.subr.mxu0 0.0
      %3160 = vmatpush1.msra.mxu0 0.0
      %3161 = vmatprep.subr.mxu0 0.0
      %3162 = vmatpush1.msra.mxu0 0.0
      %3163 = vmatprep.subr.mxu0 0.0
      %3164 = vmatpush1.msra.mxu0 0.0
      %3165 = vmatprep.subr.mxu0 0.0
      %3166 = vmatpush1.msra.mxu0 0.0
      %3167 = vmatprep.subr.mxu0 0.0
      %3168 = vmatpush1.msra.mxu0 0.0
      %3169 = vmatprep.subr.mxu0 0.0
      %3170 = vmatpush1.msra.mxu0 0.0
      %3171 = vmatprep.subr.mxu0 0.0
      %3172 = vmatpush1.msra.mxu0 0.0
      %3173 = vmatprep.subr.mxu0 0.0
      %3174 = vmatpush1.msra.mxu0 0.0
      %3175 = vmatprep.subr.mxu0 0.0
      %3176 = vmatpush1.msra.mxu0 0.0
      %3177 = vmatprep.subr.mxu0 0.0
      %3178 = vmatpush1.msra.mxu0 0.0
      %3179 = vmatprep.subr.mxu0 0.0
      %3180 = vmatpush1.msra.mxu0 0.0
      %3181 = vmatprep.subr.mxu0 0.0
      %3182 = vmatpush1.msra.mxu0 0.0
      %3183 = vmatprep.subr.mxu0 0.0
      %3184 = vmatpush1.msra.mxu0 0.0
      %3185 = vmatprep.subr.mxu0 0.0
      %3186 = vmatpush1.msra.mxu0 0.0
      %3187 = vmatprep.subr.mxu0 0.0
      %3188 = vmatpush1.msra.mxu0 0.0
      %3189 = vmatprep.subr.mxu0 0.0
      %3190 = vmatpush1.msra.mxu0 0.0
      %3191 = vmatprep.subr.mxu0 0.0
      %3192 = vmatpush1.msra.mxu0 0.0
      %3193 = vmatprep.subr.mxu0 0.0
      %3194 = vmatpush1.msra.mxu0 0.0
      %3195 = vmatprep.subr.mxu0 0.0
      %3196 = vmatpush1.msra.mxu0 0.0
      %3197 = vmatprep.mubr.f32.mxu0 0.0
      %3198 = vmatmul.mubr.f32.gmra.mrb[0].mxu0 %v3131
      %v3199 = vpop.f32.mrb[0].mxu0
      %v3200 = vadd.f32 0.0, %v3199
      %v3201 = vpop.f32.mrb[0].mxu0
      %v3202 = vadd.f32 0.0, %v3201
      %3203 = vdwg.mxu0
      %s3204 = scalar_lea.vmem %s9, 12
      %v3205 = vld [vmem:[%s3204] sm:$0x3]
      %3206 = vrot.lane.b32.xlu0 %v3200, 68
      %v3207 = vpop.permute.xlu0 %3206
      %3208 = vrot.lane.b32.xlu0 %v3202, 68
      %v3209 = vpop.permute.xlu0 %3208
      %v3210 = vsel %vm2619, %v3207, %v3209
      %v3211 = vsel %vm2619, %v3209, %v3207
      %v3213 = vlaneseq
      %v3214 = vshrl.u32 %v3213, 7
      %v3215 = vsub.s32 0, %v3214
      %v3216 = vrot.slane %v3205, %v3215
      %v3217 = vlaneseq
      %v3218 = vshrl.u32 %v3217, 7
      %v3219 = vsub.s32 1, %v3218
      %v3220 = vrot.slane %v3205, %v3219
      %v3223 = vmul.f32 %v3216, %v3210
      %v3224 = vmul.f32 %v3220, %v3211
      %v3225 = vadd.f32 %v3126, %v3223
      %v3226 = vadd.f32 %v3127, %v3224
      %s3227 = scalar_lea.vmem %s7, 28
      %v3228 = vld [vmem:[%s3227] sm:$0xf]
      %v3230 = vsel %vm2539, %v3228, 0
      %3232 = vmatprep.subr.mxu0 %v2535
      %3233 = vmatpush1.msra.mxu0 %v2534
      %3234 = vmatprep.subr.mxu0 %v2537
      %3235 = vmatpush1.msra.mxu0 %v2536
      %3236 = vmatprep.subr.mxu0 0.0
      %3237 = vmatpush1.msra.mxu0 0.0
      %3238 = vmatprep.subr.mxu0 0.0
      %3239 = vmatpush1.msra.mxu0 0.0
      %3240 = vmatprep.subr.mxu0 0.0
      %3241 = vmatpush1.msra.mxu0 0.0
      %3242 = vmatprep.subr.mxu0 0.0
      %3243 = vmatpush1.msra.mxu0 0.0
      %3244 = vmatprep.subr.mxu0 0.0
      %3245 = vmatpush1.msra.mxu0 0.0
      %3246 = vmatprep.subr.mxu0 0.0
      %3247 = vmatpush1.msra.mxu0 0.0
      %3248 = vmatprep.subr.mxu0 0.0
      %3249 = vmatpush1.msra.mxu0 0.0
      %3250 = vmatprep.subr.mxu0 0.0
      %3251 = vmatpush1.msra.mxu0 0.0
      %3252 = vmatprep.subr.mxu0 0.0
      %3253 = vmatpush1.msra.mxu0 0.0
      %3254 = vmatprep.subr.mxu0 0.0
      %3255 = vmatpush1.msra.mxu0 0.0
      %3256 = vmatprep.subr.mxu0 0.0
      %3257 = vmatpush1.msra.mxu0 0.0
      %3258 = vmatprep.subr.mxu0 0.0
      %3259 = vmatpush1.msra.mxu0 0.0
      %3260 = vmatprep.subr.mxu0 0.0
      %3261 = vmatpush1.msra.mxu0 0.0
      %3262 = vmatprep.subr.mxu0 0.0
      %3263 = vmatpush1.msra.mxu0 0.0
      %3264 = vmatprep.subr.mxu0 0.0
      %3265 = vmatpush1.msra.mxu0 0.0
      %3266 = vmatprep.subr.mxu0 0.0
      %3267 = vmatpush1.msra.mxu0 0.0
      %3268 = vmatprep.subr.mxu0 0.0
      %3269 = vmatpush1.msra.mxu0 0.0
      %3270 = vmatprep.subr.mxu0 0.0
      %3271 = vmatpush1.msra.mxu0 0.0
      %3272 = vmatprep.subr.mxu0 0.0
      %3273 = vmatpush1.msra.mxu0 0.0
      %3274 = vmatprep.subr.mxu0 0.0
      %3275 = vmatpush1.msra.mxu0 0.0
      %3276 = vmatprep.subr.mxu0 0.0
      %3277 = vmatpush1.msra.mxu0 0.0
      %3278 = vmatprep.subr.mxu0 0.0
      %3279 = vmatpush1.msra.mxu0 0.0
      %3280 = vmatprep.subr.mxu0 0.0
      %3281 = vmatpush1.msra.mxu0 0.0
      %3282 = vmatprep.subr.mxu0 0.0
      %3283 = vmatpush1.msra.mxu0 0.0
      %3284 = vmatprep.subr.mxu0 0.0
      %3285 = vmatpush1.msra.mxu0 0.0
      %3286 = vmatprep.subr.mxu0 0.0
      %3287 = vmatpush1.msra.mxu0 0.0
      %3288 = vmatprep.subr.mxu0 0.0
      %3289 = vmatpush1.msra.mxu0 0.0
      %3290 = vmatprep.subr.mxu0 0.0
      %3291 = vmatpush1.msra.mxu0 0.0
      %3292 = vmatprep.subr.mxu0 0.0
      %3293 = vmatpush1.msra.mxu0 0.0
      %3294 = vmatprep.subr.mxu0 0.0
      %3295 = vmatpush1.msra.mxu0 0.0
      %3296 = vmatprep.mubr.f32.mxu0 0.0
      %3297 = vmatmul.mubr.f32.gmra.mrb[0].mxu0 %v3230
      %v3298 = vpop.f32.mrb[0].mxu0
      %v3299 = vadd.f32 0.0, %v3298
      %v3300 = vpop.f32.mrb[0].mxu0
      %v3301 = vadd.f32 0.0, %v3300
      %3302 = vdwg.mxu0
      %s3303 = scalar_lea.vmem %s9, 14
      %v3304 = vld [vmem:[%s3303] sm:$0x3]
      %3305 = vrot.lane.b32.xlu0 %v3299, 64
      %v3306 = vpop.permute.xlu0 %3305
      %3307 = vrot.lane.b32.xlu0 %v3301, 64
      %v3308 = vpop.permute.xlu0 %3307
      %v3309 = vsel %vm2717, %v3306, %v3308
      %v3310 = vsel %vm2717, %v3308, %v3306
      %v3312 = vlaneseq
      %v3313 = vshrl.u32 %v3312, 7
      %v3314 = vsub.s32 0, %v3313
      %v3315 = vrot.slane %v3304, %v3314
      %v3316 = vlaneseq
      %v3317 = vshrl.u32 %v3316, 7
      %v3318 = vsub.s32 1, %v3317
      %v3319 = vrot.slane %v3304, %v3318
      %v3322 = vmul.f32 %v3315, %v3309
      %v3323 = vmul.f32 %v3319, %v3310
      %v3324 = vadd.f32 %v3225, %v3322
      %v3325 = vadd.f32 %v3226, %v3323
      %s3326 = scalar_lea.vmem %s7, 32
      %v3327 = vld [vmem:[%s3326] sm:$0xf]
      %v3329 = vsel %vm2539, %v3327, 0
      %3331 = vmatprep.subr.mxu0 %v2535
      %3332 = vmatpush1.msra.mxu0 %v2534
      %3333 = vmatprep.subr.mxu0 %v2537
      %3334 = vmatpush1.msra.mxu0 %v2536
      %3335 = vmatprep.subr.mxu0 0.0
      %3336 = vmatpush1.msra.mxu0 0.0
      %3337 = vmatprep.subr.mxu0 0.0
      %3338 = vmatpush1.msra.mxu0 0.0
      %3339 = vmatprep.subr.mxu0 0.0
      %3340 = vmatpush1.msra.mxu0 0.0
      %3341 = vmatprep.subr.mxu0 0.0
      %3342 = vmatpush1.msra.mxu0 0.0
      %3343 = vmatprep.subr.mxu0 0.0
      %3344 = vmatpush1.msra.mxu0 0.0
      %3345 = vmatprep.subr.mxu0 0.0
      %3346 = vmatpush1.msra.mxu0 0.0
      %3347 = vmatprep.subr.mxu0 0.0
      %3348 = vmatpush1.msra.mxu0 0.0
      %3349 = vmatprep.subr.mxu0 0.0
      %3350 = vmatpush1.msra.mxu0 0.0
      %3351 = vmatprep.subr.mxu0 0.0
      %3352 = vmatpush1.msra.mxu0 0.0
      %3353 = vmatprep.subr.mxu0 0.0
      %3354 = vmatpush1.msra.mxu0 0.0
      %3355 = vmatprep.subr.mxu0 0.0
      %3356 = vmatpush1.msra.mxu0 0.0
      %3357 = vmatprep.subr.mxu0 0.0
      %3358 = vmatpush1.msra.mxu0 0.0
      %3359 = vmatprep.subr.mxu0 0.0
      %3360 = vmatpush1.msra.mxu0 0.0
      %3361 = vmatprep.subr.mxu0 0.0
      %3362 = vmatpush1.msra.mxu0 0.0
      %3363 = vmatprep.subr.mxu0 0.0
      %3364 = vmatpush1.msra.mxu0 0.0
      %3365 = vmatprep.subr.mxu0 0.0
      %3366 = vmatpush1.msra.mxu0 0.0
      %3367 = vmatprep.subr.mxu0 0.0
      %3368 = vmatpush1.msra.mxu0 0.0
      %3369 = vmatprep.subr.mxu0 0.0
      %3370 = vmatpush1.msra.mxu0 0.0
      %3371 = vmatprep.subr.mxu0 0.0
      %3372 = vmatpush1.msra.mxu0 0.0
      %3373 = vmatprep.subr.mxu0 0.0
      %3374 = vmatpush1.msra.mxu0 0.0
      %3375 = vmatprep.subr.mxu0 0.0
      %3376 = vmatpush1.msra.mxu0 0.0
      %3377 = vmatprep.subr.mxu0 0.0
      %3378 = vmatpush1.msra.mxu0 0.0
      %3379 = vmatprep.subr.mxu0 0.0
      %3380 = vmatpush1.msra.mxu0 0.0
      %3381 = vmatprep.subr.mxu0 0.0
      %3382 = vmatpush1.msra.mxu0 0.0
      %3383 = vmatprep.subr.mxu0 0.0
      %3384 = vmatpush1.msra.mxu0 0.0
      %3385 = vmatprep.subr.mxu0 0.0
      %3386 = vmatpush1.msra.mxu0 0.0
      %3387 = vmatprep.subr.mxu0 0.0
      %3388 = vmatpush1.msra.mxu0 0.0
      %3389 = vmatprep.subr.mxu0 0.0
      %3390 = vmatpush1.msra.mxu0 0.0
      %3391 = vmatprep.subr.mxu0 0.0
      %3392 = vmatpush1.msra.mxu0 0.0
      %3393 = vmatprep.subr.mxu0 0.0
      %3394 = vmatpush1.msra.mxu0 0.0
      %3395 = vmatprep.mubr.f32.mxu0 0.0
      %3396 = vmatmul.mubr.f32.gmra.mrb[0].mxu0 %v3329
      %v3397 = vpop.f32.mrb[0].mxu0
      %v3398 = vadd.f32 0.0, %v3397
      %v3399 = vpop.f32.mrb[0].mxu0
      %v3400 = vadd.f32 0.0, %v3399
      %3401 = vdwg.mxu0
      %s3402 = scalar_lea.vmem %s9, 16
      %v3403 = vld [vmem:[%s3402] sm:$0x3]
      %3404 = vrot.lane.b32.xlu0 %v3398, 60
      %v3405 = vpop.permute.xlu0 %3404
      %3406 = vrot.lane.b32.xlu0 %v3400, 60
      %v3407 = vpop.permute.xlu0 %3406
      %v3408 = vsel %vm2817, %v3405, %v3407
      %v3409 = vsel %vm2817, %v3407, %v3405
      %v3411 = vlaneseq
      %v3412 = vshrl.u32 %v3411, 7
      %v3413 = vsub.s32 0, %v3412
      %v3414 = vrot.slane %v3403, %v3413
      %v3415 = vlaneseq
      %v3416 = vshrl.u32 %v3415, 7
      %v3417 = vsub.s32 1, %v3416
      %v3418 = vrot.slane %v3403, %v3417
      %v3421 = vmul.f32 %v3414, %v3408
      %v3422 = vmul.f32 %v3418, %v3409
      %v3423 = vadd.f32 %v3324, %v3421
      %v3424 = vadd.f32 %v3325, %v3422
      %v3425 = vld [vmem:[%s8] sm:$0xf]
      %3427 = vset.pattern.permute.xlu0 0
      %3428 = vperm.xlu0 %3427, %v3425
      %v3429 = vpop.permute.xlu0 %3428
      %v3431 = vadd.f32 %v3423, %v3429
      %v3432 = vadd.f32 %v3424, %v3429
      %v3433 = vmax.f32 %v3431, 0.0
      %v3434 = vmax.f32 %v3432, 0.0
      %v3435 = vld [vmem:[%s12] sm:$0x3]
      %v3437 = vlaneseq
      %v3438 = vshrl.u32 %v3437, 7
      %v3439 = vsub.s32 0, %v3438
      %v3440 = vrot.slane %v3435, %v3439
      %v3441 = vlaneseq
      %v3442 = vshrl.u32 %v3441, 7
      %v3443 = vsub.s32 1, %v3442
      %v3444 = vrot.slane %v3435, %v3443
      %v3447 = vmul.f32 %v3433, %v3440
      %v3448 = vmul.f32 %v3434, %v3444
      %v3449 = vld [vmem:[%s10] sm:$0xff]
      %v3450 = vld [vmem:[%s10 + $0x8] sm:$0xff]
      %s3451 = scalar_lea.vmem %s10, 16
      %v3452 = vld [vmem:[%s3451] sm:$0xff]
      %v3453 = vld [vmem:[%s3451 + $0x8] sm:$0xff]
      %3454 = vrot.lane.b32.xlu0 %v3447, 2
      %v3455 = vpop.permute.xlu0 %3454
      %3456 = vrot.lane.b32.xlu0 %v3448, 2
      %v3457 = vpop.permute.xlu0 %3456
      %v3458 = vsel %vm1859, %v3455, %v3457
      %v3459 = vsel %vm1859, %v3457, %v3455
      %vm3460 = vcmask 31744
      %v3462 = vsel %vm3460, %v3452, 0
      %v3465 = vsel %vm3460, %v3453, 0
      %vm3467 = vcmask 1043456
      %v3469 = vsel %vm3467, %v3459, 0
      %v3472 = vsel %vm3467, %v3458, 0
      %3474 = vmatprep.subr.mxu0 %v3472
      %3475 = vmatpush1.msra.mxu0 %v3469
      %3476 = vmatprep.subr.mxu0 0.0
      %3477 = vmatpush1.msra.mxu0 0.0
      %3478 = vmatprep.subr.mxu0 0.0
      %3479 = vmatpush1.msra.mxu0 0.0
      %3480 = vmatprep.subr.mxu0 0.0
      %3481 = vmatpush1.msra.mxu0 0.0
      %3482 = vmatprep.subr.mxu0 0.0
      %3483 = vmatpush1.msra.mxu0 0.0
      %3484 = vmatprep.subr.mxu0 0.0
      %3485 = vmatpush1.msra.mxu0 0.0
      %3486 = vmatprep.subr.mxu0 0.0
      %3487 = vmatpush1.msra.mxu0 0.0
      %3488 = vmatprep.subr.mxu0 0.0
      %3489 = vmatpush1.msra.mxu0 0.0
      %3490 = vmatprep.subr.mxu0 0.0
      %3491 = vmatpush1.msra.mxu0 0.0
      %3492 = vmatprep.subr.mxu0 0.0
      %3493 = vmatpush1.msra.mxu0 0.0
      %3494 = vmatprep.subr.mxu0 0.0
      %3495 = vmatpush1.msra.mxu0 0.0
      %3496 = vmatprep.subr.mxu0 0.0
      %3497 = vmatpush1.msra.mxu0 0.0
      %3498 = vmatprep.subr.mxu0 0.0
      %3499 = vmatpush1.msra.mxu0 0.0
      %3500 = vmatprep.subr.mxu0 0.0
      %3501 = vmatpush1.msra.mxu0 0.0
      %3502 = vmatprep.subr.mxu0 0.0
      %3503 = vmatpush1.msra.mxu0 0.0
      %3504 = vmatprep.subr.mxu0 0.0
      %3505 = vmatpush1.msra.mxu0 0.0
      %3506 = vmatprep.subr.mxu0 0.0
      %3507 = vmatpush1.msra.mxu0 0.0
      %3508 = vmatprep.subr.mxu0 0.0
      %3509 = vmatpush1.msra.mxu0 0.0
      %3510 = vmatprep.subr.mxu0 0.0
      %3511 = vmatpush1.msra.mxu0 0.0
      %3512 = vmatprep.subr.mxu0 0.0
      %3513 = vmatpush1.msra.mxu0 0.0
      %3514 = vmatprep.subr.mxu0 0.0
      %3515 = vmatpush1.msra.mxu0 0.0
      %3516 = vmatprep.subr.mxu0 0.0
      %3517 = vmatpush1.msra.mxu0 0.0
      %3518 = vmatprep.subr.mxu0 0.0
      %3519 = vmatpush1.msra.mxu0 0.0
      %3520 = vmatprep.subr.mxu0 0.0
      %3521 = vmatpush1.msra.mxu0 0.0
      %3522 = vmatprep.subr.mxu0 0.0
      %3523 = vmatpush1.msra.mxu0 0.0
      %3524 = vmatprep.subr.mxu0 0.0
      %3525 = vmatpush1.msra.mxu0 0.0
      %3526 = vmatprep.subr.mxu0 0.0
      %3527 = vmatpush1.msra.mxu0 0.0
      %3528 = vmatprep.subr.mxu0 0.0
      %3529 = vmatpush1.msra.mxu0 0.0
      %3530 = vmatprep.subr.mxu0 0.0
      %3531 = vmatpush1.msra.mxu0 0.0
      %3532 = vmatprep.subr.mxu0 0.0
      %3533 = vmatpush1.msra.mxu0 0.0
      %3534 = vmatprep.subr.mxu0 0.0
      %3535 = vmatpush1.msra.mxu0 0.0
      %3536 = vmatprep.subr.mxu0 0.0
      %3537 = vmatpush1.msra.mxu0 0.0
      %3538 = vmatprep.mubr.f32.mxu0 0.0
      %3539 = vmatmul.mubr.f32.gmra.mrb[0].mxu0 %v3462
      %v3540 = vpop.f32.mrb[0].mxu0
      %v3541 = vadd.f32 0.0, %v3540
      %v3542 = vpop.f32.mrb[0].mxu0
      %v3543 = vadd.f32 0.0, %v3542
      %3544 = vmatprep.mubr.f32.mxu0 0.0
      %3545 = vmatmul.mubr.f32.gmra.mrb[0].mxu0 %v3465
      %v3546 = vpop.f32.mrb[0].mxu0
      %v3547 = vadd.f32 0.0, %v3546
      %v3548 = vpop.f32.mrb[0].mxu0
      %v3549 = vadd.f32 0.0, %v3548
      %3550 = vdwg.mxu0
      %v3552 = vsel %vm3460, %v3449, 0
      %v3555 = vsel %vm3460, %v3450, 0
      %v3558 = vsel %vm3467, %v3447, 0
      %v3561 = vsel %vm3467, %v3448, 0
      %3563 = vmatprep.subr.mxu0 %v3561
      %3564 = vmatpush1.msra.mxu0 %v3558
      %3565 = vmatprep.subr.mxu0 0.0
      %3566 = vmatpush1.msra.mxu0 0.0
      %3567 = vmatprep.subr.mxu0 0.0
      %3568 = vmatpush1.msra.mxu0 0.0
      %3569 = vmatprep.subr.mxu0 0.0
      %3570 = vmatpush1.msra.mxu0 0.0
      %3571 = vmatprep.subr.mxu0 0.0
      %3572 = vmatpush1.msra.mxu0 0.0
      %3573 = vmatprep.subr.mxu0 0.0
      %3574 = vmatpush1.msra.mxu0 0.0
      %3575 = vmatprep.subr.mxu0 0.0
      %3576 = vmatpush1.msra.mxu0 0.0
      %3577 = vmatprep.subr.mxu0 0.0
      %3578 = vmatpush1.msra.mxu0 0.0
      %3579 = vmatprep.subr.mxu0 0.0
      %3580 = vmatpush1.msra.mxu0 0.0
      %3581 = vmatprep.subr.mxu0 0.0
      %3582 = vmatpush1.msra.mxu0 0.0
      %3583 = vmatprep.subr.mxu0 0.0
      %3584 = vmatpush1.msra.mxu0 0.0
      %3585 = vmatprep.subr.mxu0 0.0
      %3586 = vmatpush1.msra.mxu0 0.0
      %3587 = vmatprep.subr.mxu0 0.0
      %3588 = vmatpush1.msra.mxu0 0.0
      %3589 = vmatprep.subr.mxu0 0.0
      %3590 = vmatpush1.msra.mxu0 0.0
      %3591 = vmatprep.subr.mxu0 0.0
      %3592 = vmatpush1.msra.mxu0 0.0
      %3593 = vmatprep.subr.mxu0 0.0
      %3594 = vmatpush1.msra.mxu0 0.0
      %3595 = vmatprep.subr.mxu0 0.0
      %3596 = vmatpush1.msra.mxu0 0.0
      %3597 = vmatprep.subr.mxu0 0.0
      %3598 = vmatpush1.msra.mxu0 0.0
      %3599 = vmatprep.subr.mxu0 0.0
      %3600 = vmatpush1.msra.mxu0 0.0
      %3601 = vmatprep.subr.mxu0 0.0
      %3602 = vmatpush1.msra.mxu0 0.0
      %3603 = vmatprep.subr.mxu0 0.0
      %3604 = vmatpush1.msra.mxu0 0.0
      %3605 = vmatprep.subr.mxu0 0.0
      %3606 = vmatpush1.msra.mxu0 0.0
      %3607 = vmatprep.subr.mxu0 0.0
      %3608 = vmatpush1.msra.mxu0 0.0
      %3609 = vmatprep.subr.mxu0 0.0
      %3610 = vmatpush1.msra.mxu0 0.0
      %3611 = vmatprep.subr.mxu0 0.0
      %3612 = vmatpush1.msra.mxu0 0.0
      %3613 = vmatprep.subr.mxu0 0.0
      %3614 = vmatpush1.msra.mxu0 0.0
      %3615 = vmatprep.subr.mxu0 0.0
      %3616 = vmatpush1.msra.mxu0 0.0
      %3617 = vmatprep.subr.mxu0 0.0
      %3618 = vmatpush1.msra.mxu0 0.0
      %3619 = vmatprep.subr.mxu0 0.0
      %3620 = vmatpush1.msra.mxu0 0.0
      %3621 = vmatprep.subr.mxu0 0.0
      %3622 = vmatpush1.msra.mxu0 0.0
      %3623 = vmatprep.subr.mxu0 0.0
      %3624 = vmatpush1.msra.mxu0 0.0
      %3625 = vmatprep.subr.mxu0 0.0
      %3626 = vmatpush1.msra.mxu0 0.0
      %3627 = vmatprep.mubr.f32.mxu0 0.0
      %3628 = vmatmul.mubr.f32.gmra.mrb[0].mxu0 %v3552
      %v3629 = vpop.f32.mrb[0].mxu0
      %v3630 = vadd.f32 %v3541, %v3629
      %v3631 = vpop.f32.mrb[0].mxu0
      %v3632 = vadd.f32 %v3543, %v3631
      %3633 = vmatprep.mubr.f32.mxu0 0.0
      %3634 = vmatmul.mubr.f32.gmra.mrb[0].mxu0 %v3555
      %v3635 = vpop.f32.mrb[0].mxu0
      %v3636 = vadd.f32 %v3547, %v3635
      %v3637 = vpop.f32.mrb[0].mxu0
      %v3638 = vadd.f32 %v3549, %v3637
      %3639 = vdwg.mxu0
      %s3640 = scalar_lea.vmem %s10, 32
      %v3641 = vld [vmem:[%s3640] sm:$0xff]
      %v3642 = vld [vmem:[%s3640 + $0x8] sm:$0xff]
      %3643 = vrot.lane.b32.xlu0 %v3447, 32
      %v3644 = vpop.permute.xlu0 %3643
      %3645 = vrot.lane.b32.xlu0 %v3448, 32
      %v3646 = vpop.permute.xlu0 %3645
      %v3647 = vsel %vm1619, %v3644, %v3646
      %v3648 = vsel %vm1619, %v3646, %v3644
      %v3650 = vsel %vm3460, %v3641, 0
      %v3653 = vsel %vm3460, %v3642, 0
      %v3656 = vsel %vm3467, %v3648, 0
      %v3659 = vsel %vm3467, %v3647, 0
      %3661 = vmatprep.subr.mxu0 %v3659
      %3662 = vmatpush1.msra.mxu0 %v3656
      %3663 = vmatprep.subr.mxu0 0.0
      %3664 = vmatpush1.msra.mxu0 0.0
      %3665 = vmatprep.subr.mxu0 0.0
      %3666 = vmatpush1.msra.mxu0 0.0
      %3667 = vmatprep.subr.mxu0 0.0
      %3668 = vmatpush1.msra.mxu0 0.0
      %3669 = vmatprep.subr.mxu0 0.0
      %3670 = vmatpush1.msra.mxu0 0.0
      %3671 = vmatprep.subr.mxu0 0.0
      %3672 = vmatpush1.msra.mxu0 0.0
      %3673 = vmatprep.subr.mxu0 0.0
      %3674 = vmatpush1.msra.mxu0 0.0
      %3675 = vmatprep.subr.mxu0 0.0
      %3676 = vmatpush1.msra.mxu0 0.0
      %3677 = vmatprep.subr.mxu0 0.0
      %3678 = vmatpush1.msra.mxu0 0.0
      %3679 = vmatprep.subr.mxu0 0.0
      %3680 = vmatpush1.msra.mxu0 0.0
      %3681 = vmatprep.subr.mxu0 0.0
      %3682 = vmatpush1.msra.mxu0 0.0
      %3683 = vmatprep.subr.mxu0 0.0
      %3684 = vmatpush1.msra.mxu0 0.0
      %3685 = vmatprep.subr.mxu0 0.0
      %3686 = vmatpush1.msra.mxu0 0.0
      %3687 = vmatprep.subr.mxu0 0.0
      %3688 = vmatpush1.msra.mxu0 0.0
      %3689 = vmatprep.subr.mxu0 0.0
      %3690 = vmatpush1.msra.mxu0 0.0
      %3691 = vmatprep.subr.mxu0 0.0
      %3692 = vmatpush1.msra.mxu0 0.0
      %3693 = vmatprep.subr.mxu0 0.0
      %3694 = vmatpush1.msra.mxu0 0.0
      %3695 = vmatprep.subr.mxu0 0.0
      %3696 = vmatpush1.msra.mxu0 0.0
      %3697 = vmatprep.subr.mxu0 0.0
      %3698 = vmatpush1.msra.mxu0 0.0
      %3699 = vmatprep.subr.mxu0 0.0
      %3700 = vmatpush1.msra.mxu0 0.0
      %3701 = vmatprep.subr.mxu0 0.0
      %3702 = vmatpush1.msra.mxu0 0.0
      %3703 = vmatprep.subr.mxu0 0.0
      %3704 = vmatpush1.msra.mxu0 0.0
      %3705 = vmatprep.subr.mxu0 0.0
      %3706 = vmatpush1.msra.mxu0 0.0
      %3707 = vmatprep.subr.mxu0 0.0
      %3708 = vmatpush1.msra.mxu0 0.0
      %3709 = vmatprep.subr.mxu0 0.0
      %3710 = vmatpush1.msra.mxu0 0.0
      %3711 = vmatprep.subr.mxu0 0.0
      %3712 = vmatpush1.msra.mxu0 0.0
      %3713 = vmatprep.subr.mxu0 0.0
      %3714 = vmatpush1.msra.mxu0 0.0
      %3715 = vmatprep.subr.mxu0 0.0
      %3716 = vmatpush1.msra.mxu0 0.0
      %3717 = vmatprep.subr.mxu0 0.0
      %3718 = vmatpush1.msra.mxu0 0.0
      %3719 = vmatprep.subr.mxu0 0.0
      %3720 = vmatpush1.msra.mxu0 0.0
      %3721 = vmatprep.subr.mxu0 0.0
      %3722 = vmatpush1.msra.mxu0 0.0
      %3723 = vmatprep.subr.mxu0 0.0
      %3724 = vmatpush1.msra.mxu0 0.0
      %3725 = vmatprep.mubr.f32.mxu0 0.0
      %3726 = vmatmul.mubr.f32.gmra.mrb[0].mxu0 %v3650
      %v3727 = vpop.f32.mrb[0].mxu0
      %v3728 = vadd.f32 0.0, %v3727
      %v3729 = vpop.f32.mrb[0].mxu0
      %v3730 = vadd.f32 0.0, %v3729
      %3731 = vmatprep.mubr.f32.mxu0 0.0
      %3732 = vmatmul.mubr.f32.gmra.mrb[0].mxu0 %v3653
      %v3733 = vpop.f32.mrb[0].mxu0
      %v3734 = vadd.f32 0.0, %v3733
      %v3735 = vpop.f32.mrb[0].mxu0
      %v3736 = vadd.f32 0.0, %v3735
      %3737 = vdwg.mxu0
      %v3738 = vadd.f32 %v3630, %v3728
      %v3739 = vadd.f32 %v3632, %v3730
      %v3740 = vadd.f32 %v3636, %v3734
      %v3741 = vadd.f32 %v3638, %v3736
      %s3742 = scalar_lea.vmem %s10, 48
      %v3743 = vld [vmem:[%s3742] sm:$0xff]
      %v3744 = vld [vmem:[%s3742 + $0x8] sm:$0xff]
      %3745 = vrot.lane.b32.xlu0 %v3447, 34
      %v3746 = vpop.permute.xlu0 %3745
      %3747 = vrot.lane.b32.xlu0 %v3448, 34
      %v3748 = vpop.permute.xlu0 %3747
      %v3749 = vsel %vm1503, %v3746, %v3748
      %v3750 = vsel %vm1503, %v3748, %v3746
      %v3752 = vsel %vm3460, %v3743, 0
      %v3755 = vsel %vm3460, %v3744, 0
      %v3758 = vsel %vm3467, %v3750, 0
      %v3761 = vsel %vm3467, %v3749, 0
      %3763 = vmatprep.subr.mxu0 %v3761
      %3764 = vmatpush1.msra.mxu0 %v3758
      %3765 = vmatprep.subr.mxu0 0.0
      %3766 = vmatpush1.msra.mxu0 0.0
      %3767 = vmatprep.subr.mxu0 0.0
      %3768 = vmatpush1.msra.mxu0 0.0
      %3769 = vmatprep.subr.mxu0 0.0
      %3770 = vmatpush1.msra.mxu0 0.0
      %3771 = vmatprep.subr.mxu0 0.0
      %3772 = vmatpush1.msra.mxu0 0.0
      %3773 = vmatprep.subr.mxu0 0.0
      %3774 = vmatpush1.msra.mxu0 0.0
      %3775 = vmatprep.subr.mxu0 0.0
      %3776 = vmatpush1.msra.mxu0 0.0
      %3777 = vmatprep.subr.mxu0 0.0
      %3778 = vmatpush1.msra.mxu0 0.0
      %3779 = vmatprep.subr.mxu0 0.0
      %3780 = vmatpush1.msra.mxu0 0.0
      %3781 = vmatprep.subr.mxu0 0.0
      %3782 = vmatpush1.msra.mxu0 0.0
      %3783 = vmatprep.subr.mxu0 0.0
      %3784 = vmatpush1.msra.mxu0 0.0
      %3785 = vmatprep.subr.mxu0 0.0
      %3786 = vmatpush1.msra.mxu0 0.0
      %3787 = vmatprep.subr.mxu0 0.0
      %3788 = vmatpush1.msra.mxu0 0.0
      %3789 = vmatprep.subr.mxu0 0.0
      %3790 = vmatpush1.msra.mxu0 0.0
      %3791 = vmatprep.subr.mxu0 0.0
      %3792 = vmatpush1.msra.mxu0 0.0
      %3793 = vmatprep.subr.mxu0 0.0
      %3794 = vmatpush1.msra.mxu0 0.0
      %3795 = vmatprep.subr.mxu0 0.0
      %3796 = vmatpush1.msra.mxu0 0.0
      %3797 = vmatprep.subr.mxu0 0.0
      %3798 = vmatpush1.msra.mxu0 0.0
      %3799 = vmatprep.subr.mxu0 0.0
      %3800 = vmatpush1.msra.mxu0 0.0
      %3801 = vmatprep.subr.mxu0 0.0
      %3802 = vmatpush1.msra.mxu0 0.0
      %3803 = vmatprep.subr.mxu0 0.0
      %3804 = vmatpush1.msra.mxu0 0.0
      %3805 = vmatprep.subr.mxu0 0.0
      %3806 = vmatpush1.msra.mxu0 0.0
      %3807 = vmatprep.subr.mxu0 0.0
      %3808 = vmatpush1.msra.mxu0 0.0
      %3809 = vmatprep.subr.mxu0 0.0
      %3810 = vmatpush1.msra.mxu0 0.0
      %3811 = vmatprep.subr.mxu0 0.0
      %3812 = vmatpush1.msra.mxu0 0.0
      %3813 = vmatprep.subr.mxu0 0.0
      %3814 = vmatpush1.msra.mxu0 0.0
      %3815 = vmatprep.subr.mxu0 0.0
      %3816 = vmatpush1.msra.mxu0 0.0
      %3817 = vmatprep.subr.mxu0 0.0
      %3818 = vmatpush1.msra.mxu0 0.0
      %3819 = vmatprep.subr.mxu0 0.0
      %3820 = vmatpush1.msra.mxu0 0.0
      %3821 = vmatprep.subr.mxu0 0.0
      %3822 = vmatpush1.msra.mxu0 0.0
      %3823 = vmatprep.subr.mxu0 0.0
      %3824 = vmatpush1.msra.mxu0 0.0
      %3825 = vmatprep.subr.mxu0 0.0
      %3826 = vmatpush1.msra.mxu0 0.0
      %3827 = vmatprep.mubr.f32.mxu0 0.0
      %3828 = vmatmul.mubr.f32.gmra.mrb[0].mxu0 %v3752
      %v3829 = vpop.f32.mrb[0].mxu0
      %v3830 = vadd.f32 0.0, %v3829
      %v3831 = vpop.f32.mrb[0].mxu0
      %v3832 = vadd.f32 0.0, %v3831
      %3833 = vmatprep.mubr.f32.mxu0 0.0
      %3834 = vmatmul.mubr.f32.gmra.mrb[0].mxu0 %v3755
      %v3835 = vpop.f32.mrb[0].mxu0
      %v3836 = vadd.f32 0.0, %v3835
      %v3837 = vpop.f32.mrb[0].mxu0
      %v3838 = vadd.f32 0.0, %v3837
      %3839 = vdwg.mxu0
      %v3840 = vadd.f32 %v3738, %v3830
      %v3841 = vadd.f32 %v3739, %v3832
      %v3842 = vadd.f32 %v3740, %v3836
      %v3843 = vadd.f32 %v3741, %v3838
      %v3844 = vld [vmem:[%s11] sm:$0xff]
      %v3845 = vld [vmem:[%s11 + $0x8] sm:$0xff]
      %3847 = vset.pattern.permute.xlu0 0
      %3848 = vperm.xlu0 %3847, %v3844
      %v3849 = vpop.permute.xlu0 %3848
      %3852 = vset.pattern.permute.xlu0 0
      %3853 = vperm.xlu0 %3852, %v3845
      %v3854 = vpop.permute.xlu0 %3853
      %v3856 = vadd.f32 %v3840, %v3849
      %v3857 = vadd.f32 %v3841, %v3849
      %v3858 = vadd.f32 %v3842, %v3854
      %v3859 = vadd.f32 %v3843, %v3854
      %v3860 = vmax.f32 %v3856, 0.0
      %v3861 = vmax.f32 %v3857, 0.0
      %v3862 = vmax.f32 %v3858, 0.0
      %v3863 = vmax.f32 %v3859, 0.0
      %v3864 = vld [vmem:[%s15] sm:$0x3]
      %v3866 = vlaneseq
      %v3867 = vshrl.u32 %v3866, 7
      %v3868 = vsub.s32 0, %v3867
      %v3869 = vrot.slane %v3864, %v3868
      %v3870 = vlaneseq
      %v3871 = vshrl.u32 %v3870, 7
      %v3872 = vsub.s32 1, %v3871
      %v3873 = vrot.slane %v3864, %v3872
      %v3876 = vmul.f32 %v3860, %v3869
      %v3877 = vmul.f32 %v3861, %v3873
      %v3878 = vmul.f32 %v3862, %v3869
      %v3879 = vmul.f32 %v3863, %v3873
      %v3880 = vld [vmem:[%s13] sm:$0xff]
      %v3881 = vld [vmem:[%s13 + $0x8] sm:$0xff]
      %v3882 = vld [vmem:[%s13 + $0x10] sm:$0xff]
      %v3883 = vld [vmem:[%s13 + $0x18] sm:$0xff]
      %s3884 = scalar_lea.vmem %s13, 32
      %v3885 = vld [vmem:[%s3884] sm:$0xff]
      %v3886 = vld [vmem:[%s3884 + $0x8] sm:$0xff]
      %v3887 = vld [vmem:[%s3884 + $0x10] sm:$0xff]
      %v3888 = vld [vmem:[%s3884 + $0x18] sm:$0xff]
      %3889 = vrot.lane.b32.xlu0 %v3876, 1
      %v3890 = vpop.permute.xlu0 %3889
      %3891 = vrot.lane.b32.xlu0 %v3878, 1
      %v3892 = vpop.permute.xlu0 %3891
      %3893 = vrot.lane.b32.xlu0 %v3877, 1
      %v3894 = vpop.permute.xlu0 %3893
      %3895 = vrot.lane.b32.xlu0 %v3879, 1
      %v3896 = vpop.permute.xlu0 %3895
      %v3897 = vsel %vm828, %v3890, %v3894
      %v3898 = vsel %vm828, %v3892, %v3896
      %v3899 = vsel %vm828, %v3894, %v3890
      %v3900 = vsel %vm828, %v3896, %v3892
      %v3902 = vsel %vm2539, %v3885, 0
      %v3905 = vsel %vm2539, %v3886, 0
      %v3908 = vsel %vm2539, %v3887, 0
      %v3911 = vsel %vm2539, %v3888, 0
      %3913 = vmatprep.subr.mxu0 %v3897
      %3914 = vmatpush1.msra.mxu0 %v3899
      %3915 = vmatprep.subr.mxu0 %v3898
      %3916 = vmatpush1.msra.mxu0 %v3900
      %3917 = vmatprep.subr.mxu0 0.0
      %3918 = vmatpush1.msra.mxu0 0.0
      %3919 = vmatprep.subr.mxu0 0.0
      %3920 = vmatpush1.msra.mxu0 0.0
      %3921 = vmatprep.subr.mxu0 0.0
      %3922 = vmatpush1.msra.mxu0 0.0
      %3923 = vmatprep.subr.mxu0 0.0
      %3924 = vmatpush1.msra.mxu0 0.0
      %3925 = vmatprep.subr.mxu0 0.0
      %3926 = vmatpush1.msra.mxu0 0.0
      %3927 = vmatprep.subr.mxu0 0.0
      %3928 = vmatpush1.msra.mxu0 0.0
      %3929 = vmatprep.subr.mxu0 0.0
      %3930 = vmatpush1.msra.mxu0 0.0
      %3931 = vmatprep.subr.mxu0 0.0
      %3932 = vmatpush1.msra.mxu0 0.0
      %3933 = vmatprep.subr.mxu0 0.0
      %3934 = vmatpush1.msra.mxu0 0.0
      %3935 = vmatprep.subr.mxu0 0.0
      %3936 = vmatpush1.msra.mxu0 0.0
      %3937 = vmatprep.subr.mxu0 0.0
      %3938 = vmatpush1.msra.mxu0 0.0
      %3939 = vmatprep.subr.mxu0 0.0
      %3940 = vmatpush1.msra.mxu0 0.0
      %3941 = vmatprep.subr.mxu0 0.0
      %3942 = vmatpush1.msra.mxu0 0.0
      %3943 = vmatprep.subr.mxu0 0.0
      %3944 = vmatpush1.msra.mxu0 0.0
      %3945 = vmatprep.subr.mxu0 0.0
      %3946 = vmatpush1.msra.mxu0 0.0
      %3947 = vmatprep.subr.mxu0 0.0
      %3948 = vmatpush1.msra.mxu0 0.0
      %3949 = vmatprep.subr.mxu0 0.0
      %3950 = vmatpush1.msra.mxu0 0.0
      %3951 = vmatprep.subr.mxu0 0.0
      %3952 = vmatpush1.msra.mxu0 0.0
      %3953 = vmatprep.subr.mxu0 0.0
      %3954 = vmatpush1.msra.mxu0 0.0
      %3955 = vmatprep.subr.mxu0 0.0
      %3956 = vmatpush1.msra.mxu0 0.0
      %3957 = vmatprep.subr.mxu0 0.0
      %3958 = vmatpush1.msra.mxu0 0.0
      %3959 = vmatprep.subr.mxu0 0.0
      %3960 = vmatpush1.msra.mxu0 0.0
      %3961 = vmatprep.subr.mxu0 0.0
      %3962 = vmatpush1.msra.mxu0 0.0
      %3963 = vmatprep.subr.mxu0 0.0
      %3964 = vmatpush1.msra.mxu0 0.0
      %3965 = vmatprep.subr.mxu0 0.0
      %3966 = vmatpush1.msra.mxu0 0.0
      %3967 = vmatprep.subr.mxu0 0.0
      %3968 = vmatpush1.msra.mxu0 0.0
      %3969 = vmatprep.subr.mxu0 0.0
      %3970 = vmatpush1.msra.mxu0 0.0
      %3971 = vmatprep.subr.mxu0 0.0
      %3972 = vmatpush1.msra.mxu0 0.0
      %3973 = vmatprep.subr.mxu0 0.0
      %3974 = vmatpush1.msra.mxu0 0.0
      %3975 = vmatprep.subr.mxu0 0.0
      %3976 = vmatpush1.msra.mxu0 0.0
      %3977 = vmatprep.mubr.f32.mxu0 0.0
      %3978 = vmatmul.mubr.f32.gmra.mrb[0].mxu0 %v3902
      %v3979 = vpop.f32.mrb[0].mxu0
      %v3980 = vadd.f32 0.0, %v3979
      %v3981 = vpop.f32.mrb[0].mxu0
      %v3982 = vadd.f32 0.0, %v3981
      %3983 = vmatprep.mubr.f32.mxu0 0.0
      %3984 = vmatmul.mubr.f32.gmra.mrb[0].mxu0 %v3905
      %v3985 = vpop.f32.mrb[0].mxu0
      %v3986 = vadd.f32 0.0, %v3985
      %v3987 = vpop.f32.mrb[0].mxu0
      %v3988 = vadd.f32 0.0, %v3987
      %3989 = vmatprep.mubr.f32.mxu0 0.0
      %3990 = vmatmul.mubr.f32.gmra.mrb[0].mxu0 %v3908
      %v3991 = vpop.f32.mrb[0].mxu0
      %v3992 = vadd.f32 0.0, %v3991
      %v3993 = vpop.f32.mrb[0].mxu0
      %v3994 = vadd.f32 0.0, %v3993
      %3995 = vmatprep.mubr.f32.mxu0 0.0
      %3996 = vmatmul.mubr.f32.gmra.mrb[0].mxu0 %v3911
      %v3997 = vpop.f32.mrb[0].mxu0
      %v3998 = vadd.f32 0.0, %v3997
      %v3999 = vpop.f32.mrb[0].mxu0
      %v4000 = vadd.f32 0.0, %v3999
      %4001 = vdwg.mxu0
      %v4003 = vsel %vm2539, %v3880, 0
      %v4006 = vsel %vm2539, %v3881, 0
      %v4009 = vsel %vm2539, %v3882, 0
      %v4012 = vsel %vm2539, %v3883, 0
      %4014 = vmatprep.subr.mxu0 %v3877
      %4015 = vmatpush1.msra.mxu0 %v3876
      %4016 = vmatprep.subr.mxu0 %v3879
      %4017 = vmatpush1.msra.mxu0 %v3878
      %4018 = vmatprep.subr.mxu0 0.0
      %4019 = vmatpush1.msra.mxu0 0.0
      %4020 = vmatprep.subr.mxu0 0.0
      %4021 = vmatpush1.msra.mxu0 0.0
      %4022 = vmatprep.subr.mxu0 0.0
      %4023 = vmatpush1.msra.mxu0 0.0
      %4024 = vmatprep.subr.mxu0 0.0
      %4025 = vmatpush1.msra.mxu0 0.0
      %4026 = vmatprep.subr.mxu0 0.0
      %4027 = vmatpush1.msra.mxu0 0.0
      %4028 = vmatprep.subr.mxu0 0.0
      %4029 = vmatpush1.msra.mxu0 0.0
      %4030 = vmatprep.subr.mxu0 0.0
      %4031 = vmatpush1.msra.mxu0 0.0
      %4032 = vmatprep.subr.mxu0 0.0
      %4033 = vmatpush1.msra.mxu0 0.0
      %4034 = vmatprep.subr.mxu0 0.0
      %4035 = vmatpush1.msra.mxu0 0.0
      %4036 = vmatprep.subr.mxu0 0.0
      %4037 = vmatpush1.msra.mxu0 0.0
      %4038 = vmatprep.subr.mxu0 0.0
      %4039 = vmatpush1.msra.mxu0 0.0
      %4040 = vmatprep.subr.mxu0 0.0
      %4041 = vmatpush1.msra.mxu0 0.0
      %4042 = vmatprep.subr.mxu0 0.0
      %4043 = vmatpush1.msra.mxu0 0.0
      %4044 = vmatprep.subr.mxu0 0.0
      %4045 = vmatpush1.msra.mxu0 0.0
      %4046 = vmatprep.subr.mxu0 0.0
      %4047 = vmatpush1.msra.mxu0 0.0
      %4048 = vmatprep.subr.mxu0 0.0
      %4049 = vmatpush1.msra.mxu0 0.0
      %4050 = vmatprep.subr.mxu0 0.0
      %4051 = vmatpush1.msra.mxu0 0.0
      %4052 = vmatprep.subr.mxu0 0.0
      %4053 = vmatpush1.msra.mxu0 0.0
      %4054 = vmatprep.subr.mxu0 0.0
      %4055 = vmatpush1.msra.mxu0 0.0
      %4056 = vmatprep.subr.mxu0 0.0
      %4057 = vmatpush1.msra.mxu0 0.0
      %4058 = vmatprep.subr.mxu0 0.0
      %4059 = vmatpush1.msra.mxu0 0.0
      %4060 = vmatprep.subr.mxu0 0.0
      %4061 = vmatpush1.msra.mxu0 0.0
      %4062 = vmatprep.subr.mxu0 0.0
      %4063 = vmatpush1.msra.mxu0 0.0
      %4064 = vmatprep.subr.mxu0 0.0
      %4065 = vmatpush1.msra.mxu0 0.0
      %4066 = vmatprep.subr.mxu0 0.0
      %4067 = vmatpush1.msra.mxu0 0.0
      %4068 = vmatprep.subr.mxu0 0.0
      %4069 = vmatpush1.msra.mxu0 0.0
      %4070 = vmatprep.subr.mxu0 0.0
      %4071 = vmatpush1.msra.mxu0 0.0
      %4072 = vmatprep.subr.mxu0 0.0
      %4073 = vmatpush1.msra.mxu0 0.0
      %4074 = vmatprep.subr.mxu0 0.0
      %4075 = vmatpush1.msra.mxu0 0.0
      %4076 = vmatprep.subr.mxu0 0.0
      %4077 = vmatpush1.msra.mxu0 0.0
      %4078 = vmatprep.mubr.f32.mxu0 0.0
      %4079 = vmatmul.mubr.f32.gmra.mrb[0].mxu0 %v4003
      %v4080 = vpop.f32.mrb[0].mxu0
      %v4081 = vadd.f32 %v3980, %v4080
      %v4082 = vpop.f32.mrb[0].mxu0
      %v4083 = vadd.f32 %v3982, %v4082
      %4084 = vmatprep.mubr.f32.mxu0 0.0
      %4085 = vmatmul.mubr.f32.gmra.mrb[0].mxu0 %v4006
      %v4086 = vpop.f32.mrb[0].mxu0
      %v4087 = vadd.f32 %v3986, %v4086
      %v4088 = vpop.f32.mrb[0].mxu0
      %v4089 = vadd.f32 %v3988, %v4088
      %4090 = vmatprep.mubr.f32.mxu0 0.0
      %4091 = vmatmul.mubr.f32.gmra.mrb[0].mxu0 %v4009
      %v4092 = vpop.f32.mrb[0].mxu0
      %v4093 = vadd.f32 %v3992, %v4092
      %v4094 = vpop.f32.mrb[0].mxu0
      %v4095 = vadd.f32 %v3994, %v4094
      %4096 = vmatprep.mubr.f32.mxu0 0.0
      %4097 = vmatmul.mubr.f32.gmra.mrb[0].mxu0 %v4012
      %v4098 = vpop.f32.mrb[0].mxu0
      %v4099 = vadd.f32 %v3998, %v4098
      %v4100 = vpop.f32.mrb[0].mxu0
      %v4101 = vadd.f32 %v4000, %v4100
      %4102 = vdwg.mxu0
      %s4103 = scalar_lea.vmem %s13, 64
      %v4104 = vld [vmem:[%s4103] sm:$0xff]
      %v4105 = vld [vmem:[%s4103 + $0x8] sm:$0xff]
      %v4106 = vld [vmem:[%s4103 + $0x10] sm:$0xff]
      %v4107 = vld [vmem:[%s4103 + $0x18] sm:$0xff]
      %4108 = vrot.lane.b32.xlu0 %v3876, 16
      %v4109 = vpop.permute.xlu0 %4108
      %4110 = vrot.lane.b32.xlu0 %v3878, 16
      %v4111 = vpop.permute.xlu0 %4110
      %4112 = vrot.lane.b32.xlu0 %v3877, 16
      %v4113 = vpop.permute.xlu0 %4112
      %4114 = vrot.lane.b32.xlu0 %v3879, 16
      %v4115 = vpop.permute.xlu0 %4114
      %v4116 = vsel %vm668, %v4109, %v4113
      %v4117 = vsel %vm668, %v4111, %v4115
      %v4118 = vsel %vm668, %v4113, %v4109
      %v4119 = vsel %vm668, %v4115, %v4111
      %v4121 = vsel %vm2539, %v4104, 0
      %v4124 = vsel %vm2539, %v4105, 0
      %v4127 = vsel %vm2539, %v4106, 0
      %v4130 = vsel %vm2539, %v4107, 0
      %4132 = vmatprep.subr.mxu0 %v4116
      %4133 = vmatpush1.msra.mxu0 %v4118
      %4134 = vmatprep.subr.mxu0 %v4117
      %4135 = vmatpush1.msra.mxu0 %v4119
      %4136 = vmatprep.subr.mxu0 0.0
      %4137 = vmatpush1.msra.mxu0 0.0
      %4138 = vmatprep.subr.mxu0 0.0
      %4139 = vmatpush1.msra.mxu0 0.0
      %4140 = vmatprep.subr.mxu0 0.0
      %4141 = vmatpush1.msra.mxu0 0.0
      %4142 = vmatprep.subr.mxu0 0.0
      %4143 = vmatpush1.msra.mxu0 0.0
      %4144 = vmatprep.subr.mxu0 0.0
      %4145 = vmatpush1.msra.mxu0 0.0
      %4146 = vmatprep.subr.mxu0 0.0
      %4147 = vmatpush1.msra.mxu0 0.0
      %4148 = vmatprep.subr.mxu0 0.0
      %4149 = vmatpush1.msra.mxu0 0.0
      %4150 = vmatprep.subr.mxu0 0.0
      %4151 = vmatpush1.msra.mxu0 0.0
      %4152 = vmatprep.subr.mxu0 0.0
      %4153 = vmatpush1.msra.mxu0 0.0
      %4154 = vmatprep.subr.mxu0 0.0
      %4155 = vmatpush1.msra.mxu0 0.0
      %4156 = vmatprep.subr.mxu0 0.0
      %4157 = vmatpush1.msra.mxu0 0.0
      %4158 = vmatprep.subr.mxu0 0.0
      %4159 = vmatpush1.msra.mxu0 0.0
      %4160 = vmatprep.subr.mxu0 0.0
      %4161 = vmatpush1.msra.mxu0 0.0
      %4162 = vmatprep.subr.mxu0 0.0
      %4163 = vmatpush1.msra.mxu0 0.0
      %4164 = vmatprep.subr.mxu0 0.0
      %4165 = vmatpush1.msra.mxu0 0.0
      %4166 = vmatprep.subr.mxu0 0.0
      %4167 = vmatpush1.msra.mxu0 0.0
      %4168 = vmatprep.subr.mxu0 0.0
      %4169 = vmatpush1.msra.mxu0 0.0
      %4170 = vmatprep.subr.mxu0 0.0
      %4171 = vmatpush1.msra.mxu0 0.0
      %4172 = vmatprep.subr.mxu0 0.0
      %4173 = vmatpush1.msra.mxu0 0.0
      %4174 = vmatprep.subr.mxu0 0.0
      %4175 = vmatpush1.msra.mxu0 0.0
      %4176 = vmatprep.subr.mxu0 0.0
      %4177 = vmatpush1.msra.mxu0 0.0
      %4178 = vmatprep.subr.mxu0 0.0
      %4179 = vmatpush1.msra.mxu0 0.0
      %4180 = vmatprep.subr.mxu0 0.0
      %4181 = vmatpush1.msra.mxu0 0.0
      %4182 = vmatprep.subr.mxu0 0.0
      %4183 = vmatpush1.msra.mxu0 0.0
      %4184 = vmatprep.subr.mxu0 0.0
      %4185 = vmatpush1.msra.mxu0 0.0
      %4186 = vmatprep.subr.mxu0 0.0
      %4187 = vmatpush1.msra.mxu0 0.0
      %4188 = vmatprep.subr.mxu0 0.0
      %4189 = vmatpush1.msra.mxu0 0.0
      %4190 = vmatprep.subr.mxu0 0.0
      %4191 = vmatpush1.msra.mxu0 0.0
      %4192 = vmatprep.subr.mxu0 0.0
      %4193 = vmatpush1.msra.mxu0 0.0
      %4194 = vmatprep.subr.mxu0 0.0
      %4195 = vmatpush1.msra.mxu0 0.0
      %4196 = vmatprep.mubr.f32.mxu0 0.0
      %4197 = vmatmul.mubr.f32.gmra.mrb[0].mxu0 %v4121
      %v4198 = vpop.f32.mrb[0].mxu0
      %v4199 = vadd.f32 0.0, %v4198
      %v4200 = vpop.f32.mrb[0].mxu0
      %v4201 = vadd.f32 0.0, %v4200
      %4202 = vmatprep.mubr.f32.mxu0 0.0
      %4203 = vmatmul.mubr.f32.gmra.mrb[0].mxu0 %v4124
      %v4204 = vpop.f32.mrb[0].mxu0
      %v4205 = vadd.f32 0.0, %v4204
      %v4206 = vpop.f32.mrb[0].mxu0
      %v4207 = vadd.f32 0.0, %v4206
      %4208 = vmatprep.mubr.f32.mxu0 0.0
      %4209 = vmatmul.mubr.f32.gmra.mrb[0].mxu0 %v4127
      %v4210 = vpop.f32.mrb[0].mxu0
      %v4211 = vadd.f32 0.0, %v4210
      %v4212 = vpop.f32.mrb[0].mxu0
      %v4213 = vadd.f32 0.0, %v4212
      %4214 = vmatprep.mubr.f32.mxu0 0.0
      %4215 = vmatmul.mubr.f32.gmra.mrb[0].mxu0 %v4130
      %v4216 = vpop.f32.mrb[0].mxu0
      %v4217 = vadd.f32 0.0, %v4216
      %v4218 = vpop.f32.mrb[0].mxu0
      %v4219 = vadd.f32 0.0, %v4218
      %4220 = vdwg.mxu0
      %v4221 = vadd.f32 %v4081, %v4199
      %v4222 = vadd.f32 %v4083, %v4201
      %v4223 = vadd.f32 %v4087, %v4205
      %v4224 = vadd.f32 %v4089, %v4207
      %v4225 = vadd.f32 %v4093, %v4211
      %v4226 = vadd.f32 %v4095, %v4213
      %v4227 = vadd.f32 %v4099, %v4217
      %v4228 = vadd.f32 %v4101, %v4219
      %s4229 = scalar_lea.vmem %s13, 96
      %v4230 = vld [vmem:[%s4229] sm:$0xff]
      %v4231 = vld [vmem:[%s4229 + $0x8] sm:$0xff]
      %v4232 = vld [vmem:[%s4229 + $0x10] sm:$0xff]
      %v4233 = vld [vmem:[%s4229 + $0x18] sm:$0xff]
      %4234 = vrot.lane.b32.xlu0 %v3876, 17
      %v4235 = vpop.permute.xlu0 %4234
      %4236 = vrot.lane.b32.xlu0 %v3878, 17
      %v4237 = vpop.permute.xlu0 %4236
      %4238 = vrot.lane.b32.xlu0 %v3877, 17
      %v4239 = vpop.permute.xlu0 %4238
      %4240 = vrot.lane.b32.xlu0 %v3879, 17
      %v4241 = vpop.permute.xlu0 %4240
      %v4242 = vsel %vm596, %v4235, %v4239
      %v4243 = vsel %vm596, %v4237, %v4241
      %v4244 = vsel %vm596, %v4239, %v4235
      %v4245 = vsel %vm596, %v4241, %v4237
      %v4247 = vsel %vm2539, %v4230, 0
      %v4250 = vsel %vm2539, %v4231, 0
      %v4253 = vsel %vm2539, %v4232, 0
      %v4256 = vsel %vm2539, %v4233, 0
      %4258 = vmatprep.subr.mxu0 %v4242
      %4259 = vmatpush1.msra.mxu0 %v4244
      %4260 = vmatprep.subr.mxu0 %v4243
      %4261 = vmatpush1.msra.mxu0 %v4245
      %4262 = vmatprep.subr.mxu0 0.0
      %4263 = vmatpush1.msra.mxu0 0.0
      %4264 = vmatprep.subr.mxu0 0.0
      %4265 = vmatpush1.msra.mxu0 0.0
      %4266 = vmatprep.subr.mxu0 0.0
      %4267 = vmatpush1.msra.mxu0 0.0
      %4268 = vmatprep.subr.mxu0 0.0
      %4269 = vmatpush1.msra.mxu0 0.0
      %4270 = vmatprep.subr.mxu0 0.0
      %4271 = vmatpush1.msra.mxu0 0.0
      %4272 = vmatprep.subr.mxu0 0.0
      %4273 = vmatpush1.msra.mxu0 0.0
      %4274 = vmatprep.subr.mxu0 0.0
      %4275 = vmatpush1.msra.mxu0 0.0
      %4276 = vmatprep.subr.mxu0 0.0
      %4277 = vmatpush1.msra.mxu0 0.0
      %4278 = vmatprep.subr.mxu0 0.0
      %4279 = vmatpush1.msra.mxu0 0.0
      %4280 = vmatprep.subr.mxu0 0.0
      %4281 = vmatpush1.msra.mxu0 0.0
      %4282 = vmatprep.subr.mxu0 0.0
      %4283 = vmatpush1.msra.mxu0 0.0
      %4284 = vmatprep.subr.mxu0 0.0
      %4285 = vmatpush1.msra.mxu0 0.0
      %4286 = vmatprep.subr.mxu0 0.0
      %4287 = vmatpush1.msra.mxu0 0.0
      %4288 = vmatprep.subr.mxu0 0.0
      %4289 = vmatpush1.msra.mxu0 0.0
      %4290 = vmatprep.subr.mxu0 0.0
      %4291 = vmatpush1.msra.mxu0 0.0
      %4292 = vmatprep.subr.mxu0 0.0
      %4293 = vmatpush1.msra.mxu0 0.0
      %4294 = vmatprep.subr.mxu0 0.0
      %4295 = vmatpush1.msra.mxu0 0.0
      %4296 = vmatprep.subr.mxu0 0.0
      %4297 = vmatpush1.msra.mxu0 0.0
      %4298 = vmatprep.subr.mxu0 0.0
      %4299 = vmatpush1.msra.mxu0 0.0
      %4300 = vmatprep.subr.mxu0 0.0
      %4301 = vmatpush1.msra.mxu0 0.0
      %4302 = vmatprep.subr.mxu0 0.0
      %4303 = vmatpush1.msra.mxu0 0.0
      %4304 = vmatprep.subr.mxu0 0.0
      %4305 = vmatpush1.msra.mxu0 0.0
      %4306 = vmatprep.subr.mxu0 0.0
      %4307 = vmatpush1.msra.mxu0 0.0
      %4308 = vmatprep.subr.mxu0 0.0
      %4309 = vmatpush1.msra.mxu0 0.0
      %4310 = vmatprep.subr.mxu0 0.0
      %4311 = vmatpush1.msra.mxu0 0.0
      %4312 = vmatprep.subr.mxu0 0.0
      %4313 = vmatpush1.msra.mxu0 0.0
      %4314 = vmatprep.subr.mxu0 0.0
      %4315 = vmatpush1.msra.mxu0 0.0
      %4316 = vmatprep.subr.mxu0 0.0
      %4317 = vmatpush1.msra.mxu0 0.0
      %4318 = vmatprep.subr.mxu0 0.0
      %4319 = vmatpush1.msra.mxu0 0.0
      %4320 = vmatprep.subr.mxu0 0.0
      %4321 = vmatpush1.msra.mxu0 0.0
      %4322 = vmatprep.mubr.f32.mxu0 0.0
      %4323 = vmatmul.mubr.f32.gmra.mrb[0].mxu0 %v4247
      %v4324 = vpop.f32.mrb[0].mxu0
      %v4325 = vadd.f32 0.0, %v4324
      %v4326 = vpop.f32.mrb[0].mxu0
      %v4327 = vadd.f32 0.0, %v4326
      %4328 = vmatprep.mubr.f32.mxu0 0.0
      %4329 = vmatmul.mubr.f32.gmra.mrb[0].mxu0 %v4250
      %v4330 = vpop.f32.mrb[0].mxu0
      %v4331 = vadd.f32 0.0, %v4330
      %v4332 = vpop.f32.mrb[0].mxu0
      %v4333 = vadd.f32 0.0, %v4332
      %4334 = vmatprep.mubr.f32.mxu0 0.0
      %4335 = vmatmul.mubr.f32.gmra.mrb[0].mxu0 %v4253
      %v4336 = vpop.f32.mrb[0].mxu0
      %v4337 = vadd.f32 0.0, %v4336
      %v4338 = vpop.f32.mrb[0].mxu0
      %v4339 = vadd.f32 0.0, %v4338
      %4340 = vmatprep.mubr.f32.mxu0 0.0
      %4341 = vmatmul.mubr.f32.gmra.mrb[0].mxu0 %v4256
      %v4342 = vpop.f32.mrb[0].mxu0
      %v4343 = vadd.f32 0.0, %v4342
      %v4344 = vpop.f32.mrb[0].mxu0
      %v4345 = vadd.f32 0.0, %v4344
      %4346 = vdwg.mxu0
      %v4347 = vadd.f32 %v4221, %v4325
      %v4348 = vadd.f32 %v4222, %v4327
      %v4349 = vadd.f32 %v4223, %v4331
      %v4350 = vadd.f32 %v4224, %v4333
      %v4351 = vadd.f32 %v4225, %v4337
      %v4352 = vadd.f32 %v4226, %v4339
      %v4353 = vadd.f32 %v4227, %v4343
      %v4354 = vadd.f32 %v4228, %v4345
      %v4355 = vld [vmem:[%s14] sm:$0xff]
      %v4356 = vld [vmem:[%s14 + $0x8] sm:$0xff]
      %v4357 = vld [vmem:[%s14 + $0x10] sm:$0xff]
      %v4358 = vld [vmem:[%s14 + $0x18] sm:$0xff]
      %4360 = vset.pattern.permute.xlu0 0
      %4361 = vperm.xlu0 %4360, %v4355
      %v4362 = vpop.permute.xlu0 %4361
      %4365 = vset.pattern.permute.xlu0 0
      %4366 = vperm.xlu0 %4365, %v4356
      %v4367 = vpop.permute.xlu0 %4366
      %4370 = vset.pattern.permute.xlu0 0
      %4371 = vperm.xlu0 %4370, %v4357
      %v4372 = vpop.permute.xlu0 %4371
      %4375 = vset.pattern.permute.xlu0 0
      %4376 = vperm.xlu0 %4375, %v4358
      %v4377 = vpop.permute.xlu0 %4376
      %v4379 = vadd.f32 %v4347, %v4362
      %v4380 = vadd.f32 %v4348, %v4362
      %v4381 = vadd.f32 %v4349, %v4367
      %v4382 = vadd.f32 %v4350, %v4367
      %v4383 = vadd.f32 %v4351, %v4372
      %v4384 = vadd.f32 %v4352, %v4372
      %v4385 = vadd.f32 %v4353, %v4377
      %v4386 = vadd.f32 %v4354, %v4377
      %v4387 = vmax.f32 %v4379, 0.0
      %v4388 = vmax.f32 %v4380, 0.0
      %v4389 = vmax.f32 %v4381, 0.0
      %v4390 = vmax.f32 %v4382, 0.0
      %v4391 = vmax.f32 %v4383, 0.0
      %v4392 = vmax.f32 %v4384, 0.0
      %v4393 = vmax.f32 %v4385, 0.0
      %v4394 = vmax.f32 %v4386, 0.0
      %v4395 = vld [vmem:[%s16] sm:$0xff]
      %v4396 = vld [vmem:[%s16 + $0x8] sm:$0x1]
      %v4398 = vsel %vm1410, %v4395, 0
      %v4401 = vsel %vm1410, %v4396, 0
      %4403 = vmatprep.subr.mxu0 %v4388
      %4404 = vmatpush1.msra.mxu0 %v4387
      %4405 = vmatprep.subr.mxu0 %v4390
      %4406 = vmatpush1.msra.mxu0 %v4389
      %4407 = vmatprep.subr.mxu0 %v4392
      %4408 = vmatpush1.msra.mxu0 %v4391
      %4409 = vmatprep.subr.mxu0 %v4394
      %4410 = vmatpush1.msra.mxu0 %v4393
      %4411 = vmatprep.subr.mxu0 0.0
      %4412 = vmatpush1.msra.mxu0 0.0
      %4413 = vmatprep.subr.mxu0 0.0
      %4414 = vmatpush1.msra.mxu0 0.0
      %4415 = vmatprep.subr.mxu0 0.0
      %4416 = vmatpush1.msra.mxu0 0.0
      %4417 = vmatprep.subr.mxu0 0.0
      %4418 = vmatpush1.msra.mxu0 0.0
      %4419 = vmatprep.subr.mxu0 0.0
      %4420 = vmatpush1.msra.mxu0 0.0
      %4421 = vmatprep.subr.mxu0 0.0
      %4422 = vmatpush1.msra.mxu0 0.0
      %4423 = vmatprep.subr.mxu0 0.0
      %4424 = vmatpush1.msra.mxu0 0.0
      %4425 = vmatprep.subr.mxu0 0.0
      %4426 = vmatpush1.msra.mxu0 0.0
      %4427 = vmatprep.subr.mxu0 0.0
      %4428 = vmatpush1.msra.mxu0 0.0
      %4429 = vmatprep.subr.mxu0 0.0
      %4430 = vmatpush1.msra.mxu0 0.0
      %4431 = vmatprep.subr.mxu0 0.0
      %4432 = vmatpush1.msra.mxu0 0.0
      %4433 = vmatprep.subr.mxu0 0.0
      %4434 = vmatpush1.msra.mxu0 0.0
      %4435 = vmatprep.subr.mxu0 0.0
      %4436 = vmatpush1.msra.mxu0 0.0
      %4437 = vmatprep.subr.mxu0 0.0
      %4438 = vmatpush1.msra.mxu0 0.0
      %4439 = vmatprep.subr.mxu0 0.0
      %4440 = vmatpush1.msra.mxu0 0.0
      %4441 = vmatprep.subr.mxu0 0.0
      %4442 = vmatpush1.msra.mxu0 0.0
      %4443 = vmatprep.subr.mxu0 0.0
      %4444 = vmatpush1.msra.mxu0 0.0
      %4445 = vmatprep.subr.mxu0 0.0
      %4446 = vmatpush1.msra.mxu0 0.0
      %4447 = vmatprep.subr.mxu0 0.0
      %4448 = vmatpush1.msra.mxu0 0.0
      %4449 = vmatprep.subr.mxu0 0.0
      %4450 = vmatpush1.msra.mxu0 0.0
      %4451 = vmatprep.subr.mxu0 0.0
      %4452 = vmatpush1.msra.mxu0 0.0
      %4453 = vmatprep.subr.mxu0 0.0
      %4454 = vmatpush1.msra.mxu0 0.0
      %4455 = vmatprep.subr.mxu0 0.0
      %4456 = vmatpush1.msra.mxu0 0.0
      %4457 = vmatprep.subr.mxu0 0.0
      %4458 = vmatpush1.msra.mxu0 0.0
      %4459 = vmatprep.subr.mxu0 0.0
      %4460 = vmatpush1.msra.mxu0 0.0
      %4461 = vmatprep.subr.mxu0 0.0
      %4462 = vmatpush1.msra.mxu0 0.0
      %4463 = vmatprep.subr.mxu0 0.0
      %4464 = vmatpush1.msra.mxu0 0.0
      %4465 = vmatprep.subr.mxu0 0.0
      %4466 = vmatpush1.msra.mxu0 0.0
      %4467 = vmatprep.mubr.f32.mxu0 0.0
      %4468 = vmatmul.mubr.f32.gmra.mrb[0].mxu0 %v4398
      %v4469 = vpop.f32.mrb[0].mxu0
      %v4470 = vadd.f32 0.0, %v4469
      %v4471 = vpop.f32.mrb[0].mxu0
      %v4472 = vadd.f32 0.0, %v4471
      %4473 = vmatprep.mubr.f32.mxu0 0.0
      %4474 = vmatmul.mubr.f32.gmra.mrb[0].mxu0 %v4401
      %v4475 = vpop.f32.mrb[0].mxu0
      %v4476 = vadd.f32 0.0, %v4475
      %v4477 = vpop.f32.mrb[0].mxu0
      %v4478 = vadd.f32 0.0, %v4477
      %4479 = vdwg.mxu0
      %4480 = vrot.lane.b32.xlu0 %v4470, 17
      %v4481 = vpop.permute.xlu0 %4480
      %4482 = vrot.lane.b32.xlu0 %v4472, 17
      %v4483 = vpop.permute.xlu0 %4482
      %v4484 = vsel %vm596, %v4481, %v4483
      %v4485 = vsel %vm596, %v4483, %v4481
      %v4488 = vcombine.low %v4485, %v4484
      %v4490 = vunpack.c.l.s4 1966171168
      %v4491 = vunpack.c.0.s8 %v4490
      %v4492 = vlaneseq
      %v4493 = vshrl.u32 %v4492, 7
      %v4494 = vsub.s32 %v4491, %v4493
      %v4495 = vrot.slane %v4488, %v4494
      %v4497 = vunpack.c.l.s4 1966171168
      %v4498 = vunpack.c.0.s8 %v4497
      %v4499 = vlaneseq
      %v4500 = vshrl.u32 %v4499, 7
      %v4501 = vsub.s32 %v4498, %v4500
      %v4502 = vrot.slane %v4495, %v4501
      %v4504 = vmul.f32 %v578, %v4502
      %v4507 = vrot.slane %v4470, 1
      %v4508 = vrot.slane %v4472, 1
      %4511 = vrot.lane.b32.xlu0 %v4507, 16
      %v4512 = vpop.permute.xlu0 %4511
      %4513 = vrot.lane.b32.xlu0 %v4508, 16
      %v4514 = vpop.permute.xlu0 %4513
      %v4515 = vsel %vm668, %v4512, %v4514
      %v4516 = vsel %vm668, %v4514, %v4512
      %v4519 = vcombine.low %v4516, %v4515
      %v4521 = vunpack.c.l.s4 1966171168
      %v4522 = vunpack.c.0.s8 %v4521
      %v4523 = vlaneseq
      %v4524 = vshrl.u32 %v4523, 7
      %v4525 = vsub.s32 %v4522, %v4524
      %v4526 = vrot.slane %v4519, %v4525
      %v4528 = vunpack.c.l.s4 1966171168
      %v4529 = vunpack.c.0.s8 %v4528
      %v4530 = vlaneseq
      %v4531 = vshrl.u32 %v4530, 7
      %v4532 = vsub.s32 %v4529, %v4531
      %v4533 = vrot.slane %v4526, %v4532
      %v4535 = vmul.f32 %v663, %v4533
      %v4536 = vadd.f32 %v4504, %v4535
      %v4537 = vrot.slane %v4470, 2
      %v4538 = vrot.slane %v4472, 2
      %4541 = vrot.lane.b32.xlu0 %v4537, 15
      %v4542 = vpop.permute.xlu0 %4541
      %4543 = vrot.lane.b32.xlu0 %v4538, 15
      %v4544 = vpop.permute.xlu0 %4543
      %v4545 = vsel %vm748, %v4542, %v4544
      %v4546 = vsel %vm748, %v4544, %v4542
      %v4549 = vcombine.low %v4546, %v4545
      %v4551 = vunpack.c.l.s4 1966171168
      %v4552 = vunpack.c.0.s8 %v4551
      %v4553 = vlaneseq
      %v4554 = vshrl.u32 %v4553, 7
      %v4555 = vsub.s32 %v4552, %v4554
      %v4556 = vrot.slane %v4549, %v4555
      %v4558 = vunpack.c.l.s4 1966171168
      %v4559 = vunpack.c.0.s8 %v4558
      %v4560 = vlaneseq
      %v4561 = vshrl.u32 %v4560, 7
      %v4562 = vsub.s32 %v4559, %v4561
      %v4563 = vrot.slane %v4556, %v4562
      %v4565 = vmul.f32 %v743, %v4563
      %v4566 = vadd.f32 %v4536, %v4565
      %v4567 = vrot.slane %v4470, 3
      %v4568 = vrot.slane %v4472, 3
      %4571 = vrot.lane.b32.xlu0 %v4567, 1
      %v4572 = vpop.permute.xlu0 %4571
      %4573 = vrot.lane.b32.xlu0 %v4568, 1
      %v4574 = vpop.permute.xlu0 %4573
      %v4575 = vsel %vm828, %v4572, %v4574
      %v4576 = vsel %vm828, %v4574, %v4572
      %v4579 = vcombine.low %v4576, %v4575
      %v4581 = vunpack.c.l.s4 1966171168
      %v4582 = vunpack.c.0.s8 %v4581
      %v4583 = vlaneseq
      %v4584 = vshrl.u32 %v4583, 7
      %v4585 = vsub.s32 %v4582, %v4584
      %v4586 = vrot.slane %v4579, %v4585
      %v4588 = vunpack.c.l.s4 1966171168
      %v4589 = vunpack.c.0.s8 %v4588
      %v4590 = vlaneseq
      %v4591 = vshrl.u32 %v4590, 7
      %v4592 = vsub.s32 %v4589, %v4591
      %v4593 = vrot.slane %v4586, %v4592
      %v4595 = vmul.f32 %v823, %v4593
      %v4596 = vadd.f32 %v4566, %v4595
      %v4597 = vcombine.high %v4470, %v4472
      %v4599 = vunpack.c.l.s4 1966171168
      %v4600 = vunpack.c.0.s8 %v4599
      %v4601 = vlaneseq
      %v4602 = vshrl.u32 %v4601, 7
      %v4603 = vsub.s32 %v4600, %v4602
      %v4604 = vrot.slane %v4597, %v4603
      %v4606 = vunpack.c.l.s4 1966171168
      %v4607 = vunpack.c.0.s8 %v4606
      %v4608 = vlaneseq
      %v4609 = vshrl.u32 %v4608, 7
      %v4610 = vsub.s32 %v4607, %v4609
      %v4611 = vrot.slane %v4604, %v4610
      %v4613 = vmul.f32 %v903, %v4611
      %v4614 = vadd.f32 %v4596, %v4613
      %v4615 = vrot.slane %v4470, 5
      %v4616 = vrot.slane %v4472, 5
      %4619 = vrot.lane.b32.xlu0 %v4615, 127
      %v4620 = vpop.permute.xlu0 %4619
      %4621 = vrot.lane.b32.xlu0 %v4616, 127
      %v4622 = vpop.permute.xlu0 %4621
      %v4623 = vsel %vm963, %v4620, %v4622
      %v4624 = vsel %vm963, %v4622, %v4620
      %v4627 = vcombine.low %v4623, %v4624
      %v4629 = vunpack.c.l.s4 1966171168
      %v4630 = vunpack.c.0.s8 %v4629
      %v4631 = vlaneseq
      %v4632 = vshrl.u32 %v4631, 7
      %v4633 = vsub.s32 %v4630, %v4632
      %v4634 = vrot.slane %v4627, %v4633
      %v4636 = vunpack.c.l.s4 1966171168
      %v4637 = vunpack.c.0.s8 %v4636
      %v4638 = vlaneseq
      %v4639 = vshrl.u32 %v4638, 7
      %v4640 = vsub.s32 %v4637, %v4639
      %v4641 = vrot.slane %v4634, %v4640
      %v4643 = vmul.f32 %v958, %v4641
      %v4644 = vadd.f32 %v4614, %v4643
      %v4645 = vrot.slane %v4470, 6
      %v4646 = vrot.slane %v4472, 6
      %4649 = vrot.lane.b32.xlu0 %v4645, 113
      %v4650 = vpop.permute.xlu0 %4649
      %4651 = vrot.lane.b32.xlu0 %v4646, 113
      %v4652 = vpop.permute.xlu0 %4651
      %v4653 = vsel %vm1043, %v4650, %v4652
      %v4654 = vsel %vm1043, %v4652, %v4650
      %v4657 = vcombine.low %v4653, %v4654
      %v4659 = vunpack.c.l.s4 1966171168
      %v4660 = vunpack.c.0.s8 %v4659
      %v4661 = vlaneseq
      %v4662 = vshrl.u32 %v4661, 7
      %v4663 = vsub.s32 %v4660, %v4662
      %v4664 = vrot.slane %v4657, %v4663
      %v4666 = vunpack.c.l.s4 1966171168
      %v4667 = vunpack.c.0.s8 %v4666
      %v4668 = vlaneseq
      %v4669 = vshrl.u32 %v4668, 7
      %v4670 = vsub.s32 %v4667, %v4669
      %v4671 = vrot.slane %v4664, %v4670
      %v4673 = vmul.f32 %v1038, %v4671
      %v4674 = vadd.f32 %v4644, %v4673
      %v4675 = vrot.slane %v4470, 7
      %v4676 = vrot.slane %v4472, 7
      %4679 = vrot.lane.b32.xlu0 %v4675, 112
      %v4680 = vpop.permute.xlu0 %4679
      %4681 = vrot.lane.b32.xlu0 %v4676, 112
      %v4682 = vpop.permute.xlu0 %4681
      %v4683 = vsel %vm1123, %v4680, %v4682
      %v4684 = vsel %vm1123, %v4682, %v4680
      %v4687 = vcombine.low %v4683, %v4684
      %v4689 = vunpack.c.l.s4 1966171168
      %v4690 = vunpack.c.0.s8 %v4689
      %v4691 = vlaneseq
      %v4692 = vshrl.u32 %v4691, 7
      %v4693 = vsub.s32 %v4690, %v4692
      %v4694 = vrot.slane %v4687, %v4693
      %v4696 = vunpack.c.l.s4 1966171168
      %v4697 = vunpack.c.0.s8 %v4696
      %v4698 = vlaneseq
      %v4699 = vshrl.u32 %v4698, 7
      %v4700 = vsub.s32 %v4697, %v4699
      %v4701 = vrot.slane %v4694, %v4700
      %v4703 = vmul.f32 %v1118, %v4701
      %v4704 = vadd.f32 %v4674, %v4703
      %4705 = vrot.lane.b32.xlu0 %v4476, 111
      %v4706 = vpop.permute.xlu0 %4705
      %4707 = vrot.lane.b32.xlu0 %v4478, 111
      %v4708 = vpop.permute.xlu0 %4707
      %v4709 = vsel %vm1203, %v4706, %v4708
      %v4710 = vsel %vm1203, %v4708, %v4706
      %v4713 = vcombine.low %v4709, %v4710
      %v4715 = vunpack.c.l.s4 1966171168
      %v4716 = vunpack.c.0.s8 %v4715
      %v4717 = vlaneseq
      %v4718 = vshrl.u32 %v4717, 7
      %v4719 = vsub.s32 %v4716, %v4718
      %v4720 = vrot.slane %v4713, %v4719
      %v4722 = vunpack.c.l.s4 1966171168
      %v4723 = vunpack.c.0.s8 %v4722
      %v4724 = vlaneseq
      %v4725 = vshrl.u32 %v4724, 7
      %v4726 = vsub.s32 %v4723, %v4725
      %v4727 = vrot.slane %v4720, %v4726
      %v4729 = vmul.f32 %v1198, %v4727
      %v4730 = vadd.f32 %v4704, %v4729
      %v4731 = vld [vmem:[#allocation2] sm:$0x1]
      %4733 = vset.pattern.permute.xlu0 0
      %4734 = vperm.xlu0 %4733, %v4731
      %v4735 = vpop.permute.xlu0 %4734
      %v4737 = vlaneseq
      %v4738 = vshrl.u32 %v4737, 7
      %v4739 = vsub.s32 0, %v4738
      %v4740 = vrot.slane %v4735, %v4739
      %v4741 = vadd.f32 %v4730, %v4740
      %v4742 = vxor.u32 %v4741, 2147483648
      %v4743 = vmul.f32 %v4742, 1.442695
      %v4744 = vpow.pop %v4743
      %v4745 = vadd.f32 %v4744, 1.0
      %v4746 = vrcp.pop %v4745
      %v4747 = vmul.f32 1.0, %v4746
      %v4748 = vlaneseq
      %vm4749 = vcmp.ge.s32.totalorder %v4748, 0
      %vm4750 = vcmp.lt.s32.totalorder %v4748, 256
      %vm4751 = vmand %vm4749, %vm4750
      %4752 = vst.msk [vmem:[%s572] sm:$0x3] %vm4751, %v4747
      %p4753 = scmp.lt.s32.totalorder %s31, 1
      %s4754 = scalar_select %p4753, %s31, 1
      %s4755 = smul.addr %s4754, 2
      %s4756 = scalar_lea.vmem %s18, %s4755
      // Predicated region
      $region93: #{conv_denoiser_forward.1} parent=91 // pred_check
        %p4757 = pneg %p432
      $region94: #{conv_denoiser_forward.1} parent=91 // pred_check_branch
        %4759 = sbr.rel (%p4757) target = $region96
      $region95: #{conv_denoiser_forward.1} parent=91 // pred_region
        _
      $region96: #{conv_denoiser_forward.1} parent=91 // pred_fallthru
        _
    $region92: #{conv_denoiser_forward.1} parent=5 // pred_fallthru
      _
    %p4760 = scmp.le.s32.totalorder 2, %s26
    // Predicated region
    $region97: #{conv_denoiser_forward.1} parent=5 // pred_check
      %p4761 = pneg %p4760
    $region98: #{conv_denoiser_forward.1} parent=5 // pred_check_branch
      %4763 = sbr.rel (%p4761) target = $region100
    $region99: #{conv_denoiser_forward.1} parent=5 // pred_region
      %s4764 = ssub.s32 %s26, 2
      // Predicated region
      $region101: #{conv_denoiser_forward.1} parent=99 // pred_check
        %p4765 = pneg %p438
      $region102: #{conv_denoiser_forward.1} parent=99 // pred_check_branch
        %4767 = sbr.rel (%p4765) target = $region104
      $region103: #{conv_denoiser_forward.1} parent=99 // pred_region
        %p4768 = scmp.lt.s32.totalorder %s32, 1
        %s4769 = scalar_select %p4768, %s32, 1
        %s4770 = smul.addr %s4769, 2
        %s4771 = scalar_lea.vmem %s18, %s4770
      $region104: #{conv_denoiser_forward.1} parent=99 // pred_fallthru
        _
    $region100: #{conv_denoiser_forward.1} parent=5 // pred_fallthru
      _
  $region6: #{conv_denoiser_forward.1} parent=0 // loop_footer
    %s30 = sadd.s32 1, %s26
  $region7: #{conv_denoiser_forward.1} parent=0 // loop_footer_branch
    %25 = sbr.rel target = $region3
  $region8: #{conv_denoiser_forward.1} parent=0 // loop_exit
    _

</llo_original>
